<compile_context>
chip_gen: v7x
topology: tpu7x:2x2x1
jax: 0.10.0
libtpu: 0.0.40
codegen_flags: <defaults>
</compile_context>

<pallas_src>
import numpy as np
import jax
import jax.numpy as jnp
from jax.experimental import pallas as pl
from jax.experimental.pallas import tpu as pltpu


_KSIZE, _STRIDE, _PAD = 3, 2, 1
# (H_in, output_padding) and C_out for dec_l4, dec_l3, dec_l2, dec_l1 (image_size=28).
_LAYER_GEOM = ((2, 1), (4, 0), (7, 1), (14, 1))
_LAYER_COUT = (32, 32, 32, 1)


def _out_size(h, output_padding):
    return (h - 1) * _STRIDE - 2 * _PAD + _KSIZE + output_padding   # = 2h-1+op


def _lane_pad(n):
    return ((n + 127) // 128) * 128


# Static per-layer geometry used by the kernel: (H, OH, OW*CO, padded OW*CO).
_KGEOM = tuple(
    (h, _out_size(h, op), _out_size(h, op) * co, _lane_pad(_out_size(h, op) * co))
    for (h, op), co in zip(_LAYER_GEOM, _LAYER_COUT))


# ----------------------------------------------------------------------------
# One-time weight packing (PyTorch ConvTranspose2d layout -> GEMM matrices).
# ----------------------------------------------------------------------------
def _pack_layer(w, b, h, oh, block_b):
    """w: (CI, CO, 3, 3), b: (CO,).  Returns
         M    (W*CI, 3*OWCp)  bf16 wide GEMM: kx taps / stride-2 column scatter /
                              channel mix folded; ky taps concatenated along
                              lanes, each padded to a 128-lane boundary.
         S    (B*OH, 3*B*H)   bf16 block-diagonal 0/1 row-scatter applied to the
                              vertically stacked ky taps (also crops the
                              output_padding=0 row of dec_l3).
         brow (1, OW*CO)      f32 bias broadcast row.
    """
    w = np.asarray(w, np.float32)
    b = np.asarray(b, np.float32)
    ci, co, kh, kw = w.shape
    W, OW = h, oh
    owc = OW * co
    owcp = _lane_pad(owc)

    M = np.zeros((W * ci, kh * owcp), np.float32)
    for ky in range(kh):
        for ix in range(W):
            for kx in range(kw):
                ox = _STRIDE * ix - _PAD + kx
                if 0 <= ox < OW:
                    M[ix * ci:(ix + 1) * ci,
                      ky * owcp + ox * co: ky * owcp + (ox + 1) * co] = w[:, :, ky, kx]

    S = np.zeros((block_b * oh, kh * block_b * h), np.float32)
    for bb in range(block_b):
        for ky in range(kh):
            for iy in range(h):
                oy = _STRIDE * iy - _PAD + ky
                if 0 <= oy < oh:
                    S[bb * oh + oy, ky * block_b * h + bb * h + iy] = 1.0

    brow = np.tile(b, OW).reshape(1, owc)
    return (jnp.asarray(M, jnp.bfloat16), jnp.asarray(S, jnp.bfloat16),
            jnp.asarray(brow, jnp.float32))


def pack_decoder_params(params, block_b=8):
    """params: [(w4,b4),(w3,b3),(w2,b2),(w1,b1)] in ConvTranspose2d layout.
    block_b: images per grid step (multiple of 8 so every GEMM row count is a
    multiple of 8; use 16-32 for large-batch throughput on v6e/v5e)."""
    assert block_b % 8 == 0, "block_b must be a multiple of 8"
    packed = []
    for (w, b), (h, op) in zip(params, _LAYER_GEOM):
        packed.extend(_pack_layer(w, b, h, _out_size(h, op), block_b))
    return tuple(packed)   # (M4,S4,b4, M3,S3,b3, M2,S2,b2, M1,S1,b1)


# ----------------------------------------------------------------------------
# Fused decoder kernel: BLOCK_B images per grid step, all layers in VMEM.
# ----------------------------------------------------------------------------
def _decoder_kernel(x_ref, *refs):
    o_ref = refs[-1]
    wrefs = refs[:-1]                                  # 12 weight refs

    a = x_ref[...].astype(jnp.bfloat16)                # (B*2, 2*10) stacked slab
    for li, (h, oh, owc, owcp) in enumerate(_KGEOM):
        m_ref, s_ref, b_ref = wrefs[3 * li:3 * li + 3]
        # One wide GEMM for all 3 ky taps (bf16 operands, f32 accumulation).
        t = jnp.dot(a, m_ref[...], preferred_element_type=jnp.float32)
        t = t.astype(jnp.bfloat16)                     # (B*H, 3*OWCp)
        # Stack the taps along rows (aligned lane slices, B*H multiple of 8)...
        stacked = jnp.concatenate(
            [t[:, 0:owc], t[:, owcp:owcp + owc], t[:, 2 * owcp:2 * owcp + owc]],
            axis=0)                                    # (3*B*H, OWC)
        # ...and scatter to output rows with ONE block-diagonal matmul per layer.
        y = jnp.dot(s_ref[...], stacked, preferred_element_type=jnp.float32)
        y = y + b_ref[...]                             # (B*OH, OWC) + (1, OWC)
        if li < len(_KGEOM) - 1:
            a = jnp.maximum(y, 0.0).astype(jnp.bfloat16)
        else:
            # sigmoid: exp + approx reciprocal, both on the EUP slot.
            o_ref[...] = pl.reciprocal(1.0 + jnp.exp(-y), approx=True)


def _const_spec(arr):
    zeros = (0,) * arr.ndim
    return pl.BlockSpec(arr.shape, lambda i, _z=zeros: _z)


@jax.jit
def decoder_forward(packed_params, enc_x):
    """enc_x: (N, 10, 2, 2) float32 NCHW -> (N, 1, 28, 28)."""
    n, ci0, h0, w0 = enc_x.shape
    oh4 = _KGEOM[0][1]
    bb = packed_params[1].shape[0] // oh4              # images per grid step
    n_pad = -(-n // bb) * bb
    oh = _KGEOM[-1][1]
    owc_out = _KGEOM[-1][2]                            # = 28 (CO == 1)

    # Layout change at the decoder boundary only: NCHW -> batch-stacked slab
    # (N_pad*H0, W0*CI0) with rows (sample, iy) and lanes (ix, ci).
    x = jnp.transpose(enc_x, (0, 2, 3, 1)).astype(jnp.float32)
    x = x.reshape(n, h0, w0 * ci0)
    if n_pad != n:
        x = jnp.concatenate(
            [x, jnp.zeros((n_pad - n, h0, w0 * ci0), jnp.float32)], axis=0)
    x = x.reshape(n_pad * h0, w0 * ci0)

    out = pl.pallas_call(
        _decoder_kernel,
        grid=(n_pad // bb,),
        in_specs=[pl.BlockSpec((bb * h0, w0 * ci0), lambda i: (i, 0))]
                 + [_const_spec(p) for p in packed_params],
        out_specs=pl.BlockSpec((bb * oh, owc_out), lambda i: (i, 0)),
        out_shape=jax.ShapeDtypeStruct((n_pad * oh, owc_out), jnp.float32),
        compiler_params=pltpu.CompilerParams(
            dimension_semantics=("parallel",),
            vmem_limit_bytes=32 * 1024 * 1024),
    )(x, *packed_params)

    # Rows are (sample, oy) batch-major and CO == 1: pure reshape back to NCHW.
    return out.reshape(n_pad, 1, oh, oh)[:n]


# ----------------------------------------------------------------------------
# Deterministic params + pure-JAX reference (for correctness check).
# ----------------------------------------------------------------------------
def init_decoder_params(key):
    """Weight shapes match nn.ConvTranspose2d(CI, CO, 3): (CI, CO, 3, 3)."""
    shapes = [(10, 32, 3, 3), (32, 32, 3, 3), (32, 32, 3, 3), (32, 1, 3, 3)]
    params = []
    for i, s in enumerate(shapes):
        kw, kb = jax.random.split(jax.random.fold_in(key, i))
        fan = s[0] * s[2] * s[3]
        bound = 1.0 / np.sqrt(float(fan))
        w = jax.random.uniform(kw, s, jnp.float32, -bound, bound)
        b = jax.random.uniform(kb, (s[1],), jnp.float32, -bound, bound)
        params.append((w, b))
    return params


def _reference_decoder(params, enc_x):
    """Plain-XLA ConvTranspose2d chain with PyTorch semantics (no Pallas)."""
    def layer(x, w, b, output_padding, act):
        co = w.shape[1]
        w_t = jnp.transpose(w[:, :, ::-1, ::-1], (1, 0, 2, 3))   # (CO,CI,kh,kw)
        lo = _KSIZE - 1 - _PAD
        hi = lo + output_padding
        y = jax.lax.conv_general_dilated(
            x, w_t, window_strides=(1, 1), padding=((lo, hi), (lo, hi)),
            lhs_dilation=(_STRIDE, _STRIDE),
            dimension_numbers=("NCHW", "OIHW", "NCHW"),
            precision=jax.lax.Precision.HIGHEST)
        y = y + b.reshape(1, co, 1, 1)
        return jnp.maximum(y, 0.0) if act == "relu" else jax.nn.sigmoid(y)

    (w4, b4), (w3, b3), (w2, b2), (w1, b1) = params
    x = layer(enc_x, w4, b4, 1, "relu")
    x = layer(x, w3, b3, 0, "relu")
    x = layer(x, w2, b2, 1, "relu")
    return layer(x, w1, b1, 1, "sigmoid")


if __name__ == "__main__":
    key = jax.random.PRNGKey(0)
    params = init_decoder_params(key)
    packed = pack_decoder_params(params, block_b=8)   # one-time weight packing

    # batch=2 (spec-sized) and batch=13 (exercises padding + 2 grid steps).
    for n in (2, 13):
        enc_x = jax.random.normal(jax.random.fold_in(key, 100 + n),
                                  (n, 10, 2, 2), jnp.float32)
        out = jax.block_until_ready(decoder_forward(packed, enc_x))
        assert out.shape == (n, 1, 28, 28), out.shape
        # approx reciprocal may overshoot 1.0 by ~2^-12; allow that slack.
        assert bool(jnp.all((out > -1e-4) & (out < 1.0 + 1e-3)))

        ref = jax.block_until_ready(_reference_decoder(params, enc_x))
        err = float(jnp.max(jnp.abs(out - ref)))
        # bf16 MXU operands (f32 accumulation): tolerance relaxed vs pure f32.
        assert err < 5e-3, "max abs err = %g (batch=%d)" % (err, n)

    print("KERNEL_OK")
</pallas_src>

<mosaic_0001>
module attributes {stable_mosaic.version = 11 : i64} {
  func.func @_decoder_kernel(%arg0: i32, %arg1: memref<16x20xf32, #tpu.memory_space<vmem>>, %arg2: memref<20x384xbf16, #tpu.memory_space<vmem>>, %arg3: memref<32x48xbf16, #tpu.memory_space<vmem>>, %arg4: memref<1x128xf32, #tpu.memory_space<vmem>>, %arg5: memref<128x768xbf16, #tpu.memory_space<vmem>>, %arg6: memref<56x96xbf16, #tpu.memory_space<vmem>>, %arg7: memref<1x224xf32, #tpu.memory_space<vmem>>, %arg8: memref<224x1536xbf16, #tpu.memory_space<vmem>>, %arg9: memref<112x168xbf16, #tpu.memory_space<vmem>>, %arg10: memref<1x448xf32, #tpu.memory_space<vmem>>, %arg11: memref<448x384xbf16, #tpu.memory_space<vmem>>, %arg12: memref<224x336xbf16, #tpu.memory_space<vmem>>, %arg13: memref<1x28xf32, #tpu.memory_space<vmem>>, %arg14: memref<224x28xf32, #tpu.memory_space<vmem>>) attributes {dimension_semantics = [#tpu.dimension_semantics<parallel>], iteration_bounds = array<i64: 1>, scalar_prefetch = 0 : i64, scratch_operands = 0 : i64, tpu.core_type = #tpu.core_type<tc>, window_params = [{transform_indices = @transform_0, window_bounds = array<i64: 16, 20>}, {pipeline_mode = #tpu.pipeline_mode<synchronous>, transform_indices = @transform_1, window_bounds = array<i64: 20, 384>}, {pipeline_mode = #tpu.pipeline_mode<synchronous>, transform_indices = @transform_2, window_bounds = array<i64: 32, 48>}, {pipeline_mode = #tpu.pipeline_mode<synchronous>, transform_indices = @transform_3, window_bounds = array<i64: 1, 128>}, {pipeline_mode = #tpu.pipeline_mode<synchronous>, transform_indices = @transform_4, window_bounds = array<i64: 128, 768>}, {pipeline_mode = #tpu.pipeline_mode<synchronous>, transform_indices = @transform_5, window_bounds = array<i64: 56, 96>}, {pipeline_mode = #tpu.pipeline_mode<synchronous>, transform_indices = @transform_6, window_bounds = array<i64: 1, 224>}, {pipeline_mode = #tpu.pipeline_mode<synchronous>, transform_indices = @transform_7, window_bounds = array<i64: 224, 1536>}, {pipeline_mode = #tpu.pipeline_mode<synchronous>, transform_indices = @transform_8, window_bounds = array<i64: 112, 168>}, {pipeline_mode = #tpu.pipeline_mode<synchronous>, transform_indices = @transform_9, window_bounds = array<i64: 1, 448>}, {pipeline_mode = #tpu.pipeline_mode<synchronous>, transform_indices = @transform_10, window_bounds = array<i64: 448, 384>}, {pipeline_mode = #tpu.pipeline_mode<synchronous>, transform_indices = @transform_11, window_bounds = array<i64: 224, 336>}, {pipeline_mode = #tpu.pipeline_mode<synchronous>, transform_indices = @transform_12, window_bounds = array<i64: 1, 28>}, {transform_indices = @transform_13, window_bounds = array<i64: 224, 28>}]} {
    %c0 = arith.constant 0 : index
    %c0_0 = arith.constant 0 : index
    %0 = vector.load %arg1[%c0, %c0_0] : memref<16x20xf32, #tpu.memory_space<vmem>>, vector<16x20xf32>
    %1 = arith.truncf %0 : vector<16x20xf32> to vector<16x20xbf16>
    %c0_1 = arith.constant 0 : index
    %c0_2 = arith.constant 0 : index
    %2 = vector.load %arg2[%c0_1, %c0_2] : memref<20x384xbf16, #tpu.memory_space<vmem>>, vector<20x384xbf16>
    %cst = arith.constant dense<0.000000e+00> : vector<16x384xf32>
    %3 = tpu.matmul %1, %2, %cst {dimension_numbers = #tpu.dot_dimension_numbers<[1], [0], [0], [1], [0, 0, 1, 1], [], []>} : vector<16x20xbf16>, vector<20x384xbf16>, vector<16x384xf32> -> vector<16x384xf32>
    %4 = arith.truncf %3 : vector<16x384xf32> to vector<16x384xbf16>
    %5 = vector.extract_strided_slice %4 {offsets = [0, 0], sizes = [16, 128], strides = [1, 1]} : vector<16x384xbf16> to vector<16x128xbf16>
    %6 = vector.extract_strided_slice %4 {offsets = [0, 128], sizes = [16, 128], strides = [1, 1]} : vector<16x384xbf16> to vector<16x128xbf16>
    %7 = vector.extract_strided_slice %4 {offsets = [0, 256], sizes = [16, 128], strides = [1, 1]} : vector<16x384xbf16> to vector<16x128xbf16>
    %8 = tpu.concatenate %5, %6, %7 in 0 : vector<16x128xbf16>, vector<16x128xbf16>, vector<16x128xbf16> -> vector<48x128xbf16>
    %c0_3 = arith.constant 0 : index
    %c0_4 = arith.constant 0 : index
    %9 = vector.load %arg3[%c0_3, %c0_4] : memref<32x48xbf16, #tpu.memory_space<vmem>>, vector<32x48xbf16>
    %cst_5 = arith.constant dense<0.000000e+00> : vector<32x128xf32>
    %10 = tpu.matmul %9, %8, %cst_5 {dimension_numbers = #tpu.dot_dimension_numbers<[1], [0], [0], [1], [0, 0, 1, 1], [], []>} : vector<32x48xbf16>, vector<48x128xbf16>, vector<32x128xf32> -> vector<32x128xf32>
    %c0_6 = arith.constant 0 : index
    %c0_7 = arith.constant 0 : index
    %11 = vector.load %arg4[%c0_6, %c0_7] : memref<1x128xf32, #tpu.memory_space<vmem>>, vector<1x128xf32>
    %12 = vector.broadcast %11 : vector<1x128xf32> to vector<32x128xf32>
    %13 = arith.addf %10, %12 : vector<32x128xf32>
    %cst_8 = arith.constant 0.000000e+00 : f32
    %14 = vector.broadcast %cst_8 : f32 to vector<32x128xf32>
    %15 = arith.maximumf %13, %14 : vector<32x128xf32>
    %16 = arith.truncf %15 : vector<32x128xf32> to vector<32x128xbf16>
    %c0_9 = arith.constant 0 : index
    %c0_10 = arith.constant 0 : index
    %17 = vector.load %arg5[%c0_9, %c0_10] : memref<128x768xbf16, #tpu.memory_space<vmem>>, vector<128x768xbf16>
    %cst_11 = arith.constant dense<0.000000e+00> : vector<32x768xf32>
    %18 = tpu.matmul %16, %17, %cst_11 {dimension_numbers = #tpu.dot_dimension_numbers<[1], [0], [0], [1], [0, 0, 1, 1], [], []>} : vector<32x128xbf16>, vector<128x768xbf16>, vector<32x768xf32> -> vector<32x768xf32>
    %19 = arith.truncf %18 : vector<32x768xf32> to vector<32x768xbf16>
    %20 = vector.extract_strided_slice %19 {offsets = [0, 0], sizes = [32, 224], strides = [1, 1]} : vector<32x768xbf16> to vector<32x224xbf16>
    %21 = vector.extract_strided_slice %19 {offsets = [0, 256], sizes = [32, 224], strides = [1, 1]} : vector<32x768xbf16> to vector<32x224xbf16>
    %22 = vector.extract_strided_slice %19 {offsets = [0, 512], sizes = [32, 224], strides = [1, 1]} : vector<32x768xbf16> to vector<32x224xbf16>
    %23 = tpu.concatenate %20, %21, %22 in 0 : vector<32x224xbf16>, vector<32x224xbf16>, vector<32x224xbf16> -> vector<96x224xbf16>
    %c0_12 = arith.constant 0 : index
    %c0_13 = arith.constant 0 : index
    %24 = vector.load %arg6[%c0_12, %c0_13] : memref<56x96xbf16, #tpu.memory_space<vmem>>, vector<56x96xbf16>
    %cst_14 = arith.constant dense<0.000000e+00> : vector<56x224xf32>
    %25 = tpu.matmul %24, %23, %cst_14 {dimension_numbers = #tpu.dot_dimension_numbers<[1], [0], [0], [1], [0, 0, 1, 1], [], []>} : vector<56x96xbf16>, vector<96x224xbf16>, vector<56x224xf32> -> vector<56x224xf32>
    %c0_15 = arith.constant 0 : index
    %c0_16 = arith.constant 0 : index
    %26 = vector.load %arg7[%c0_15, %c0_16] : memref<1x224xf32, #tpu.memory_space<vmem>>, vector<1x224xf32>
    %27 = vector.broadcast %26 : vector<1x224xf32> to vector<56x224xf32>
    %28 = arith.addf %25, %27 : vector<56x224xf32>
    %cst_17 = arith.constant 0.000000e+00 : f32
    %29 = vector.broadcast %cst_17 : f32 to vector<56x224xf32>
    %30 = arith.maximumf %28, %29 : vector<56x224xf32>
    %31 = arith.truncf %30 : vector<56x224xf32> to vector<56x224xbf16>
    %c0_18 = arith.constant 0 : index
    %c0_19 = arith.constant 0 : index
    %32 = vector.load %arg8[%c0_18, %c0_19] : memref<224x1536xbf16, #tpu.memory_space<vmem>>, vector<224x1536xbf16>
    %cst_20 = arith.constant dense<0.000000e+00> : vector<56x1536xf32>
    %33 = tpu.matmul %31, %32, %cst_20 {dimension_numbers = #tpu.dot_dimension_numbers<[1], [0], [0], [1], [0, 0, 1, 1], [], []>} : vector<56x224xbf16>, vector<224x1536xbf16>, vector<56x1536xf32> -> vector<56x1536xf32>
    %34 = arith.truncf %33 : vector<56x1536xf32> to vector<56x1536xbf16>
    %35 = vector.extract_strided_slice %34 {offsets = [0, 0], sizes = [56, 448], strides = [1, 1]} : vector<56x1536xbf16> to vector<56x448xbf16>
    %36 = vector.extract_strided_slice %34 {offsets = [0, 512], sizes = [56, 448], strides = [1, 1]} : vector<56x1536xbf16> to vector<56x448xbf16>
    %37 = vector.extract_strided_slice %34 {offsets = [0, 1024], sizes = [56, 448], strides = [1, 1]} : vector<56x1536xbf16> to vector<56x448xbf16>
    %38 = tpu.concatenate %35, %36, %37 in 0 : vector<56x448xbf16>, vector<56x448xbf16>, vector<56x448xbf16> -> vector<168x448xbf16>
    %c0_21 = arith.constant 0 : index
    %c0_22 = arith.constant 0 : index
    %39 = vector.load %arg9[%c0_21, %c0_22] : memref<112x168xbf16, #tpu.memory_space<vmem>>, vector<112x168xbf16>
    %cst_23 = arith.constant dense<0.000000e+00> : vector<112x448xf32>
    %40 = tpu.matmul %39, %38, %cst_23 {dimension_numbers = #tpu.dot_dimension_numbers<[1], [0], [0], [1], [0, 0, 1, 1], [], []>} : vector<112x168xbf16>, vector<168x448xbf16>, vector<112x448xf32> -> vector<112x448xf32>
    %c0_24 = arith.constant 0 : index
    %c0_25 = arith.constant 0 : index
    %41 = vector.load %arg10[%c0_24, %c0_25] : memref<1x448xf32, #tpu.memory_space<vmem>>, vector<1x448xf32>
    %42 = vector.broadcast %41 : vector<1x448xf32> to vector<112x448xf32>
    %43 = arith.addf %40, %42 : vector<112x448xf32>
    %cst_26 = arith.constant 0.000000e+00 : f32
    %44 = vector.broadcast %cst_26 : f32 to vector<112x448xf32>
    %45 = arith.maximumf %43, %44 : vector<112x448xf32>
    %46 = arith.truncf %45 : vector<112x448xf32> to vector<112x448xbf16>
    %c0_27 = arith.constant 0 : index
    %c0_28 = arith.constant 0 : index
    %47 = vector.load %arg11[%c0_27, %c0_28] : memref<448x384xbf16, #tpu.memory_space<vmem>>, vector<448x384xbf16>
    %cst_29 = arith.constant dense<0.000000e+00> : vector<112x384xf32>
    %48 = tpu.matmul %46, %47, %cst_29 {dimension_numbers = #tpu.dot_dimension_numbers<[1], [0], [0], [1], [0, 0, 1, 1], [], []>} : vector<112x448xbf16>, vector<448x384xbf16>, vector<112x384xf32> -> vector<112x384xf32>
    %49 = arith.truncf %48 : vector<112x384xf32> to vector<112x384xbf16>
    %50 = vector.extract_strided_slice %49 {offsets = [0, 0], sizes = [112, 28], strides = [1, 1]} : vector<112x384xbf16> to vector<112x28xbf16>
    %51 = vector.extract_strided_slice %49 {offsets = [0, 128], sizes = [112, 28], strides = [1, 1]} : vector<112x384xbf16> to vector<112x28xbf16>
    %52 = vector.extract_strided_slice %49 {offsets = [0, 256], sizes = [112, 28], strides = [1, 1]} : vector<112x384xbf16> to vector<112x28xbf16>
    %53 = tpu.concatenate %50, %51, %52 in 0 : vector<112x28xbf16>, vector<112x28xbf16>, vector<112x28xbf16> -> vector<336x28xbf16>
    %c0_30 = arith.constant 0 : index
    %c0_31 = arith.constant 0 : index
    %54 = vector.load %arg12[%c0_30, %c0_31] : memref<224x336xbf16, #tpu.memory_space<vmem>>, vector<224x336xbf16>
    %cst_32 = arith.constant dense<0.000000e+00> : vector<224x28xf32>
    %55 = tpu.matmul %54, %53, %cst_32 {dimension_numbers = #tpu.dot_dimension_numbers<[1], [0], [0], [1], [0, 0, 1, 1], [], []>} : vector<224x336xbf16>, vector<336x28xbf16>, vector<224x28xf32> -> vector<224x28xf32>
    %c0_33 = arith.constant 0 : index
    %c0_34 = arith.constant 0 : index
    %56 = vector.load %arg13[%c0_33, %c0_34] : memref<1x28xf32, #tpu.memory_space<vmem>>, vector<1x28xf32>
    %57 = vector.broadcast %56 : vector<1x28xf32> to vector<224x28xf32>
    %58 = arith.addf %55, %57 : vector<224x28xf32>
    %cst_35 = arith.constant 0.000000e+00 : f32
    %59 = vector.broadcast %cst_35 : f32 to vector<224x28xf32>
    %60 = arith.subf %59, %58 : vector<224x28xf32>
    %61 = math.exp %60 : vector<224x28xf32>
    %cst_36 = arith.constant 1.000000e+00 : f32
    %62 = vector.broadcast %cst_36 : f32 to vector<224x28xf32>
    %63 = arith.addf %62, %61 : vector<224x28xf32>
    %64 = tpu.reciprocal %63 {approx = true} : vector<224x28xf32> -> vector<224x28xf32>
    %c0_37 = arith.constant 0 : index
    %c0_38 = arith.constant 0 : index
    %65 = vector.load %arg14[%c0_37, %c0_38] : memref<224x28xf32, #tpu.memory_space<vmem>>, vector<224x28xf32>
    tpu.vector_store %arg14[%c0_37, %c0_38], %64 {strides = array<i32>} : memref<224x28xf32, #tpu.memory_space<vmem>>, vector<224x28xf32>,
    return
  }
  func.func @transform_0(%arg0: i32) -> (i32, i32) {
    %c0_i32 = arith.constant 0 : i32
    %c0_i32_0 = arith.constant 0 : i32
    return %arg0, %c0_i32 : i32, i32
  }
  func.func @transform_1(%arg0: i32) -> (i32, i32) {
    %c0_i32 = arith.constant 0 : i32
    %c0_i32_0 = arith.constant 0 : i32
    %c0_i32_1 = arith.constant 0 : i32
    return %c0_i32, %c0_i32_0 : i32, i32
  }
  func.func @transform_2(%arg0: i32) -> (i32, i32) {
    %c0_i32 = arith.constant 0 : i32
    %c0_i32_0 = arith.constant 0 : i32
    %c0_i32_1 = arith.constant 0 : i32
    return %c0_i32, %c0_i32_0 : i32, i32
  }
  func.func @transform_3(%arg0: i32) -> (i32, i32) {
    %c0_i32 = arith.constant 0 : i32
    %c0_i32_0 = arith.constant 0 : i32
    %c0_i32_1 = arith.constant 0 : i32
    return %c0_i32, %c0_i32_0 : i32, i32
  }
  func.func @transform_4(%arg0: i32) -> (i32, i32) {
    %c0_i32 = arith.constant 0 : i32
    %c0_i32_0 = arith.constant 0 : i32
    %c0_i32_1 = arith.constant 0 : i32
    return %c0_i32, %c0_i32_0 : i32, i32
  }
  func.func @transform_5(%arg0: i32) -> (i32, i32) {
    %c0_i32 = arith.constant 0 : i32
    %c0_i32_0 = arith.constant 0 : i32
    %c0_i32_1 = arith.constant 0 : i32
    return %c0_i32, %c0_i32_0 : i32, i32
  }
  func.func @transform_6(%arg0: i32) -> (i32, i32) {
    %c0_i32 = arith.constant 0 : i32
    %c0_i32_0 = arith.constant 0 : i32
    %c0_i32_1 = arith.constant 0 : i32
    return %c0_i32, %c0_i32_0 : i32, i32
  }
  func.func @transform_7(%arg0: i32) -> (i32, i32) {
    %c0_i32 = arith.constant 0 : i32
    %c0_i32_0 = arith.constant 0 : i32
    %c0_i32_1 = arith.constant 0 : i32
    return %c0_i32, %c0_i32_0 : i32, i32
  }
  func.func @transform_8(%arg0: i32) -> (i32, i32) {
    %c0_i32 = arith.constant 0 : i32
    %c0_i32_0 = arith.constant 0 : i32
    %c0_i32_1 = arith.constant 0 : i32
    return %c0_i32, %c0_i32_0 : i32, i32
  }
  func.func @transform_9(%arg0: i32) -> (i32, i32) {
    %c0_i32 = arith.constant 0 : i32
    %c0_i32_0 = arith.constant 0 : i32
    %c0_i32_1 = arith.constant 0 : i32
    return %c0_i32, %c0_i32_0 : i32, i32
  }
  func.func @transform_10(%arg0: i32) -> (i32, i32) {
    %c0_i32 = arith.constant 0 : i32
    %c0_i32_0 = arith.constant 0 : i32
    %c0_i32_1 = arith.constant 0 : i32
    return %c0_i32, %c0_i32_0 : i32, i32
  }
  func.func @transform_11(%arg0: i32) -> (i32, i32) {
    %c0_i32 = arith.constant 0 : i32
    %c0_i32_0 = arith.constant 0 : i32
    %c0_i32_1 = arith.constant 0 : i32
    return %c0_i32, %c0_i32_0 : i32, i32
  }
  func.func @transform_12(%arg0: i32) -> (i32, i32) {
    %c0_i32 = arith.constant 0 : i32
    %c0_i32_0 = arith.constant 0 : i32
    %c0_i32_1 = arith.constant 0 : i32
    return %c0_i32, %c0_i32_0 : i32, i32
  }
  func.func @transform_13(%arg0: i32) -> (i32, i32) {
    %c0_i32 = arith.constant 0 : i32
    %c0_i32_0 = arith.constant 0 : i32
    return %arg0, %c0_i32 : i32, i32
  }
}

</mosaic_0001>

<llo_original>
// kernel: decoder_forward.1
$region0: #{decoder_forward.1}
  #allocation0 [shape = 'u32[]', space=smem, size = 0x4, offset = 0x4, fixed_abs, tag = 'smem constant byte address 0x4 - core index']
  #allocation1 [shape = 'u32[144,128]{1,0:T(1,128)}', space=vmem, size = 0x12000, scoped, tag = 'internal scratch']
  %s0 = inlined_call_operand.vmem [shape: f32[16,20], index: 0, kind: input, shape index: {}]
  %s1 = inlined_call_operand.vmem [shape: bf16[20,384], index: 1, kind: input, shape index: {}]
  %s2 = inlined_call_operand.vmem [shape: bf16[32,48], index: 2, kind: input, shape index: {}]
  %s3 = inlined_call_operand.vmem [shape: f32[1,128], index: 3, kind: input, shape index: {}]
  %s4 = inlined_call_operand.hbm [shape: bf16[128,768], index: 4, kind: input, shape index: {}]
  %s5 = inlined_call_operand.vmem [shape: bf16[56,96], index: 5, kind: input, shape index: {}]
  %s6 = inlined_call_operand.vmem [shape: f32[1,224], index: 6, kind: input, shape index: {}]
  %s7 = inlined_call_operand.hbm [shape: bf16[224,1536], index: 7, kind: input, shape index: {}]
  %s8 = inlined_call_operand.vmem [shape: bf16[112,168], index: 8, kind: input, shape index: {}]
  %s9 = inlined_call_operand.vmem [shape: f32[1,448], index: 9, kind: input, shape index: {}]
  %s10 = inlined_call_operand.hbm [shape: bf16[448,384], index: 10, kind: input, shape index: {}]
  %s11 = inlined_call_operand.hbm [shape: bf16[224,336], index: 11, kind: input, shape index: {}]
  %s12 = inlined_call_operand.vmem [shape: f32[1,28], index: 12, kind: input, shape index: {}]
  %s13 = inlined_call_operand.vmem [shape: f32[224,28], index: 13, kind: output, shape index: {}]
  %s14 = sld [smem:[#allocation0]]
  $region78: #{decoder_forward.1} parent=0
    _
  %s16 = ssub.s32 1, %s14
  %s17 = scalar_select 0, %s16, %s14
  $region1: #{decoder_forward.1} parent=0
    #allocation2 [shape = 'u8[196608]{0}', space=vmem, size = 0x30000, scoped, tag = 'input window, operand 4, single buffered']
    #allocation3 [shape = 's32[1]{0}', space=sflag, size = 0x4, scoped, tag = 'scoped memory for decoder_forward.1']
    #allocation4 [shape = 'u8[688128]{0}', space=vmem, size = 0xa8000, scoped, tag = 'input window, operand 7, single buffered']
    #allocation5 [shape = 's32[1]{0}', space=sflag, size = 0x4, scoped, tag = 'scoped memory for decoder_forward.1']
    #allocation6 [shape = 'u8[344064]{0}', space=vmem, size = 0x54000, scoped, tag = 'input window, operand 10, single buffered']
    #allocation7 [shape = 'u8[172032]{0}', space=vmem, size = 0x2a000, scoped, tag = 'input window, operand 11, single buffered']
    #allocation8 [shape = 's32[1]{0}', space=sflag, size = 0x4, scoped, tag = 'scoped memory for decoder_forward.1']
    %18 = vsyncpa [#allocation3], 0
    %19 = vsyncpa [#allocation5], 0
    %20 = vsyncpa [#allocation8], 0
    // Predicated region
    $region2: #{decoder_forward.1} parent=1 // pred_check
      _
    $region3: #{decoder_forward.1} parent=1 // pred_check_branch
      %22 = sbr.rel (0) target = $region5
    $region4: #{decoder_forward.1} parent=1 // pred_region
      _
    $region5: #{decoder_forward.1} parent=1 // pred_fallthru
      _
    // Predicated region
    $region6: #{decoder_forward.1} parent=1 // pred_check
      _
    $region7: #{decoder_forward.1} parent=1 // pred_check_branch
      %24 = sbr.rel (0) target = $region9
    $region8: #{decoder_forward.1} parent=1 // pred_region
      _
    $region9: #{decoder_forward.1} parent=1 // pred_fallthru
      _
    // Predicated region
    $region10: #{decoder_forward.1} parent=1 // pred_check
      _
    $region11: #{decoder_forward.1} parent=1 // pred_check_branch
      %26 = sbr.rel (0) target = $region13
    $region12: #{decoder_forward.1} parent=1 // pred_region
      _
    $region13: #{decoder_forward.1} parent=1 // pred_fallthru
      _
    // Predicated region
    $region14: #{decoder_forward.1} parent=1 // pred_check
      _
    $region15: #{decoder_forward.1} parent=1 // pred_check_branch
      %28 = sbr.rel (0) target = $region17
    $region16: #{decoder_forward.1} parent=1 // pred_region
      _
    $region17: #{decoder_forward.1} parent=1 // pred_fallthru
      _
    // Predicated region
    $region18: #{decoder_forward.1} parent=1 // pred_check
      _
    $region19: #{decoder_forward.1} parent=1 // pred_check_branch
      %30 = sbr.rel (0) target = $region21
    $region20: #{decoder_forward.1} parent=1 // pred_region
      %s32 = ssub.s32 6144, 6144
      %33 = vsyncadd [#allocation3], %s32
      %s34 = sshll.u32 [#allocation2], 4
      %s35 = int_to_ptr.vmem [resolvable:$true] %s34
      %40 = dma.hbm_to_vmem [thread:$0]  %s4, 6144, %s35, [#allocation3], 384, 384, 24
    $region21: #{decoder_forward.1} parent=1 // pred_fallthru
      _
    // Predicated region
    $region22: #{decoder_forward.1} parent=1 // pred_check
      _
    $region23: #{decoder_forward.1} parent=1 // pred_check_branch
      %42 = sbr.rel (0) target = $region25
    $region24: #{decoder_forward.1} parent=1 // pred_region
      _
    $region25: #{decoder_forward.1} parent=1 // pred_fallthru
      _
    // Predicated region
    $region26: #{decoder_forward.1} parent=1 // pred_check
      _
    $region27: #{decoder_forward.1} parent=1 // pred_check_branch
      %44 = sbr.rel (0) target = $region29
    $region28: #{decoder_forward.1} parent=1 // pred_region
      _
    $region29: #{decoder_forward.1} parent=1 // pred_fallthru
      _
    // Predicated region
    $region30: #{decoder_forward.1} parent=1 // pred_check
      _
    $region31: #{decoder_forward.1} parent=1 // pred_check_branch
      %46 = sbr.rel (0) target = $region33
    $region32: #{decoder_forward.1} parent=1 // pred_region
      %s48 = ssub.s32 21504, 21504
      %49 = vsyncadd [#allocation5], %s48
      %s50 = sshll.u32 [#allocation4], 4
      %s51 = int_to_ptr.vmem [resolvable:$true] %s50
      %56 = dma.hbm_to_vmem [thread:$0]  %s7, 21504, %s51, [#allocation5], 768, 768, 48
    $region33: #{decoder_forward.1} parent=1 // pred_fallthru
      _
    // Predicated region
    $region34: #{decoder_forward.1} parent=1 // pred_check
      _
    $region35: #{decoder_forward.1} parent=1 // pred_check_branch
      %58 = sbr.rel (0) target = $region37
    $region36: #{decoder_forward.1} parent=1 // pred_region
      _
    $region37: #{decoder_forward.1} parent=1 // pred_fallthru
      _
    // Predicated region
    $region38: #{decoder_forward.1} parent=1 // pred_check
      _
    $region39: #{decoder_forward.1} parent=1 // pred_check_branch
      %60 = sbr.rel (0) target = $region41
    $region40: #{decoder_forward.1} parent=1 // pred_region
      _
    $region41: #{decoder_forward.1} parent=1 // pred_fallthru
      _
    // Predicated region
    $region42: #{decoder_forward.1} parent=1 // pred_check
      _
    $region43: #{decoder_forward.1} parent=1 // pred_check_branch
      %62 = sbr.rel (0) target = $region45
    $region44: #{decoder_forward.1} parent=1 // pred_region
      %s64 = ssub.s32 10752, 10752
      %65 = vsyncadd [#allocation5], %s64
      %s66 = sshll.u32 [#allocation6], 4
      %s67 = int_to_ptr.vmem [resolvable:$true] %s66
      %72 = dma.hbm_to_vmem [thread:$0]  %s10, 10752, %s67, [#allocation5], 192, 192, 12
    $region45: #{decoder_forward.1} parent=1 // pred_fallthru
      _
    // Predicated region
    $region46: #{decoder_forward.1} parent=1 // pred_check
      _
    $region47: #{decoder_forward.1} parent=1 // pred_check_branch
      %74 = sbr.rel (0) target = $region49
    $region48: #{decoder_forward.1} parent=1 // pred_region
      %s76 = ssub.s32 5376, 5376
      %77 = vsyncadd [#allocation8], %s76
      %s78 = sshll.u32 [#allocation7], 4
      %s79 = int_to_ptr.vmem [resolvable:$true] %s78
      %84 = dma.hbm_to_vmem [thread:$0]  %s11, 5376, %s79, [#allocation8], 192, 192, 12
    $region49: #{decoder_forward.1} parent=1 // pred_fallthru
      _
    // Predicated region
    $region50: #{decoder_forward.1} parent=1 // pred_check
      _
    $region51: #{decoder_forward.1} parent=1 // pred_check_branch
      %86 = sbr.rel (0) target = $region53
    $region52: #{decoder_forward.1} parent=1 // pred_region
      _
    $region53: #{decoder_forward.1} parent=1 // pred_fallthru
      _
    // Predicated region
    $region54: #{decoder_forward.1} parent=1 // pred_check
      _
    $region55: #{decoder_forward.1} parent=1 // pred_check_branch
      %88 = sbr.rel (0) target = $region57
    $region56: #{decoder_forward.1} parent=1 // pred_region
      %89 = dma.done [#allocation3], 6144
    $region57: #{decoder_forward.1} parent=1 // pred_fallthru
      _
    // Predicated region
    $region58: #{decoder_forward.1} parent=1 // pred_check
      _
    $region59: #{decoder_forward.1} parent=1 // pred_check_branch
      %91 = sbr.rel (0) target = $region61
    $region60: #{decoder_forward.1} parent=1 // pred_region
      %92 = dma.done [#allocation5], 21504
    $region61: #{decoder_forward.1} parent=1 // pred_fallthru
      _
    // Predicated region
    $region62: #{decoder_forward.1} parent=1 // pred_check
      _
    $region63: #{decoder_forward.1} parent=1 // pred_check_branch
      %94 = sbr.rel (0) target = $region65
    $region64: #{decoder_forward.1} parent=1 // pred_region
      %95 = dma.done [#allocation5], 10752
    $region65: #{decoder_forward.1} parent=1 // pred_fallthru
      _
    // Predicated region
    $region66: #{decoder_forward.1} parent=1 // pred_check
      _
    $region67: #{decoder_forward.1} parent=1 // pred_check_branch
      %97 = sbr.rel (0) target = $region69
    $region68: #{decoder_forward.1} parent=1 // pred_region
      %98 = dma.done [#allocation8], 5376
    $region69: #{decoder_forward.1} parent=1 // pred_fallthru
      _
    %v100 = vld [vmem:[%s0] sm:$0xff]
    %v101 = vld [vmem:[%s0 + $0x8] sm:$0xff]
    %v102 = vpack.c.bf16 %v101, %v100
    %v103 = vld [vmem:[%s1] sm:$0xff]
    %v104 = vld [vmem:[%s1 + $0x8] sm:$0xf]
    %v105 = vld [vmem:[%s1 + $0xc] sm:$0xff]
    %v106 = vld [vmem:[%s1 + $0x14] sm:$0xf]
    %v107 = vld [vmem:[%s1 + $0x18] sm:$0x33]
    %v108 = vld [vmem:[%s1 + $0x20] sm:$0x3]
    %v115 = vunpack.c.l.b16 %v103
    %v116 = vunpack.c.h.b16 %v103
    %v117 = vunpack.c.l.b16 %v104
    %v118 = vunpack.c.l.b16 %v105
    %v119 = vunpack.c.h.b16 %v105
    %v120 = vunpack.c.l.b16 %v106
    %v121 = vunpack.c.l.b16 %v107
    %v122 = vunpack.c.h.b16 %v107
    %v123 = vunpack.c.l.b16 %v108
    %v124 = vpack.c.b16 %v118, %v115
    %v125 = vpack.c.b16 %v119, %v116
    %v126 = vpack.c.b16 %v120, %v117
    %v127 = vpack.c.b16 %v121, %v121
    %v128 = vpack.c.b16 %v122, %v122
    %v129 = vpack.c.b16 %v123, %v123
    %vm133 = vcmask 162816
    %v135 = vsel %vm133, %v102, 0
    %vm137 = vcmask 1041408
    %v139 = vsel %vm137, %v127, 0
    %v142 = vsel %vm137, %v128, 0
    %v145 = vsel %vm137, %v129, 0
    %147 = vmatprep.subr.bf16.mxu0 %v125
    %148 = vmatpush1.bf16.msra.mxu0 %v124
    %149 = vmatprep.subr.bf16.mxu0 %v142
    %150 = vmatpush1.bf16.msra.mxu0 %v139
    %151 = vmatprep.subr.bf16.mxu0 0
    %152 = vmatpush1.bf16.msra.mxu0 0
    %153 = vmatprep.subr.bf16.mxu0 0
    %154 = vmatpush1.bf16.msra.mxu0 0
    %155 = vmatprep.subr.bf16.mxu0 0
    %156 = vmatpush1.bf16.msra.mxu0 0
    %157 = vmatprep.subr.bf16.mxu0 0
    %158 = vmatpush1.bf16.msra.mxu0 0
    %159 = vmatprep.subr.bf16.mxu0 0
    %160 = vmatpush1.bf16.msra.mxu0 0
    %161 = vmatprep.subr.bf16.mxu0 0
    %162 = vmatpush1.bf16.msra.mxu0 0
    %163 = vmatprep.subr.bf16.mxu0 0
    %164 = vmatpush1.bf16.msra.mxu0 0
    %165 = vmatprep.subr.bf16.mxu0 0
    %166 = vmatpush1.bf16.msra.mxu0 0
    %167 = vmatprep.subr.bf16.mxu0 0
    %168 = vmatpush1.bf16.msra.mxu0 0
    %169 = vmatprep.subr.bf16.mxu0 0
    %170 = vmatpush1.bf16.msra.mxu0 0
    %171 = vmatprep.subr.bf16.mxu0 0
    %172 = vmatpush1.bf16.msra.mxu0 0
    %173 = vmatprep.subr.bf16.mxu0 0
    %174 = vmatpush1.bf16.msra.mxu0 0
    %175 = vmatprep.subr.bf16.mxu0 0
    %176 = vmatpush1.bf16.msra.mxu0 0
    %177 = vmatprep.subr.bf16.mxu0 0
    %178 = vmatpush1.bf16.msra.mxu0 0
    %179 = vmatprep.mubr.bf16.mxu0 0
    %180 = vmatmul.mubr.bf16.gmra.mrb[0].mxu0 %v135
    %v181 = vpop.f32.mrb[0].mxu0
    %v182 = vadd.f32 0.0, %v181
    %v183 = vpop.f32.mrb[0].mxu0
    %v184 = vadd.f32 0.0, %v183
    %v185 = vpop.f32.mrb[0].mxu0
    %v186 = vadd.f32 0.0, %v185
    %v187 = vpop.f32.mrb[0].mxu0
    %v188 = vadd.f32 0.0, %v187
    %189 = vdwg.mxu0
    %190 = vmatprep.subr.bf16.mxu0 0
    %191 = vmatpush1.bf16.msra.mxu0 %v126
    %192 = vmatprep.subr.bf16.mxu0 0
    %193 = vmatpush1.bf16.msra.mxu0 %v145
    %194 = vmatprep.subr.bf16.mxu0 0
    %195 = vmatpush1.bf16.msra.mxu0 0
    %196 = vmatprep.subr.bf16.mxu0 0
    %197 = vmatpush1.bf16.msra.mxu0 0
    %198 = vmatprep.subr.bf16.mxu0 0
    %199 = vmatpush1.bf16.msra.mxu0 0
    %200 = vmatprep.subr.bf16.mxu0 0
    %201 = vmatpush1.bf16.msra.mxu0 0
    %202 = vmatprep.subr.bf16.mxu0 0
    %203 = vmatpush1.bf16.msra.mxu0 0
    %204 = vmatprep.subr.bf16.mxu0 0
    %205 = vmatpush1.bf16.msra.mxu0 0
    %206 = vmatprep.subr.bf16.mxu0 0
    %207 = vmatpush1.bf16.msra.mxu0 0
    %208 = vmatprep.subr.bf16.mxu0 0
    %209 = vmatpush1.bf16.msra.mxu0 0
    %210 = vmatprep.subr.bf16.mxu0 0
    %211 = vmatpush1.bf16.msra.mxu0 0
    %212 = vmatprep.subr.bf16.mxu0 0
    %213 = vmatpush1.bf16.msra.mxu0 0
    %214 = vmatprep.subr.bf16.mxu0 0
    %215 = vmatpush1.bf16.msra.mxu0 0
    %216 = vmatprep.subr.bf16.mxu0 0
    %217 = vmatpush1.bf16.msra.mxu0 0
    %218 = vmatprep.subr.bf16.mxu0 0
    %219 = vmatpush1.bf16.msra.mxu0 0
    %220 = vmatprep.subr.bf16.mxu0 0
    %221 = vmatpush1.bf16.msra.mxu0 0
    %222 = vmatprep.mubr.bf16.mxu0 0
    %223 = vmatmul.mubr.bf16.gmra.mrb[0].mxu0 %v135
    %v224 = vpop.f32.mrb[0].mxu0
    %v225 = vadd.f32 0.0, %v224
    %v226 = vpop.f32.mrb[0].mxu0
    %v227 = vpop.f32.mrb[0].mxu0
    %v228 = vadd.f32 0.0, %v227
    %v229 = vpop.f32.mrb[0].mxu0
    %230 = vdwg.mxu0
    %v231 = vpack.c.bf16 %v186, %v182
    %v232 = vpack.c.bf16 %v188, %v184
    %v233 = vpack.c.bf16 %v228, %v225
    %v234 = vld [vmem:[%s2] sm:$0xf]
    %v235 = vld [vmem:[%s2 + $0x4] sm:$0xf]
    %v236 = vld [vmem:[%s2 + $0x8] sm:$0xf]
    %v237 = vld [vmem:[%s2 + $0xc] sm:$0xf]
    %v238 = vld [vmem:[%s3] sm:$0x1]
    %v240 = vlaneseq
    %v241 = vshrl.u32 %v240, 7
    %v242 = vsub.s32 0, %v241
    %v243 = vrot.slane %v238, %v242
    %v249 = vunpack.c.l.b16 %v234
    %v250 = vunpack.c.l.b16 %v235
    %v251 = vunpack.c.l.b16 %v236
    %v252 = vunpack.c.l.b16 %v237
    %v253 = vpack.c.b16 %v250, %v249
    %v254 = vpack.c.b16 %v252, %v251
    %vm255 = vcmask 392192
    %v257 = vsel %vm255, %v253, 0
    %v260 = vsel %vm255, %v254, 0
    %262 = vmatprep.subr.bf16.mxu0 0
    %263 = vmatpush1.bf16.msra.mxu0 %v231
    %264 = vmatprep.subr.bf16.mxu0 0
    %265 = vmatpush1.bf16.msra.mxu0 %v232
    %266 = vmatprep.subr.bf16.mxu0 0
    %267 = vmatpush1.bf16.msra.mxu0 %v233
    %268 = vmatprep.subr.bf16.mxu0 0
    %269 = vmatpush1.bf16.msra.mxu0 0
    %270 = vmatprep.subr.bf16.mxu0 0
    %271 = vmatpush1.bf16.msra.mxu0 0
    %272 = vmatprep.subr.bf16.mxu0 0
    %273 = vmatpush1.bf16.msra.mxu0 0
    %274 = vmatprep.subr.bf16.mxu0 0
    %275 = vmatpush1.bf16.msra.mxu0 0
    %276 = vmatprep.subr.bf16.mxu0 0
    %277 = vmatpush1.bf16.msra.mxu0 0
    %278 = vmatprep.subr.bf16.mxu0 0
    %279 = vmatpush1.bf16.msra.mxu0 0
    %280 = vmatprep.subr.bf16.mxu0 0
    %281 = vmatpush1.bf16.msra.mxu0 0
    %282 = vmatprep.subr.bf16.mxu0 0
    %283 = vmatpush1.bf16.msra.mxu0 0
    %284 = vmatprep.subr.bf16.mxu0 0
    %285 = vmatpush1.bf16.msra.mxu0 0
    %286 = vmatprep.subr.bf16.mxu0 0
    %287 = vmatpush1.bf16.msra.mxu0 0
    %288 = vmatprep.subr.bf16.mxu0 0
    %289 = vmatpush1.bf16.msra.mxu0 0
    %290 = vmatprep.subr.bf16.mxu0 0
    %291 = vmatpush1.bf16.msra.mxu0 0
    %292 = vmatprep.subr.bf16.mxu0 0
    %293 = vmatpush1.bf16.msra.mxu0 0
    %294 = vmatprep.mubr.bf16.mxu0 0
    %295 = vmatmul.mubr.bf16.gmra.mrb[0].mxu0 %v257
    %v296 = vpop.f32.mrb[0].mxu0
    %v297 = vadd.f32 %v243, %v296
    %v298 = vpop.f32.mrb[0].mxu0
    %v299 = vpop.f32.mrb[0].mxu0
    %v300 = vadd.f32 %v243, %v299
    %v301 = vpop.f32.mrb[0].mxu0
    %302 = vmatprep.mubr.bf16.mxu0 0
    %303 = vmatmul.mubr.bf16.gmra.mrb[0].mxu0 %v260
    %v304 = vpop.f32.mrb[0].mxu0
    %v305 = vadd.f32 %v243, %v304
    %v306 = vpop.f32.mrb[0].mxu0
    %v307 = vpop.f32.mrb[0].mxu0
    %v308 = vadd.f32 %v243, %v307
    %v309 = vpop.f32.mrb[0].mxu0
    %310 = vdwg.mxu0
    %v311 = vmax.f32 %v297, 0.0
    %v312 = vmax.f32 %v300, 0.0
    %v313 = vmax.f32 %v305, 0.0
    %v314 = vmax.f32 %v308, 0.0
    %v315 = vpack.c.bf16 %v312, %v311
    %v316 = vpack.c.bf16 %v314, %v313
    %v317 = vld [vmem:[#allocation2] sm:$0xff]
    %v318 = vld [vmem:[#allocation2 + $0x8] sm:$0xff]
    %v319 = vld [vmem:[#allocation2 + $0x10] sm:$0xff]
    %v320 = vld [vmem:[#allocation2 + $0x18] sm:$0xff]
    %v321 = vld [vmem:[#allocation2 + $0x20] sm:$0xff]
    %v322 = vld [vmem:[#allocation2 + $0x28] sm:$0xff]
    %v323 = vld [vmem:[#allocation2 + $0x30] sm:$0xff]
    %v324 = vld [vmem:[#allocation2 + $0x38] sm:$0xff]
    %v325 = vld [vmem:[#allocation2 + $0x40] sm:$0xff]
    %v326 = vld [vmem:[#allocation2 + $0x48] sm:$0xff]
    %v327 = vld [vmem:[#allocation2 + $0x50] sm:$0xff]
    %v328 = vld [vmem:[#allocation2 + $0x58] sm:$0xff]
    %v329 = vld [vmem:[#allocation2 + $0x60] sm:$0xff]
    %v330 = vld [vmem:[#allocation2 + $0x68] sm:$0xff]
    %v331 = vld [vmem:[#allocation2 + $0x70] sm:$0xff]
    %v332 = vld [vmem:[#allocation2 + $0x78] sm:$0xff]
    %v333 = vld [vmem:[#allocation2 + $0x80] sm:$0xff]
    %v334 = vld [vmem:[#allocation2 + $0x88] sm:$0xff]
    %v335 = vld [vmem:[#allocation2 + $0x90] sm:$0xff]
    %v336 = vld [vmem:[#allocation2 + $0x98] sm:$0xff]
    %v337 = vld [vmem:[#allocation2 + $0xa0] sm:$0xff]
    %v338 = vld [vmem:[#allocation2 + $0xa8] sm:$0xff]
    %v339 = vld [vmem:[#allocation2 + $0xb0] sm:$0xff]
    %v340 = vld [vmem:[#allocation2 + $0xb8] sm:$0xff]
    %v341 = vld [vmem:[#allocation2 + $0xc0] sm:$0xff]
    %v342 = vld [vmem:[#allocation2 + $0xc8] sm:$0xff]
    %v343 = vld [vmem:[#allocation2 + $0xd0] sm:$0xff]
    %v344 = vld [vmem:[#allocation2 + $0xd8] sm:$0xff]
    %v345 = vld [vmem:[#allocation2 + $0xe0] sm:$0xff]
    %v346 = vld [vmem:[#allocation2 + $0xe8] sm:$0xff]
    %v347 = vld [vmem:[#allocation2 + $0xf0] sm:$0xff]
    %v348 = vld [vmem:[#allocation2 + $0xf8] sm:$0xff]
    %v349 = vld [vmem:[#allocation2 + $0x100] sm:$0xff]
    %v350 = vld [vmem:[#allocation2 + $0x108] sm:$0xff]
    %v351 = vld [vmem:[#allocation2 + $0x110] sm:$0xff]
    %v352 = vld [vmem:[#allocation2 + $0x118] sm:$0xff]
    %v353 = vld [vmem:[#allocation2 + $0x120] sm:$0xff]
    %v354 = vld [vmem:[#allocation2 + $0x128] sm:$0xff]
    %v355 = vld [vmem:[#allocation2 + $0x130] sm:$0xff]
    %v356 = vld [vmem:[#allocation2 + $0x138] sm:$0xff]
    %v357 = vld [vmem:[#allocation2 + $0x140] sm:$0xff]
    %v358 = vld [vmem:[#allocation2 + $0x148] sm:$0xff]
    %v359 = vld [vmem:[#allocation2 + $0x150] sm:$0xff]
    %v360 = vld [vmem:[#allocation2 + $0x158] sm:$0xff]
    %v361 = vld [vmem:[#allocation2 + $0x160] sm:$0xff]
    %v362 = vld [vmem:[#allocation2 + $0x168] sm:$0xff]
    %v363 = vld [vmem:[#allocation2 + $0x170] sm:$0xff]
    %v364 = vld [vmem:[#allocation2 + $0x178] sm:$0xff]
    %v413 = vunpack.c.l.b16 %v317
    %v414 = vunpack.c.h.b16 %v317
    %v415 = vunpack.c.l.b16 %v318
    %v416 = vunpack.c.h.b16 %v318
    %v417 = vunpack.c.l.b16 %v319
    %v418 = vunpack.c.h.b16 %v319
    %v419 = vunpack.c.l.b16 %v320
    %v420 = vunpack.c.h.b16 %v320
    %v421 = vunpack.c.l.b16 %v321
    %v422 = vunpack.c.h.b16 %v321
    %v423 = vunpack.c.l.b16 %v322
    %v424 = vunpack.c.h.b16 %v322
    %v425 = vunpack.c.l.b16 %v323
    %v426 = vunpack.c.h.b16 %v323
    %v427 = vunpack.c.l.b16 %v324
    %v428 = vunpack.c.h.b16 %v324
    %v429 = vunpack.c.l.b16 %v325
    %v430 = vunpack.c.h.b16 %v325
    %v431 = vunpack.c.l.b16 %v326
    %v432 = vunpack.c.h.b16 %v326
    %v433 = vunpack.c.l.b16 %v327
    %v434 = vunpack.c.h.b16 %v327
    %v435 = vunpack.c.l.b16 %v328
    %v436 = vunpack.c.h.b16 %v328
    %v437 = vunpack.c.l.b16 %v329
    %v438 = vunpack.c.h.b16 %v329
    %v439 = vunpack.c.l.b16 %v330
    %v440 = vunpack.c.h.b16 %v330
    %v441 = vunpack.c.l.b16 %v331
    %v442 = vunpack.c.h.b16 %v331
    %v443 = vunpack.c.l.b16 %v332
    %v444 = vunpack.c.h.b16 %v332
    %v445 = vunpack.c.l.b16 %v333
    %v446 = vunpack.c.h.b16 %v333
    %v447 = vunpack.c.l.b16 %v334
    %v448 = vunpack.c.h.b16 %v334
    %v449 = vunpack.c.l.b16 %v335
    %v450 = vunpack.c.h.b16 %v335
    %v451 = vunpack.c.l.b16 %v336
    %v452 = vunpack.c.h.b16 %v336
    %v453 = vunpack.c.l.b16 %v337
    %v454 = vunpack.c.h.b16 %v337
    %v455 = vunpack.c.l.b16 %v338
    %v456 = vunpack.c.h.b16 %v338
    %v457 = vunpack.c.l.b16 %v339
    %v458 = vunpack.c.h.b16 %v339
    %v459 = vunpack.c.l.b16 %v340
    %v460 = vunpack.c.h.b16 %v340
    %v461 = vunpack.c.l.b16 %v341
    %v462 = vunpack.c.h.b16 %v341
    %v463 = vunpack.c.l.b16 %v342
    %v464 = vunpack.c.h.b16 %v342
    %v465 = vunpack.c.l.b16 %v343
    %v466 = vunpack.c.h.b16 %v343
    %v467 = vunpack.c.l.b16 %v344
    %v468 = vunpack.c.h.b16 %v344
    %v469 = vunpack.c.l.b16 %v345
    %v470 = vunpack.c.h.b16 %v345
    %v471 = vunpack.c.l.b16 %v346
    %v472 = vunpack.c.h.b16 %v346
    %v473 = vunpack.c.l.b16 %v347
    %v474 = vunpack.c.h.b16 %v347
    %v475 = vunpack.c.l.b16 %v348
    %v476 = vunpack.c.h.b16 %v348
    %v477 = vunpack.c.l.b16 %v349
    %v478 = vunpack.c.h.b16 %v349
    %v479 = vunpack.c.l.b16 %v350
    %v480 = vunpack.c.h.b16 %v350
    %v481 = vunpack.c.l.b16 %v351
    %v482 = vunpack.c.h.b16 %v351
    %v483 = vunpack.c.l.b16 %v352
    %v484 = vunpack.c.h.b16 %v352
    %v485 = vunpack.c.l.b16 %v353
    %v486 = vunpack.c.h.b16 %v353
    %v487 = vunpack.c.l.b16 %v354
    %v488 = vunpack.c.h.b16 %v354
    %v489 = vunpack.c.l.b16 %v355
    %v490 = vunpack.c.h.b16 %v355
    %v491 = vunpack.c.l.b16 %v356
    %v492 = vunpack.c.h.b16 %v356
    %v493 = vunpack.c.l.b16 %v357
    %v494 = vunpack.c.h.b16 %v357
    %v495 = vunpack.c.l.b16 %v358
    %v496 = vunpack.c.h.b16 %v358
    %v497 = vunpack.c.l.b16 %v359
    %v498 = vunpack.c.h.b16 %v359
    %v499 = vunpack.c.l.b16 %v360
    %v500 = vunpack.c.h.b16 %v360
    %v501 = vunpack.c.l.b16 %v361
    %v502 = vunpack.c.h.b16 %v361
    %v503 = vunpack.c.l.b16 %v362
    %v504 = vunpack.c.h.b16 %v362
    %v505 = vunpack.c.l.b16 %v363
    %v506 = vunpack.c.h.b16 %v363
    %v507 = vunpack.c.l.b16 %v364
    %v508 = vunpack.c.h.b16 %v364
    %v509 = vpack.c.b16 %v419, %v413
    %v510 = vpack.c.b16 %v420, %v414
    %v511 = vpack.c.b16 %v421, %v415
    %v512 = vpack.c.b16 %v422, %v416
    %v513 = vpack.c.b16 %v423, %v417
    %v514 = vpack.c.b16 %v424, %v418
    %v515 = vpack.c.b16 %v431, %v425
    %v516 = vpack.c.b16 %v432, %v426
    %v517 = vpack.c.b16 %v433, %v427
    %v518 = vpack.c.b16 %v434, %v428
    %v519 = vpack.c.b16 %v435, %v429
    %v520 = vpack.c.b16 %v436, %v430
    %v521 = vpack.c.b16 %v443, %v437
    %v522 = vpack.c.b16 %v444, %v438
    %v523 = vpack.c.b16 %v445, %v439
    %v524 = vpack.c.b16 %v446, %v440
    %v525 = vpack.c.b16 %v447, %v441
    %v526 = vpack.c.b16 %v448, %v442
    %v527 = vpack.c.b16 %v455, %v449
    %v528 = vpack.c.b16 %v456, %v450
    %v529 = vpack.c.b16 %v457, %v451
    %v530 = vpack.c.b16 %v458, %v452
    %v531 = vpack.c.b16 %v459, %v453
    %v532 = vpack.c.b16 %v460, %v454
    %v533 = vpack.c.b16 %v467, %v461
    %v534 = vpack.c.b16 %v468, %v462
    %v535 = vpack.c.b16 %v469, %v463
    %v536 = vpack.c.b16 %v470, %v464
    %v537 = vpack.c.b16 %v471, %v465
    %v538 = vpack.c.b16 %v472, %v466
    %v539 = vpack.c.b16 %v479, %v473
    %v540 = vpack.c.b16 %v480, %v474
    %v541 = vpack.c.b16 %v481, %v475
    %v542 = vpack.c.b16 %v482, %v476
    %v543 = vpack.c.b16 %v483, %v477
    %v544 = vpack.c.b16 %v484, %v478
    %v545 = vpack.c.b16 %v491, %v485
    %v546 = vpack.c.b16 %v492, %v486
    %v547 = vpack.c.b16 %v493, %v487
    %v548 = vpack.c.b16 %v494, %v488
    %v549 = vpack.c.b16 %v495, %v489
    %v550 = vpack.c.b16 %v496, %v490
    %v551 = vpack.c.b16 %v503, %v497
    %v552 = vpack.c.b16 %v504, %v498
    %v553 = vpack.c.b16 %v505, %v499
    %v554 = vpack.c.b16 %v506, %v500
    %v555 = vpack.c.b16 %v507, %v501
    %v556 = vpack.c.b16 %v508, %v502
    %605 = vmatprep.subr.bf16.mxu0 %v510
    %606 = vmatpush1.bf16.msra.mxu0 %v509
    %607 = vmatprep.subr.bf16.mxu0 %v516
    %608 = vmatpush1.bf16.msra.mxu0 %v515
    %609 = vmatprep.subr.bf16.mxu0 %v522
    %610 = vmatpush1.bf16.msra.mxu0 %v521
    %611 = vmatprep.subr.bf16.mxu0 %v528
    %612 = vmatpush1.bf16.msra.mxu0 %v527
    %613 = vmatprep.subr.bf16.mxu0 %v534
    %614 = vmatpush1.bf16.msra.mxu0 %v533
    %615 = vmatprep.subr.bf16.mxu0 %v540
    %616 = vmatpush1.bf16.msra.mxu0 %v539
    %617 = vmatprep.subr.bf16.mxu0 %v546
    %618 = vmatpush1.bf16.msra.mxu0 %v545
    %619 = vmatprep.subr.bf16.mxu0 %v552
    %620 = vmatpush1.bf16.msra.mxu0 %v551
    %621 = vmatprep.subr.bf16.mxu0 0
    %622 = vmatpush1.bf16.msra.mxu0 0
    %623 = vmatprep.subr.bf16.mxu0 0
    %624 = vmatpush1.bf16.msra.mxu0 0
    %625 = vmatprep.subr.bf16.mxu0 0
    %626 = vmatpush1.bf16.msra.mxu0 0
    %627 = vmatprep.subr.bf16.mxu0 0
    %628 = vmatpush1.bf16.msra.mxu0 0
    %629 = vmatprep.subr.bf16.mxu0 0
    %630 = vmatpush1.bf16.msra.mxu0 0
    %631 = vmatprep.subr.bf16.mxu0 0
    %632 = vmatpush1.bf16.msra.mxu0 0
    %633 = vmatprep.subr.bf16.mxu0 0
    %634 = vmatpush1.bf16.msra.mxu0 0
    %635 = vmatprep.subr.bf16.mxu0 0
    %636 = vmatpush1.bf16.msra.mxu0 0
    %637 = vmatprep.mubr.bf16.mxu0 0
    %638 = vmatmul.mubr.bf16.gmra.mrb[0].mxu0 %v315
    %v639 = vpop.f32.mrb[0].mxu0
    %v640 = vadd.f32 0.0, %v639
    %v641 = vpop.f32.mrb[0].mxu0
    %v642 = vadd.f32 0.0, %v641
    %v643 = vpop.f32.mrb[0].mxu0
    %v644 = vadd.f32 0.0, %v643
    %v645 = vpop.f32.mrb[0].mxu0
    %v646 = vadd.f32 0.0, %v645
    %647 = vmatprep.mubr.bf16.mxu0 0
    %648 = vmatmul.mubr.bf16.gmra.mrb[0].mxu0 %v316
    %v649 = vpop.f32.mrb[0].mxu0
    %v650 = vadd.f32 0.0, %v649
    %v651 = vpop.f32.mrb[0].mxu0
    %v652 = vadd.f32 0.0, %v651
    %v653 = vpop.f32.mrb[0].mxu0
    %v654 = vadd.f32 0.0, %v653
    %v655 = vpop.f32.mrb[0].mxu0
    %v656 = vadd.f32 0.0, %v655
    %657 = vdwg.mxu0
    %658 = vmatprep.subr.bf16.mxu0 %v512
    %659 = vmatpush1.bf16.msra.mxu0 %v511
    %660 = vmatprep.subr.bf16.mxu0 %v518
    %661 = vmatpush1.bf16.msra.mxu0 %v517
    %662 = vmatprep.subr.bf16.mxu0 %v524
    %663 = vmatpush1.bf16.msra.mxu0 %v523
    %664 = vmatprep.subr.bf16.mxu0 %v530
    %665 = vmatpush1.bf16.msra.mxu0 %v529
    %666 = vmatprep.subr.bf16.mxu0 %v536
    %667 = vmatpush1.bf16.msra.mxu0 %v535
    %668 = vmatprep.subr.bf16.mxu0 %v542
    %669 = vmatpush1.bf16.msra.mxu0 %v541
    %670 = vmatprep.subr.bf16.mxu0 %v548
    %671 = vmatpush1.bf16.msra.mxu0 %v547
    %672 = vmatprep.subr.bf16.mxu0 %v554
    %673 = vmatpush1.bf16.msra.mxu0 %v553
    %674 = vmatprep.subr.bf16.mxu0 0
    %675 = vmatpush1.bf16.msra.mxu0 0
    %676 = vmatprep.subr.bf16.mxu0 0
    %677 = vmatpush1.bf16.msra.mxu0 0
    %678 = vmatprep.subr.bf16.mxu0 0
    %679 = vmatpush1.bf16.msra.mxu0 0
    %680 = vmatprep.subr.bf16.mxu0 0
    %681 = vmatpush1.bf16.msra.mxu0 0
    %682 = vmatprep.subr.bf16.mxu0 0
    %683 = vmatpush1.bf16.msra.mxu0 0
    %684 = vmatprep.subr.bf16.mxu0 0
    %685 = vmatpush1.bf16.msra.mxu0 0
    %686 = vmatprep.subr.bf16.mxu0 0
    %687 = vmatpush1.bf16.msra.mxu0 0
    %688 = vmatprep.subr.bf16.mxu0 0
    %689 = vmatpush1.bf16.msra.mxu0 0
    %690 = vmatprep.mubr.bf16.mxu0 0
    %691 = vmatmul.mubr.bf16.gmra.mrb[0].mxu0 %v315
    %v692 = vpop.f32.mrb[0].mxu0
    %v693 = vadd.f32 0.0, %v692
    %v694 = vpop.f32.mrb[0].mxu0
    %v695 = vadd.f32 0.0, %v694
    %v696 = vpop.f32.mrb[0].mxu0
    %v697 = vadd.f32 0.0, %v696
    %v698 = vpop.f32.mrb[0].mxu0
    %v699 = vadd.f32 0.0, %v698
    %700 = vmatprep.mubr.bf16.mxu0 0
    %701 = vmatmul.mubr.bf16.gmra.mrb[0].mxu0 %v316
    %v702 = vpop.f32.mrb[0].mxu0
    %v703 = vadd.f32 0.0, %v702
    %v704 = vpop.f32.mrb[0].mxu0
    %v705 = vadd.f32 0.0, %v704
    %v706 = vpop.f32.mrb[0].mxu0
    %v707 = vadd.f32 0.0, %v706
    %v708 = vpop.f32.mrb[0].mxu0
    %v709 = vadd.f32 0.0, %v708
    %710 = vdwg.mxu0
    %711 = vmatprep.subr.bf16.mxu0 %v514
    %712 = vmatpush1.bf16.msra.mxu0 %v513
    %713 = vmatprep.subr.bf16.mxu0 %v520
    %714 = vmatpush1.bf16.msra.mxu0 %v519
    %715 = vmatprep.subr.bf16.mxu0 %v526
    %716 = vmatpush1.bf16.msra.mxu0 %v525
    %717 = vmatprep.subr.bf16.mxu0 %v532
    %718 = vmatpush1.bf16.msra.mxu0 %v531
    %719 = vmatprep.subr.bf16.mxu0 %v538
    %720 = vmatpush1.bf16.msra.mxu0 %v537
    %721 = vmatprep.subr.bf16.mxu0 %v544
    %722 = vmatpush1.bf16.msra.mxu0 %v543
    %723 = vmatprep.subr.bf16.mxu0 %v550
    %724 = vmatpush1.bf16.msra.mxu0 %v549
    %725 = vmatprep.subr.bf16.mxu0 %v556
    %726 = vmatpush1.bf16.msra.mxu0 %v555
    %727 = vmatprep.subr.bf16.mxu0 0
    %728 = vmatpush1.bf16.msra.mxu0 0
    %729 = vmatprep.subr.bf16.mxu0 0
    %730 = vmatpush1.bf16.msra.mxu0 0
    %731 = vmatprep.subr.bf16.mxu0 0
    %732 = vmatpush1.bf16.msra.mxu0 0
    %733 = vmatprep.subr.bf16.mxu0 0
    %734 = vmatpush1.bf16.msra.mxu0 0
    %735 = vmatprep.subr.bf16.mxu0 0
    %736 = vmatpush1.bf16.msra.mxu0 0
    %737 = vmatprep.subr.bf16.mxu0 0
    %738 = vmatpush1.bf16.msra.mxu0 0
    %739 = vmatprep.subr.bf16.mxu0 0
    %740 = vmatpush1.bf16.msra.mxu0 0
    %741 = vmatprep.subr.bf16.mxu0 0
    %742 = vmatpush1.bf16.msra.mxu0 0
    %743 = vmatprep.mubr.bf16.mxu0 0
    %744 = vmatmul.mubr.bf16.gmra.mrb[0].mxu0 %v315
    %v745 = vpop.f32.mrb[0].mxu0
    %v746 = vadd.f32 0.0, %v745
    %v747 = vpop.f32.mrb[0].mxu0
    %v748 = vadd.f32 0.0, %v747
    %v749 = vpop.f32.mrb[0].mxu0
    %v750 = vadd.f32 0.0, %v749
    %v751 = vpop.f32.mrb[0].mxu0
    %v752 = vadd.f32 0.0, %v751
    %753 = vmatprep.mubr.bf16.mxu0 0
    %754 = vmatmul.mubr.bf16.gmra.mrb[0].mxu0 %v316
    %v755 = vpop.f32.mrb[0].mxu0
    %v756 = vadd.f32 0.0, %v755
    %v757 = vpop.f32.mrb[0].mxu0
    %v758 = vadd.f32 0.0, %v757
    %v759 = vpop.f32.mrb[0].mxu0
    %v760 = vadd.f32 0.0, %v759
    %v761 = vpop.f32.mrb[0].mxu0
    %v762 = vadd.f32 0.0, %v761
    %763 = vdwg.mxu0
    %v764 = vpack.c.bf16 %v644, %v640
    %v765 = vpack.c.bf16 %v646, %v642
    %v766 = vpack.c.bf16 %v697, %v693
    %v767 = vpack.c.bf16 %v699, %v695
    %v768 = vpack.c.bf16 %v750, %v746
    %v769 = vpack.c.bf16 %v752, %v748
    %v770 = vpack.c.bf16 %v654, %v650
    %v771 = vpack.c.bf16 %v656, %v652
    %v772 = vpack.c.bf16 %v707, %v703
    %v773 = vpack.c.bf16 %v709, %v705
    %v774 = vpack.c.bf16 %v760, %v756
    %v775 = vpack.c.bf16 %v762, %v758
    %v776 = vld [vmem:[%s5] sm:$0xf]
    %v777 = vld [vmem:[%s5 + $0x4] sm:$0xf]
    %v778 = vld [vmem:[%s5 + $0x8] sm:$0xf]
    %v779 = vld [vmem:[%s5 + $0xc] sm:$0xf]
    %v780 = vld [vmem:[%s5 + $0x10] sm:$0xf]
    %v781 = vld [vmem:[%s5 + $0x14] sm:$0xf]
    %v782 = vld [vmem:[%s5 + $0x18] sm:$0xf]
    %v783 = vld [vmem:[%s6] sm:$0x3]
    %v785 = vlaneseq
    %v786 = vshrl.u32 %v785, 7
    %v787 = vsub.s32 0, %v786
    %v788 = vrot.slane %v783, %v787
    %v789 = vlaneseq
    %v790 = vshrl.u32 %v789, 7
    %v791 = vsub.s32 1, %v790
    %v792 = vrot.slane %v783, %v791
    %v802 = vunpack.c.l.b16 %v776
    %v803 = vunpack.c.l.b16 %v777
    %v804 = vunpack.c.l.b16 %v778
    %v805 = vunpack.c.l.b16 %v779
    %v806 = vunpack.c.l.b16 %v780
    %v807 = vunpack.c.l.b16 %v781
    %v808 = vunpack.c.l.b16 %v782
    %v809 = vpack.c.b16 %v803, %v802
    %v810 = vpack.c.b16 %v805, %v804
    %v811 = vpack.c.b16 %v807, %v806
    %v812 = vpack.c.b16 %v808, %v808
    %vm813 = vcmask 785408
    %v815 = vsel %vm813, %v809, 0
    %v818 = vsel %vm813, %v810, 0
    %v821 = vsel %vm813, %v811, 0
    %v824 = vsel %vm813, %v812, 0
    %826 = vmatprep.subr.bf16.mxu0 %v765
    %827 = vmatpush1.bf16.msra.mxu0 %v764
    %828 = vmatprep.subr.bf16.mxu0 %v771
    %829 = vmatpush1.bf16.msra.mxu0 %v770
    %830 = vmatprep.subr.bf16.mxu0 %v767
    %831 = vmatpush1.bf16.msra.mxu0 %v766
    %832 = vmatprep.subr.bf16.mxu0 %v773
    %833 = vmatpush1.bf16.msra.mxu0 %v772
    %834 = vmatprep.subr.bf16.mxu0 %v769
    %835 = vmatpush1.bf16.msra.mxu0 %v768
    %836 = vmatprep.subr.bf16.mxu0 %v775
    %837 = vmatpush1.bf16.msra.mxu0 %v774
    %838 = vmatprep.subr.bf16.mxu0 0
    %839 = vmatpush1.bf16.msra.mxu0 0
    %840 = vmatprep.subr.bf16.mxu0 0
    %841 = vmatpush1.bf16.msra.mxu0 0
    %842 = vmatprep.subr.bf16.mxu0 0
    %843 = vmatpush1.bf16.msra.mxu0 0
    %844 = vmatprep.subr.bf16.mxu0 0
    %845 = vmatpush1.bf16.msra.mxu0 0
    %846 = vmatprep.subr.bf16.mxu0 0
    %847 = vmatpush1.bf16.msra.mxu0 0
    %848 = vmatprep.subr.bf16.mxu0 0
    %849 = vmatpush1.bf16.msra.mxu0 0
    %850 = vmatprep.subr.bf16.mxu0 0
    %851 = vmatpush1.bf16.msra.mxu0 0
    %852 = vmatprep.subr.bf16.mxu0 0
    %853 = vmatpush1.bf16.msra.mxu0 0
    %854 = vmatprep.subr.bf16.mxu0 0
    %855 = vmatpush1.bf16.msra.mxu0 0
    %856 = vmatprep.subr.bf16.mxu0 0
    %857 = vmatpush1.bf16.msra.mxu0 0
    %858 = vmatprep.mubr.bf16.mxu0 0
    %859 = vmatmul.mubr.bf16.gmra.mrb[0].mxu0 %v815
    %v860 = vpop.f32.mrb[0].mxu0
    %v861 = vadd.f32 %v788, %v860
    %v862 = vpop.f32.mrb[0].mxu0
    %v863 = vadd.f32 %v792, %v862
    %v864 = vpop.f32.mrb[0].mxu0
    %v865 = vadd.f32 %v788, %v864
    %v866 = vpop.f32.mrb[0].mxu0
    %v867 = vadd.f32 %v792, %v866
    %868 = vmatprep.mubr.bf16.mxu0 0
    %869 = vmatmul.mubr.bf16.gmra.mrb[0].mxu0 %v818
    %v870 = vpop.f32.mrb[0].mxu0
    %v871 = vadd.f32 %v788, %v870
    %v872 = vpop.f32.mrb[0].mxu0
    %v873 = vadd.f32 %v792, %v872
    %v874 = vpop.f32.mrb[0].mxu0
    %v875 = vadd.f32 %v788, %v874
    %v876 = vpop.f32.mrb[0].mxu0
    %v877 = vadd.f32 %v792, %v876
    %878 = vmatprep.mubr.bf16.mxu0 0
    %879 = vmatmul.mubr.bf16.gmra.mrb[0].mxu0 %v821
    %v880 = vpop.f32.mrb[0].mxu0
    %v881 = vadd.f32 %v788, %v880
    %v882 = vpop.f32.mrb[0].mxu0
    %v883 = vadd.f32 %v792, %v882
    %v884 = vpop.f32.mrb[0].mxu0
    %v885 = vadd.f32 %v788, %v884
    %v886 = vpop.f32.mrb[0].mxu0
    %v887 = vadd.f32 %v792, %v886
    %888 = vmatprep.mubr.bf16.mxu0 0
    %889 = vmatmul.mubr.bf16.gmra.mrb[0].mxu0 %v824
    %v890 = vpop.f32.mrb[0].mxu0
    %v891 = vadd.f32 %v788, %v890
    %v892 = vpop.f32.mrb[0].mxu0
    %v893 = vadd.f32 %v792, %v892
    %v894 = vpop.f32.mrb[0].mxu0
    %v895 = vpop.f32.mrb[0].mxu0
    %896 = vdwg.mxu0
    %v897 = vmax.f32 %v861, 0.0
    %v898 = vmax.f32 %v863, 0.0
    %v899 = vmax.f32 %v865, 0.0
    %v900 = vmax.f32 %v867, 0.0
    %v901 = vmax.f32 %v871, 0.0
    %v902 = vmax.f32 %v873, 0.0
    %v903 = vmax.f32 %v875, 0.0
    %v904 = vmax.f32 %v877, 0.0
    %v905 = vmax.f32 %v881, 0.0
    %v906 = vmax.f32 %v883, 0.0
    %v907 = vmax.f32 %v885, 0.0
    %v908 = vmax.f32 %v887, 0.0
    %v909 = vmax.f32 %v891, 0.0
    %v910 = vmax.f32 %v893, 0.0
    %v911 = vpack.c.bf16 %v899, %v897
    %v912 = vpack.c.bf16 %v900, %v898
    %v913 = vpack.c.bf16 %v903, %v901
    %v914 = vpack.c.bf16 %v904, %v902
    %v915 = vpack.c.bf16 %v907, %v905
    %v916 = vpack.c.bf16 %v908, %v906
    %v917 = vpack.c.bf16 %v909, %v909
    %v918 = vpack.c.bf16 %v910, %v910
    %v919 = vld [vmem:[#allocation4] sm:$0xff]
    %v920 = vld [vmem:[#allocation4 + $0x8] sm:$0xff]
    %v921 = vld [vmem:[#allocation4 + $0x10] sm:$0xff]
    %v922 = vld [vmem:[#allocation4 + $0x18] sm:$0xff]
    %v923 = vld [vmem:[#allocation4 + $0x20] sm:$0xff]
    %v924 = vld [vmem:[#allocation4 + $0x28] sm:$0xff]
    %v925 = vld [vmem:[#allocation4 + $0x30] sm:$0xff]
    %v926 = vld [vmem:[#allocation4 + $0x38] sm:$0xff]
    %v927 = vld [vmem:[#allocation4 + $0x40] sm:$0xff]
    %v928 = vld [vmem:[#allocation4 + $0x48] sm:$0xff]
    %v929 = vld [vmem:[#allocation4 + $0x50] sm:$0xff]
    %v930 = vld [vmem:[#allocation4 + $0x58] sm:$0xff]
    %v931 = vld [vmem:[#allocation4 + $0x60] sm:$0xff]
    %v932 = vld [vmem:[#allocation4 + $0x68] sm:$0xff]
    %v933 = vld [vmem:[#allocation4 + $0x70] sm:$0xff]
    %v934 = vld [vmem:[#allocation4 + $0x78] sm:$0xff]
    %v935 = vld [vmem:[#allocation4 + $0x80] sm:$0xff]
    %v936 = vld [vmem:[#allocation4 + $0x88] sm:$0xff]
    %v937 = vld [vmem:[#allocation4 + $0x90] sm:$0xff]
    %v938 = vld [vmem:[#allocation4 + $0x98] sm:$0xff]
    %v939 = vld [vmem:[#allocation4 + $0xa0] sm:$0xff]
    %v940 = vld [vmem:[#allocation4 + $0xa8] sm:$0xff]
    %v941 = vld [vmem:[#allocation4 + $0xb0] sm:$0xff]
    %v942 = vld [vmem:[#allocation4 + $0xb8] sm:$0xff]
    %v943 = vld [vmem:[#allocation4 + $0xc0] sm:$0xff]
    %v944 = vld [vmem:[#allocation4 + $0xc8] sm:$0xff]
    %v945 = vld [vmem:[#allocation4 + $0xd0] sm:$0xff]
    %v946 = vld [vmem:[#allocation4 + $0xd8] sm:$0xff]
    %v947 = vld [vmem:[#allocation4 + $0xe0] sm:$0xff]
    %v948 = vld [vmem:[#allocation4 + $0xe8] sm:$0xff]
    %v949 = vld [vmem:[#allocation4 + $0xf0] sm:$0xff]
    %v950 = vld [vmem:[#allocation4 + $0xf8] sm:$0xff]
    %v951 = vld [vmem:[#allocation4 + $0x100] sm:$0xff]
    %v952 = vld [vmem:[#allocation4 + $0x108] sm:$0xff]
    %v953 = vld [vmem:[#allocation4 + $0x110] sm:$0xff]
    %v954 = vld [vmem:[#allocation4 + $0x118] sm:$0xff]
    %v955 = vld [vmem:[#allocation4 + $0x120] sm:$0xff]
    %v956 = vld [vmem:[#allocation4 + $0x128] sm:$0xff]
    %v957 = vld [vmem:[#allocation4 + $0x130] sm:$0xff]
    %v958 = vld [vmem:[#allocation4 + $0x138] sm:$0xff]
    %v959 = vld [vmem:[#allocation4 + $0x140] sm:$0xff]
    %v960 = vld [vmem:[#allocation4 + $0x148] sm:$0xff]
    %v961 = vld [vmem:[#allocation4 + $0x150] sm:$0xff]
    %v962 = vld [vmem:[#allocation4 + $0x158] sm:$0xff]
    %v963 = vld [vmem:[#allocation4 + $0x160] sm:$0xff]
    %v964 = vld [vmem:[#allocation4 + $0x168] sm:$0xff]
    %v965 = vld [vmem:[#allocation4 + $0x170] sm:$0xff]
    %v966 = vld [vmem:[#allocation4 + $0x178] sm:$0xff]
    %v967 = vld [vmem:[#allocation4 + $0x180] sm:$0xff]
    %v968 = vld [vmem:[#allocation4 + $0x188] sm:$0xff]
    %v969 = vld [vmem:[#allocation4 + $0x190] sm:$0xff]
    %v970 = vld [vmem:[#allocation4 + $0x198] sm:$0xff]
    %v971 = vld [vmem:[#allocation4 + $0x1a0] sm:$0xff]
    %v972 = vld [vmem:[#allocation4 + $0x1a8] sm:$0xff]
    %v973 = vld [vmem:[#allocation4 + $0x1b0] sm:$0xff]
    %v974 = vld [vmem:[#allocation4 + $0x1b8] sm:$0xff]
    %v975 = vld [vmem:[#allocation4 + $0x1c0] sm:$0xff]
    %v976 = vld [vmem:[#allocation4 + $0x1c8] sm:$0xff]
    %v977 = vld [vmem:[#allocation4 + $0x1d0] sm:$0xff]
    %v978 = vld [vmem:[#allocation4 + $0x1d8] sm:$0xff]
    %v979 = vld [vmem:[#allocation4 + $0x1e0] sm:$0xff]
    %v980 = vld [vmem:[#allocation4 + $0x1e8] sm:$0xff]
    %v981 = vld [vmem:[#allocation4 + $0x1f0] sm:$0xff]
    %v982 = vld [vmem:[#allocation4 + $0x1f8] sm:$0xff]
    %v983 = vld [vmem:[#allocation4 + $0x200] sm:$0xff]
    %v984 = vld [vmem:[#allocation4 + $0x208] sm:$0xff]
    %v985 = vld [vmem:[#allocation4 + $0x210] sm:$0xff]
    %v986 = vld [vmem:[#allocation4 + $0x218] sm:$0xff]
    %v987 = vld [vmem:[#allocation4 + $0x220] sm:$0xff]
    %v988 = vld [vmem:[#allocation4 + $0x228] sm:$0xff]
    %v989 = vld [vmem:[#allocation4 + $0x230] sm:$0xff]
    %v990 = vld [vmem:[#allocation4 + $0x238] sm:$0xff]
    %v991 = vld [vmem:[#allocation4 + $0x240] sm:$0xff]
    %v992 = vld [vmem:[#allocation4 + $0x248] sm:$0xff]
    %v993 = vld [vmem:[#allocation4 + $0x250] sm:$0xff]
    %v994 = vld [vmem:[#allocation4 + $0x258] sm:$0xff]
    %v995 = vld [vmem:[#allocation4 + $0x260] sm:$0xff]
    %v996 = vld [vmem:[#allocation4 + $0x268] sm:$0xff]
    %v997 = vld [vmem:[#allocation4 + $0x270] sm:$0xff]
    %v998 = vld [vmem:[#allocation4 + $0x278] sm:$0xff]
    %v999 = vld [vmem:[#allocation4 + $0x280] sm:$0xff]
    %v1000 = vld [vmem:[#allocation4 + $0x288] sm:$0xff]
    %v1001 = vld [vmem:[#allocation4 + $0x290] sm:$0xff]
    %v1002 = vld [vmem:[#allocation4 + $0x298] sm:$0xff]
    %v1003 = vld [vmem:[#allocation4 + $0x2a0] sm:$0xff]
    %v1004 = vld [vmem:[#allocation4 + $0x2a8] sm:$0xff]
    %v1005 = vld [vmem:[#allocation4 + $0x2b0] sm:$0xff]
    %v1006 = vld [vmem:[#allocation4 + $0x2b8] sm:$0xff]
    %v1007 = vld [vmem:[#allocation4 + $0x2c0] sm:$0xff]
    %v1008 = vld [vmem:[#allocation4 + $0x2c8] sm:$0xff]
    %v1009 = vld [vmem:[#allocation4 + $0x2d0] sm:$0xff]
    %v1010 = vld [vmem:[#allocation4 + $0x2d8] sm:$0xff]
    %v1011 = vld [vmem:[#allocation4 + $0x2e0] sm:$0xff]
    %v1012 = vld [vmem:[#allocation4 + $0x2e8] sm:$0xff]
    %v1013 = vld [vmem:[#allocation4 + $0x2f0] sm:$0xff]
    %v1014 = vld [vmem:[#allocation4 + $0x2f8] sm:$0xff]
    %v1015 = vld [vmem:[#allocation4 + $0x300] sm:$0xff]
    %v1016 = vld [vmem:[#allocation4 + $0x308] sm:$0xff]
    %v1017 = vld [vmem:[#allocation4 + $0x310] sm:$0xff]
    %v1018 = vld [vmem:[#allocation4 + $0x318] sm:$0xff]
    %v1019 = vld [vmem:[#allocation4 + $0x320] sm:$0xff]
    %v1020 = vld [vmem:[#allocation4 + $0x328] sm:$0xff]
    %v1021 = vld [vmem:[#allocation4 + $0x330] sm:$0xff]
    %v1022 = vld [vmem:[#allocation4 + $0x338] sm:$0xff]
    %v1023 = vld [vmem:[#allocation4 + $0x340] sm:$0xff]
    %v1024 = vld [vmem:[#allocation4 + $0x348] sm:$0xff]
    %v1025 = vld [vmem:[#allocation4 + $0x350] sm:$0xff]
    %v1026 = vld [vmem:[#allocation4 + $0x358] sm:$0xff]
    %v1027 = vld [vmem:[#allocation4 + $0x360] sm:$0xff]
    %v1028 = vld [vmem:[#allocation4 + $0x368] sm:$0xff]
    %v1029 = vld [vmem:[#allocation4 + $0x370] sm:$0xff]
    %v1030 = vld [vmem:[#allocation4 + $0x378] sm:$0xff]
    %v1031 = vld [vmem:[#allocation4 + $0x380] sm:$0xff]
    %v1032 = vld [vmem:[#allocation4 + $0x388] sm:$0xff]
    %v1033 = vld [vmem:[#allocation4 + $0x390] sm:$0xff]
    %v1034 = vld [vmem:[#allocation4 + $0x398] sm:$0xff]
    %v1035 = vld [vmem:[#allocation4 + $0x3a0] sm:$0xff]
    %v1036 = vld [vmem:[#allocation4 + $0x3a8] sm:$0xff]
    %v1037 = vld [vmem:[#allocation4 + $0x3b0] sm:$0xff]
    %v1038 = vld [vmem:[#allocation4 + $0x3b8] sm:$0xff]
    %v1039 = vld [vmem:[#allocation4 + $0x3c0] sm:$0xff]
    %v1040 = vld [vmem:[#allocation4 + $0x3c8] sm:$0xff]
    %v1041 = vld [vmem:[#allocation4 + $0x3d0] sm:$0xff]
    %v1042 = vld [vmem:[#allocation4 + $0x3d8] sm:$0xff]
    %v1043 = vld [vmem:[#allocation4 + $0x3e0] sm:$0xff]
    %v1044 = vld [vmem:[#allocation4 + $0x3e8] sm:$0xff]
    %v1045 = vld [vmem:[#allocation4 + $0x3f0] sm:$0xff]
    %v1046 = vld [vmem:[#allocation4 + $0x3f8] sm:$0xff]
    %v1047 = vld [vmem:[#allocation4 + $0x400] sm:$0xff]
    %v1048 = vld [vmem:[#allocation4 + $0x408] sm:$0xff]
    %v1049 = vld [vmem:[#allocation4 + $0x410] sm:$0xff]
    %v1050 = vld [vmem:[#allocation4 + $0x418] sm:$0xff]
    %v1051 = vld [vmem:[#allocation4 + $0x420] sm:$0xff]
    %v1052 = vld [vmem:[#allocation4 + $0x428] sm:$0xff]
    %v1053 = vld [vmem:[#allocation4 + $0x430] sm:$0xff]
    %v1054 = vld [vmem:[#allocation4 + $0x438] sm:$0xff]
    %v1055 = vld [vmem:[#allocation4 + $0x440] sm:$0xff]
    %v1056 = vld [vmem:[#allocation4 + $0x448] sm:$0xff]
    %v1057 = vld [vmem:[#allocation4 + $0x450] sm:$0xff]
    %v1058 = vld [vmem:[#allocation4 + $0x458] sm:$0xff]
    %v1059 = vld [vmem:[#allocation4 + $0x460] sm:$0xff]
    %v1060 = vld [vmem:[#allocation4 + $0x468] sm:$0xff]
    %v1061 = vld [vmem:[#allocation4 + $0x470] sm:$0xff]
    %v1062 = vld [vmem:[#allocation4 + $0x478] sm:$0xff]
    %v1063 = vld [vmem:[#allocation4 + $0x480] sm:$0xff]
    %v1064 = vld [vmem:[#allocation4 + $0x488] sm:$0xff]
    %v1065 = vld [vmem:[#allocation4 + $0x490] sm:$0xff]
    %v1066 = vld [vmem:[#allocation4 + $0x498] sm:$0xff]
    %v1067 = vld [vmem:[#allocation4 + $0x4a0] sm:$0xff]
    %v1068 = vld [vmem:[#allocation4 + $0x4a8] sm:$0xff]
    %v1069 = vld [vmem:[#allocation4 + $0x4b0] sm:$0xff]
    %v1070 = vld [vmem:[#allocation4 + $0x4b8] sm:$0xff]
    %v1071 = vld [vmem:[#allocation4 + $0x4c0] sm:$0xff]
    %v1072 = vld [vmem:[#allocation4 + $0x4c8] sm:$0xff]
    %v1073 = vld [vmem:[#allocation4 + $0x4d0] sm:$0xff]
    %v1074 = vld [vmem:[#allocation4 + $0x4d8] sm:$0xff]
    %v1075 = vld [vmem:[#allocation4 + $0x4e0] sm:$0xff]
    %v1076 = vld [vmem:[#allocation4 + $0x4e8] sm:$0xff]
    %v1077 = vld [vmem:[#allocation4 + $0x4f0] sm:$0xff]
    %v1078 = vld [vmem:[#allocation4 + $0x4f8] sm:$0xff]
    %v1079 = vld [vmem:[#allocation4 + $0x500] sm:$0xff]
    %v1080 = vld [vmem:[#allocation4 + $0x508] sm:$0xff]
    %v1081 = vld [vmem:[#allocation4 + $0x510] sm:$0xff]
    %v1082 = vld [vmem:[#allocation4 + $0x518] sm:$0xff]
    %v1083 = vld [vmem:[#allocation4 + $0x520] sm:$0xff]
    %v1084 = vld [vmem:[#allocation4 + $0x528] sm:$0xff]
    %v1085 = vld [vmem:[#allocation4 + $0x530] sm:$0xff]
    %v1086 = vld [vmem:[#allocation4 + $0x538] sm:$0xff]
    %v1255 = vunpack.c.l.b16 %v919
    %v1256 = vunpack.c.h.b16 %v919
    %v1257 = vunpack.c.l.b16 %v920
    %v1258 = vunpack.c.h.b16 %v920
    %v1259 = vunpack.c.l.b16 %v921
    %v1260 = vunpack.c.h.b16 %v921
    %v1261 = vunpack.c.l.b16 %v922
    %v1262 = vunpack.c.h.b16 %v922
    %v1263 = vunpack.c.l.b16 %v923
    %v1264 = vunpack.c.h.b16 %v923
    %v1265 = vunpack.c.l.b16 %v924
    %v1266 = vunpack.c.h.b16 %v924
    %v1267 = vunpack.c.l.b16 %v925
    %v1268 = vunpack.c.h.b16 %v925
    %v1269 = vunpack.c.l.b16 %v926
    %v1270 = vunpack.c.h.b16 %v926
    %v1271 = vunpack.c.l.b16 %v927
    %v1272 = vunpack.c.h.b16 %v927
    %v1273 = vunpack.c.l.b16 %v928
    %v1274 = vunpack.c.h.b16 %v928
    %v1275 = vunpack.c.l.b16 %v929
    %v1276 = vunpack.c.h.b16 %v929
    %v1277 = vunpack.c.l.b16 %v930
    %v1278 = vunpack.c.h.b16 %v930
    %v1279 = vunpack.c.l.b16 %v931
    %v1280 = vunpack.c.h.b16 %v931
    %v1281 = vunpack.c.l.b16 %v932
    %v1282 = vunpack.c.h.b16 %v932
    %v1283 = vunpack.c.l.b16 %v933
    %v1284 = vunpack.c.h.b16 %v933
    %v1285 = vunpack.c.l.b16 %v934
    %v1286 = vunpack.c.h.b16 %v934
    %v1287 = vunpack.c.l.b16 %v935
    %v1288 = vunpack.c.h.b16 %v935
    %v1289 = vunpack.c.l.b16 %v936
    %v1290 = vunpack.c.h.b16 %v936
    %v1291 = vunpack.c.l.b16 %v937
    %v1292 = vunpack.c.h.b16 %v937
    %v1293 = vunpack.c.l.b16 %v938
    %v1294 = vunpack.c.h.b16 %v938
    %v1295 = vunpack.c.l.b16 %v939
    %v1296 = vunpack.c.h.b16 %v939
    %v1297 = vunpack.c.l.b16 %v940
    %v1298 = vunpack.c.h.b16 %v940
    %v1299 = vunpack.c.l.b16 %v941
    %v1300 = vunpack.c.h.b16 %v941
    %v1301 = vunpack.c.l.b16 %v942
    %v1302 = vunpack.c.h.b16 %v942
    %v1303 = vunpack.c.l.b16 %v943
    %v1304 = vunpack.c.h.b16 %v943
    %v1305 = vunpack.c.l.b16 %v944
    %v1306 = vunpack.c.h.b16 %v944
    %v1307 = vunpack.c.l.b16 %v945
    %v1308 = vunpack.c.h.b16 %v945
    %v1309 = vunpack.c.l.b16 %v946
    %v1310 = vunpack.c.h.b16 %v946
    %v1311 = vunpack.c.l.b16 %v947
    %v1312 = vunpack.c.h.b16 %v947
    %v1313 = vunpack.c.l.b16 %v948
    %v1314 = vunpack.c.h.b16 %v948
    %v1315 = vunpack.c.l.b16 %v949
    %v1316 = vunpack.c.h.b16 %v949
    %v1317 = vunpack.c.l.b16 %v950
    %v1318 = vunpack.c.h.b16 %v950
    %v1319 = vunpack.c.l.b16 %v951
    %v1320 = vunpack.c.h.b16 %v951
    %v1321 = vunpack.c.l.b16 %v952
    %v1322 = vunpack.c.h.b16 %v952
    %v1323 = vunpack.c.l.b16 %v953
    %v1324 = vunpack.c.h.b16 %v953
    %v1325 = vunpack.c.l.b16 %v954
    %v1326 = vunpack.c.h.b16 %v954
    %v1327 = vunpack.c.l.b16 %v955
    %v1328 = vunpack.c.h.b16 %v955
    %v1329 = vunpack.c.l.b16 %v956
    %v1330 = vunpack.c.h.b16 %v956
    %v1331 = vunpack.c.l.b16 %v957
    %v1332 = vunpack.c.h.b16 %v957
    %v1333 = vunpack.c.l.b16 %v958
    %v1334 = vunpack.c.h.b16 %v958
    %v1335 = vunpack.c.l.b16 %v959
    %v1336 = vunpack.c.h.b16 %v959
    %v1337 = vunpack.c.l.b16 %v960
    %v1338 = vunpack.c.h.b16 %v960
    %v1339 = vunpack.c.l.b16 %v961
    %v1340 = vunpack.c.h.b16 %v961
    %v1341 = vunpack.c.l.b16 %v962
    %v1342 = vunpack.c.h.b16 %v962
    %v1343 = vunpack.c.l.b16 %v963
    %v1344 = vunpack.c.h.b16 %v963
    %v1345 = vunpack.c.l.b16 %v964
    %v1346 = vunpack.c.h.b16 %v964
    %v1347 = vunpack.c.l.b16 %v965
    %v1348 = vunpack.c.h.b16 %v965
    %v1349 = vunpack.c.l.b16 %v966
    %v1350 = vunpack.c.h.b16 %v966
    %v1351 = vunpack.c.l.b16 %v967
    %v1352 = vunpack.c.h.b16 %v967
    %v1353 = vunpack.c.l.b16 %v968
    %v1354 = vunpack.c.h.b16 %v968
    %v1355 = vunpack.c.l.b16 %v969
    %v1356 = vunpack.c.h.b16 %v969
    %v1357 = vunpack.c.l.b16 %v970
    %v1358 = vunpack.c.h.b16 %v970
    %v1359 = vunpack.c.l.b16 %v971
    %v1360 = vunpack.c.h.b16 %v971
    %v1361 = vunpack.c.l.b16 %v972
    %v1362 = vunpack.c.h.b16 %v972
    %v1363 = vunpack.c.l.b16 %v973
    %v1364 = vunpack.c.h.b16 %v973
    %v1365 = vunpack.c.l.b16 %v974
    %v1366 = vunpack.c.h.b16 %v974
    %v1367 = vunpack.c.l.b16 %v975
    %v1368 = vunpack.c.h.b16 %v975
    %v1369 = vunpack.c.l.b16 %v976
    %v1370 = vunpack.c.h.b16 %v976
    %v1371 = vunpack.c.l.b16 %v977
    %v1372 = vunpack.c.h.b16 %v977
    %v1373 = vunpack.c.l.b16 %v978
    %v1374 = vunpack.c.h.b16 %v978
    %v1375 = vunpack.c.l.b16 %v979
    %v1376 = vunpack.c.h.b16 %v979
    %v1377 = vunpack.c.l.b16 %v980
    %v1378 = vunpack.c.h.b16 %v980
    %v1379 = vunpack.c.l.b16 %v981
    %v1380 = vunpack.c.h.b16 %v981
    %v1381 = vunpack.c.l.b16 %v982
    %v1382 = vunpack.c.h.b16 %v982
    %v1383 = vunpack.c.l.b16 %v983
    %v1384 = vunpack.c.h.b16 %v983
    %v1385 = vunpack.c.l.b16 %v984
    %v1386 = vunpack.c.h.b16 %v984
    %v1387 = vunpack.c.l.b16 %v985
    %v1388 = vunpack.c.h.b16 %v985
    %v1389 = vunpack.c.l.b16 %v986
    %v1390 = vunpack.c.h.b16 %v986
    %v1391 = vunpack.c.l.b16 %v987
    %v1392 = vunpack.c.h.b16 %v987
    %v1393 = vunpack.c.l.b16 %v988
    %v1394 = vunpack.c.h.b16 %v988
    %v1395 = vunpack.c.l.b16 %v989
    %v1396 = vunpack.c.h.b16 %v989
    %v1397 = vunpack.c.l.b16 %v990
    %v1398 = vunpack.c.h.b16 %v990
    %v1399 = vunpack.c.l.b16 %v991
    %v1400 = vunpack.c.h.b16 %v991
    %v1401 = vunpack.c.l.b16 %v992
    %v1402 = vunpack.c.h.b16 %v992
    %v1403 = vunpack.c.l.b16 %v993
    %v1404 = vunpack.c.h.b16 %v993
    %v1405 = vunpack.c.l.b16 %v994
    %v1406 = vunpack.c.h.b16 %v994
    %v1407 = vunpack.c.l.b16 %v995
    %v1408 = vunpack.c.h.b16 %v995
    %v1409 = vunpack.c.l.b16 %v996
    %v1410 = vunpack.c.h.b16 %v996
    %v1411 = vunpack.c.l.b16 %v997
    %v1412 = vunpack.c.h.b16 %v997
    %v1413 = vunpack.c.l.b16 %v998
    %v1414 = vunpack.c.h.b16 %v998
    %v1415 = vunpack.c.l.b16 %v999
    %v1416 = vunpack.c.h.b16 %v999
    %v1417 = vunpack.c.l.b16 %v1000
    %v1418 = vunpack.c.h.b16 %v1000
    %v1419 = vunpack.c.l.b16 %v1001
    %v1420 = vunpack.c.h.b16 %v1001
    %v1421 = vunpack.c.l.b16 %v1002
    %v1422 = vunpack.c.h.b16 %v1002
    %v1423 = vunpack.c.l.b16 %v1003
    %v1424 = vunpack.c.h.b16 %v1003
    %v1425 = vunpack.c.l.b16 %v1004
    %v1426 = vunpack.c.h.b16 %v1004
    %v1427 = vunpack.c.l.b16 %v1005
    %v1428 = vunpack.c.h.b16 %v1005
    %v1429 = vunpack.c.l.b16 %v1006
    %v1430 = vunpack.c.h.b16 %v1006
    %v1431 = vunpack.c.l.b16 %v1007
    %v1432 = vunpack.c.h.b16 %v1007
    %v1433 = vunpack.c.l.b16 %v1008
    %v1434 = vunpack.c.h.b16 %v1008
    %v1435 = vunpack.c.l.b16 %v1009
    %v1436 = vunpack.c.h.b16 %v1009
    %v1437 = vunpack.c.l.b16 %v1010
    %v1438 = vunpack.c.h.b16 %v1010
    %v1439 = vunpack.c.l.b16 %v1011
    %v1440 = vunpack.c.h.b16 %v1011
    %v1441 = vunpack.c.l.b16 %v1012
    %v1442 = vunpack.c.h.b16 %v1012
    %v1443 = vunpack.c.l.b16 %v1013
    %v1444 = vunpack.c.h.b16 %v1013
    %v1445 = vunpack.c.l.b16 %v1014
    %v1446 = vunpack.c.h.b16 %v1014
    %v1447 = vunpack.c.l.b16 %v1015
    %v1448 = vunpack.c.h.b16 %v1015
    %v1449 = vunpack.c.l.b16 %v1016
    %v1450 = vunpack.c.h.b16 %v1016
    %v1451 = vunpack.c.l.b16 %v1017
    %v1452 = vunpack.c.h.b16 %v1017
    %v1453 = vunpack.c.l.b16 %v1018
    %v1454 = vunpack.c.h.b16 %v1018
    %v1455 = vunpack.c.l.b16 %v1019
    %v1456 = vunpack.c.h.b16 %v1019
    %v1457 = vunpack.c.l.b16 %v1020
    %v1458 = vunpack.c.h.b16 %v1020
    %v1459 = vunpack.c.l.b16 %v1021
    %v1460 = vunpack.c.h.b16 %v1021
    %v1461 = vunpack.c.l.b16 %v1022
    %v1462 = vunpack.c.h.b16 %v1022
    %v1463 = vunpack.c.l.b16 %v1023
    %v1464 = vunpack.c.h.b16 %v1023
    %v1465 = vunpack.c.l.b16 %v1024
    %v1466 = vunpack.c.h.b16 %v1024
    %v1467 = vunpack.c.l.b16 %v1025
    %v1468 = vunpack.c.h.b16 %v1025
    %v1469 = vunpack.c.l.b16 %v1026
    %v1470 = vunpack.c.h.b16 %v1026
    %v1471 = vunpack.c.l.b16 %v1027
    %v1472 = vunpack.c.h.b16 %v1027
    %v1473 = vunpack.c.l.b16 %v1028
    %v1474 = vunpack.c.h.b16 %v1028
    %v1475 = vunpack.c.l.b16 %v1029
    %v1476 = vunpack.c.h.b16 %v1029
    %v1477 = vunpack.c.l.b16 %v1030
    %v1478 = vunpack.c.h.b16 %v1030
    %v1479 = vunpack.c.l.b16 %v1031
    %v1480 = vunpack.c.h.b16 %v1031
    %v1481 = vunpack.c.l.b16 %v1032
    %v1482 = vunpack.c.h.b16 %v1032
    %v1483 = vunpack.c.l.b16 %v1033
    %v1484 = vunpack.c.h.b16 %v1033
    %v1485 = vunpack.c.l.b16 %v1034
    %v1486 = vunpack.c.h.b16 %v1034
    %v1487 = vunpack.c.l.b16 %v1035
    %v1488 = vunpack.c.h.b16 %v1035
    %v1489 = vunpack.c.l.b16 %v1036
    %v1490 = vunpack.c.h.b16 %v1036
    %v1491 = vunpack.c.l.b16 %v1037
    %v1492 = vunpack.c.h.b16 %v1037
    %v1493 = vunpack.c.l.b16 %v1038
    %v1494 = vunpack.c.h.b16 %v1038
    %v1495 = vunpack.c.l.b16 %v1039
    %v1496 = vunpack.c.h.b16 %v1039
    %v1497 = vunpack.c.l.b16 %v1040
    %v1498 = vunpack.c.h.b16 %v1040
    %v1499 = vunpack.c.l.b16 %v1041
    %v1500 = vunpack.c.h.b16 %v1041
    %v1501 = vunpack.c.l.b16 %v1042
    %v1502 = vunpack.c.h.b16 %v1042
    %v1503 = vunpack.c.l.b16 %v1043
    %v1504 = vunpack.c.h.b16 %v1043
    %v1505 = vunpack.c.l.b16 %v1044
    %v1506 = vunpack.c.h.b16 %v1044
    %v1507 = vunpack.c.l.b16 %v1045
    %v1508 = vunpack.c.h.b16 %v1045
    %v1509 = vunpack.c.l.b16 %v1046
    %v1510 = vunpack.c.h.b16 %v1046
    %v1511 = vunpack.c.l.b16 %v1047
    %v1512 = vunpack.c.h.b16 %v1047
    %v1513 = vunpack.c.l.b16 %v1048
    %v1514 = vunpack.c.h.b16 %v1048
    %v1515 = vunpack.c.l.b16 %v1049
    %v1516 = vunpack.c.h.b16 %v1049
    %v1517 = vunpack.c.l.b16 %v1050
    %v1518 = vunpack.c.h.b16 %v1050
    %v1519 = vunpack.c.l.b16 %v1051
    %v1520 = vunpack.c.h.b16 %v1051
    %v1521 = vunpack.c.l.b16 %v1052
    %v1522 = vunpack.c.h.b16 %v1052
    %v1523 = vunpack.c.l.b16 %v1053
    %v1524 = vunpack.c.h.b16 %v1053
    %v1525 = vunpack.c.l.b16 %v1054
    %v1526 = vunpack.c.h.b16 %v1054
    %v1527 = vunpack.c.l.b16 %v1055
    %v1528 = vunpack.c.h.b16 %v1055
    %v1529 = vunpack.c.l.b16 %v1056
    %v1530 = vunpack.c.h.b16 %v1056
    %v1531 = vunpack.c.l.b16 %v1057
    %v1532 = vunpack.c.h.b16 %v1057
    %v1533 = vunpack.c.l.b16 %v1058
    %v1534 = vunpack.c.h.b16 %v1058
    %v1535 = vunpack.c.l.b16 %v1059
    %v1536 = vunpack.c.h.b16 %v1059
    %v1537 = vunpack.c.l.b16 %v1060
    %v1538 = vunpack.c.h.b16 %v1060
    %v1539 = vunpack.c.l.b16 %v1061
    %v1540 = vunpack.c.h.b16 %v1061
    %v1541 = vunpack.c.l.b16 %v1062
    %v1542 = vunpack.c.h.b16 %v1062
    %v1543 = vunpack.c.l.b16 %v1063
    %v1544 = vunpack.c.h.b16 %v1063
    %v1545 = vunpack.c.l.b16 %v1064
    %v1546 = vunpack.c.h.b16 %v1064
    %v1547 = vunpack.c.l.b16 %v1065
    %v1548 = vunpack.c.h.b16 %v1065
    %v1549 = vunpack.c.l.b16 %v1066
    %v1550 = vunpack.c.h.b16 %v1066
    %v1551 = vunpack.c.l.b16 %v1067
    %v1552 = vunpack.c.h.b16 %v1067
    %v1553 = vunpack.c.l.b16 %v1068
    %v1554 = vunpack.c.h.b16 %v1068
    %v1555 = vunpack.c.l.b16 %v1069
    %v1556 = vunpack.c.h.b16 %v1069
    %v1557 = vunpack.c.l.b16 %v1070
    %v1558 = vunpack.c.h.b16 %v1070
    %v1559 = vunpack.c.l.b16 %v1071
    %v1560 = vunpack.c.h.b16 %v1071
    %v1561 = vunpack.c.l.b16 %v1072
    %v1562 = vunpack.c.h.b16 %v1072
    %v1563 = vunpack.c.l.b16 %v1073
    %v1564 = vunpack.c.h.b16 %v1073
    %v1565 = vunpack.c.l.b16 %v1074
    %v1566 = vunpack.c.h.b16 %v1074
    %v1567 = vunpack.c.l.b16 %v1075
    %v1568 = vunpack.c.h.b16 %v1075
    %v1569 = vunpack.c.l.b16 %v1076
    %v1570 = vunpack.c.h.b16 %v1076
    %v1571 = vunpack.c.l.b16 %v1077
    %v1572 = vunpack.c.h.b16 %v1077
    %v1573 = vunpack.c.l.b16 %v1078
    %v1574 = vunpack.c.h.b16 %v1078
    %v1575 = vunpack.c.l.b16 %v1079
    %v1576 = vunpack.c.h.b16 %v1079
    %v1577 = vunpack.c.l.b16 %v1080
    %v1578 = vunpack.c.h.b16 %v1080
    %v1579 = vunpack.c.l.b16 %v1081
    %v1580 = vunpack.c.h.b16 %v1081
    %v1581 = vunpack.c.l.b16 %v1082
    %v1582 = vunpack.c.h.b16 %v1082
    %v1583 = vunpack.c.l.b16 %v1083
    %v1584 = vunpack.c.h.b16 %v1083
    %v1585 = vunpack.c.l.b16 %v1084
    %v1586 = vunpack.c.h.b16 %v1084
    %v1587 = vunpack.c.l.b16 %v1085
    %v1588 = vunpack.c.h.b16 %v1085
    %v1589 = vunpack.c.l.b16 %v1086
    %v1590 = vunpack.c.h.b16 %v1086
    %v1591 = vpack.c.b16 %v1267, %v1255
    %v1592 = vpack.c.b16 %v1268, %v1256
    %v1593 = vpack.c.b16 %v1269, %v1257
    %v1594 = vpack.c.b16 %v1270, %v1258
    %v1595 = vpack.c.b16 %v1271, %v1259
    %v1596 = vpack.c.b16 %v1272, %v1260
    %v1597 = vpack.c.b16 %v1273, %v1261
    %v1598 = vpack.c.b16 %v1274, %v1262
    %v1599 = vpack.c.b16 %v1275, %v1263
    %v1600 = vpack.c.b16 %v1276, %v1264
    %v1601 = vpack.c.b16 %v1277, %v1265
    %v1602 = vpack.c.b16 %v1278, %v1266
    %v1603 = vpack.c.b16 %v1291, %v1279
    %v1604 = vpack.c.b16 %v1292, %v1280
    %v1605 = vpack.c.b16 %v1293, %v1281
    %v1606 = vpack.c.b16 %v1294, %v1282
    %v1607 = vpack.c.b16 %v1295, %v1283
    %v1608 = vpack.c.b16 %v1296, %v1284
    %v1609 = vpack.c.b16 %v1297, %v1285
    %v1610 = vpack.c.b16 %v1298, %v1286
    %v1611 = vpack.c.b16 %v1299, %v1287
    %v1612 = vpack.c.b16 %v1300, %v1288
    %v1613 = vpack.c.b16 %v1301, %v1289
    %v1614 = vpack.c.b16 %v1302, %v1290
    %v1615 = vpack.c.b16 %v1315, %v1303
    %v1616 = vpack.c.b16 %v1316, %v1304
    %v1617 = vpack.c.b16 %v1317, %v1305
    %v1618 = vpack.c.b16 %v1318, %v1306
    %v1619 = vpack.c.b16 %v1319, %v1307
    %v1620 = vpack.c.b16 %v1320, %v1308
    %v1621 = vpack.c.b16 %v1321, %v1309
    %v1622 = vpack.c.b16 %v1322, %v1310
    %v1623 = vpack.c.b16 %v1323, %v1311
    %v1624 = vpack.c.b16 %v1324, %v1312
    %v1625 = vpack.c.b16 %v1325, %v1313
    %v1626 = vpack.c.b16 %v1326, %v1314
    %v1627 = vpack.c.b16 %v1339, %v1327
    %v1628 = vpack.c.b16 %v1340, %v1328
    %v1629 = vpack.c.b16 %v1341, %v1329
    %v1630 = vpack.c.b16 %v1342, %v1330
    %v1631 = vpack.c.b16 %v1343, %v1331
    %v1632 = vpack.c.b16 %v1344, %v1332
    %v1633 = vpack.c.b16 %v1345, %v1333
    %v1634 = vpack.c.b16 %v1346, %v1334
    %v1635 = vpack.c.b16 %v1347, %v1335
    %v1636 = vpack.c.b16 %v1348, %v1336
    %v1637 = vpack.c.b16 %v1349, %v1337
    %v1638 = vpack.c.b16 %v1350, %v1338
    %v1639 = vpack.c.b16 %v1363, %v1351
    %v1640 = vpack.c.b16 %v1364, %v1352
    %v1641 = vpack.c.b16 %v1365, %v1353
    %v1642 = vpack.c.b16 %v1366, %v1354
    %v1643 = vpack.c.b16 %v1367, %v1355
    %v1644 = vpack.c.b16 %v1368, %v1356
    %v1645 = vpack.c.b16 %v1369, %v1357
    %v1646 = vpack.c.b16 %v1370, %v1358
    %v1647 = vpack.c.b16 %v1371, %v1359
    %v1648 = vpack.c.b16 %v1372, %v1360
    %v1649 = vpack.c.b16 %v1373, %v1361
    %v1650 = vpack.c.b16 %v1374, %v1362
    %v1651 = vpack.c.b16 %v1387, %v1375
    %v1652 = vpack.c.b16 %v1388, %v1376
    %v1653 = vpack.c.b16 %v1389, %v1377
    %v1654 = vpack.c.b16 %v1390, %v1378
    %v1655 = vpack.c.b16 %v1391, %v1379
    %v1656 = vpack.c.b16 %v1392, %v1380
    %v1657 = vpack.c.b16 %v1393, %v1381
    %v1658 = vpack.c.b16 %v1394, %v1382
    %v1659 = vpack.c.b16 %v1395, %v1383
    %v1660 = vpack.c.b16 %v1396, %v1384
    %v1661 = vpack.c.b16 %v1397, %v1385
    %v1662 = vpack.c.b16 %v1398, %v1386
    %v1663 = vpack.c.b16 %v1411, %v1399
    %v1664 = vpack.c.b16 %v1412, %v1400
    %v1665 = vpack.c.b16 %v1413, %v1401
    %v1666 = vpack.c.b16 %v1414, %v1402
    %v1667 = vpack.c.b16 %v1415, %v1403
    %v1668 = vpack.c.b16 %v1416, %v1404
    %v1669 = vpack.c.b16 %v1417, %v1405
    %v1670 = vpack.c.b16 %v1418, %v1406
    %v1671 = vpack.c.b16 %v1419, %v1407
    %v1672 = vpack.c.b16 %v1420, %v1408
    %v1673 = vpack.c.b16 %v1421, %v1409
    %v1674 = vpack.c.b16 %v1422, %v1410
    %v1675 = vpack.c.b16 %v1435, %v1423
    %v1676 = vpack.c.b16 %v1436, %v1424
    %v1677 = vpack.c.b16 %v1437, %v1425
    %v1678 = vpack.c.b16 %v1438, %v1426
    %v1679 = vpack.c.b16 %v1439, %v1427
    %v1680 = vpack.c.b16 %v1440, %v1428
    %v1681 = vpack.c.b16 %v1441, %v1429
    %v1682 = vpack.c.b16 %v1442, %v1430
    %v1683 = vpack.c.b16 %v1443, %v1431
    %v1684 = vpack.c.b16 %v1444, %v1432
    %v1685 = vpack.c.b16 %v1445, %v1433
    %v1686 = vpack.c.b16 %v1446, %v1434
    %v1687 = vpack.c.b16 %v1459, %v1447
    %v1688 = vpack.c.b16 %v1460, %v1448
    %v1689 = vpack.c.b16 %v1461, %v1449
    %v1690 = vpack.c.b16 %v1462, %v1450
    %v1691 = vpack.c.b16 %v1463, %v1451
    %v1692 = vpack.c.b16 %v1464, %v1452
    %v1693 = vpack.c.b16 %v1465, %v1453
    %v1694 = vpack.c.b16 %v1466, %v1454
    %v1695 = vpack.c.b16 %v1467, %v1455
    %v1696 = vpack.c.b16 %v1468, %v1456
    %v1697 = vpack.c.b16 %v1469, %v1457
    %v1698 = vpack.c.b16 %v1470, %v1458
    %v1699 = vpack.c.b16 %v1483, %v1471
    %v1700 = vpack.c.b16 %v1484, %v1472
    %v1701 = vpack.c.b16 %v1485, %v1473
    %v1702 = vpack.c.b16 %v1486, %v1474
    %v1703 = vpack.c.b16 %v1487, %v1475
    %v1704 = vpack.c.b16 %v1488, %v1476
    %v1705 = vpack.c.b16 %v1489, %v1477
    %v1706 = vpack.c.b16 %v1490, %v1478
    %v1707 = vpack.c.b16 %v1491, %v1479
    %v1708 = vpack.c.b16 %v1492, %v1480
    %v1709 = vpack.c.b16 %v1493, %v1481
    %v1710 = vpack.c.b16 %v1494, %v1482
    %v1711 = vpack.c.b16 %v1507, %v1495
    %v1712 = vpack.c.b16 %v1508, %v1496
    %v1713 = vpack.c.b16 %v1509, %v1497
    %v1714 = vpack.c.b16 %v1510, %v1498
    %v1715 = vpack.c.b16 %v1511, %v1499
    %v1716 = vpack.c.b16 %v1512, %v1500
    %v1717 = vpack.c.b16 %v1513, %v1501
    %v1718 = vpack.c.b16 %v1514, %v1502
    %v1719 = vpack.c.b16 %v1515, %v1503
    %v1720 = vpack.c.b16 %v1516, %v1504
    %v1721 = vpack.c.b16 %v1517, %v1505
    %v1722 = vpack.c.b16 %v1518, %v1506
    %v1723 = vpack.c.b16 %v1531, %v1519
    %v1724 = vpack.c.b16 %v1532, %v1520
    %v1725 = vpack.c.b16 %v1533, %v1521
    %v1726 = vpack.c.b16 %v1534, %v1522
    %v1727 = vpack.c.b16 %v1535, %v1523
    %v1728 = vpack.c.b16 %v1536, %v1524
    %v1729 = vpack.c.b16 %v1537, %v1525
    %v1730 = vpack.c.b16 %v1538, %v1526
    %v1731 = vpack.c.b16 %v1539, %v1527
    %v1732 = vpack.c.b16 %v1540, %v1528
    %v1733 = vpack.c.b16 %v1541, %v1529
    %v1734 = vpack.c.b16 %v1542, %v1530
    %v1735 = vpack.c.b16 %v1555, %v1543
    %v1736 = vpack.c.b16 %v1556, %v1544
    %v1737 = vpack.c.b16 %v1557, %v1545
    %v1738 = vpack.c.b16 %v1558, %v1546
    %v1739 = vpack.c.b16 %v1559, %v1547
    %v1740 = vpack.c.b16 %v1560, %v1548
    %v1741 = vpack.c.b16 %v1561, %v1549
    %v1742 = vpack.c.b16 %v1562, %v1550
    %v1743 = vpack.c.b16 %v1563, %v1551
    %v1744 = vpack.c.b16 %v1564, %v1552
    %v1745 = vpack.c.b16 %v1565, %v1553
    %v1746 = vpack.c.b16 %v1566, %v1554
    %v1747 = vpack.c.b16 %v1579, %v1567
    %v1748 = vpack.c.b16 %v1580, %v1568
    %v1749 = vpack.c.b16 %v1581, %v1569
    %v1750 = vpack.c.b16 %v1582, %v1570
    %v1751 = vpack.c.b16 %v1583, %v1571
    %v1752 = vpack.c.b16 %v1584, %v1572
    %v1753 = vpack.c.b16 %v1585, %v1573
    %v1754 = vpack.c.b16 %v1586, %v1574
    %v1755 = vpack.c.b16 %v1587, %v1575
    %v1756 = vpack.c.b16 %v1588, %v1576
    %v1757 = vpack.c.b16 %v1589, %v1577
    %v1758 = vpack.c.b16 %v1590, %v1578
    %v1928 = vsel %vm813, %v912, 0
    %v1931 = vsel %vm813, %v914, 0
    %v1934 = vsel %vm813, %v916, 0
    %v1937 = vsel %vm813, %v918, 0
    %1939 = vmatprep.subr.bf16.mxu0 %v1592
    %1940 = vmatpush1.bf16.msra.mxu0 %v1591
    %1941 = vmatprep.subr.bf16.mxu0 %v1604
    %1942 = vmatpush1.bf16.msra.mxu0 %v1603
    %1943 = vmatprep.subr.bf16.mxu0 %v1616
    %1944 = vmatpush1.bf16.msra.mxu0 %v1615
    %1945 = vmatprep.subr.bf16.mxu0 %v1628
    %1946 = vmatpush1.bf16.msra.mxu0 %v1627
    %1947 = vmatprep.subr.bf16.mxu0 %v1640
    %1948 = vmatpush1.bf16.msra.mxu0 %v1639
    %1949 = vmatprep.subr.bf16.mxu0 %v1652
    %1950 = vmatpush1.bf16.msra.mxu0 %v1651
    %1951 = vmatprep.subr.bf16.mxu0 %v1664
    %1952 = vmatpush1.bf16.msra.mxu0 %v1663
    %1953 = vmatprep.subr.bf16.mxu0 %v1676
    %1954 = vmatpush1.bf16.msra.mxu0 %v1675
    %1955 = vmatprep.subr.bf16.mxu0 %v1688
    %1956 = vmatpush1.bf16.msra.mxu0 %v1687
    %1957 = vmatprep.subr.bf16.mxu0 %v1700
    %1958 = vmatpush1.bf16.msra.mxu0 %v1699
    %1959 = vmatprep.subr.bf16.mxu0 %v1712
    %1960 = vmatpush1.bf16.msra.mxu0 %v1711
    %1961 = vmatprep.subr.bf16.mxu0 %v1724
    %1962 = vmatpush1.bf16.msra.mxu0 %v1723
    %1963 = vmatprep.subr.bf16.mxu0 %v1736
    %1964 = vmatpush1.bf16.msra.mxu0 %v1735
    %1965 = vmatprep.subr.bf16.mxu0 %v1748
    %1966 = vmatpush1.bf16.msra.mxu0 %v1747
    %1967 = vmatprep.subr.bf16.mxu0 0
    %1968 = vmatpush1.bf16.msra.mxu0 0
    %1969 = vmatprep.subr.bf16.mxu0 0
    %1970 = vmatpush1.bf16.msra.mxu0 0
    %1971 = vmatprep.mubr.bf16.mxu0 %v1928
    %1972 = vmatmul.mubr.bf16.gmra.mrb[0].mxu0 %v911
    %v1973 = vpop.f32.mrb[0].mxu0
    %v1974 = vadd.f32 0.0, %v1973
    %v1975 = vpop.f32.mrb[0].mxu0
    %v1976 = vadd.f32 0.0, %v1975
    %v1977 = vpop.f32.mrb[0].mxu0
    %v1978 = vadd.f32 0.0, %v1977
    %v1979 = vpop.f32.mrb[0].mxu0
    %v1980 = vadd.f32 0.0, %v1979
    %1981 = vmatprep.mubr.bf16.mxu0 %v1931
    %1982 = vmatmul.mubr.bf16.gmra.mrb[0].mxu0 %v913
    %v1983 = vpop.f32.mrb[0].mxu0
    %v1984 = vadd.f32 0.0, %v1983
    %v1985 = vpop.f32.mrb[0].mxu0
    %v1986 = vadd.f32 0.0, %v1985
    %v1987 = vpop.f32.mrb[0].mxu0
    %v1988 = vadd.f32 0.0, %v1987
    %v1989 = vpop.f32.mrb[0].mxu0
    %v1990 = vadd.f32 0.0, %v1989
    %1991 = vmatprep.mubr.bf16.mxu0 %v1934
    %1992 = vmatmul.mubr.bf16.gmra.mrb[0].mxu0 %v915
    %v1993 = vpop.f32.mrb[0].mxu0
    %v1994 = vadd.f32 0.0, %v1993
    %v1995 = vpop.f32.mrb[0].mxu0
    %v1996 = vadd.f32 0.0, %v1995
    %v1997 = vpop.f32.mrb[0].mxu0
    %v1998 = vadd.f32 0.0, %v1997
    %v1999 = vpop.f32.mrb[0].mxu0
    %v2000 = vadd.f32 0.0, %v1999
    %2001 = vmatprep.mubr.bf16.mxu0 %v1937
    %2002 = vmatmul.mubr.bf16.gmra.mrb[0].mxu0 %v917
    %v2003 = vpop.f32.mrb[0].mxu0
    %v2004 = vadd.f32 0.0, %v2003
    %v2005 = vpop.f32.mrb[0].mxu0
    %v2006 = vadd.f32 0.0, %v2005
    %v2007 = vpop.f32.mrb[0].mxu0
    %v2008 = vpop.f32.mrb[0].mxu0
    %2009 = vdwg.mxu0
    %2010 = vmatprep.subr.bf16.mxu0 %v1594
    %2011 = vmatpush1.bf16.msra.mxu0 %v1593
    %2012 = vmatprep.subr.bf16.mxu0 %v1606
    %2013 = vmatpush1.bf16.msra.mxu0 %v1605
    %2014 = vmatprep.subr.bf16.mxu0 %v1618
    %2015 = vmatpush1.bf16.msra.mxu0 %v1617
    %2016 = vmatprep.subr.bf16.mxu0 %v1630
    %2017 = vmatpush1.bf16.msra.mxu0 %v1629
    %2018 = vmatprep.subr.bf16.mxu0 %v1642
    %2019 = vmatpush1.bf16.msra.mxu0 %v1641
    %2020 = vmatprep.subr.bf16.mxu0 %v1654
    %2021 = vmatpush1.bf16.msra.mxu0 %v1653
    %2022 = vmatprep.subr.bf16.mxu0 %v1666
    %2023 = vmatpush1.bf16.msra.mxu0 %v1665
    %2024 = vmatprep.subr.bf16.mxu0 %v1678
    %2025 = vmatpush1.bf16.msra.mxu0 %v1677
    %2026 = vmatprep.subr.bf16.mxu0 %v1690
    %2027 = vmatpush1.bf16.msra.mxu0 %v1689
    %2028 = vmatprep.subr.bf16.mxu0 %v1702
    %2029 = vmatpush1.bf16.msra.mxu0 %v1701
    %2030 = vmatprep.subr.bf16.mxu0 %v1714
    %2031 = vmatpush1.bf16.msra.mxu0 %v1713
    %2032 = vmatprep.subr.bf16.mxu0 %v1726
    %2033 = vmatpush1.bf16.msra.mxu0 %v1725
    %2034 = vmatprep.subr.bf16.mxu0 %v1738
    %2035 = vmatpush1.bf16.msra.mxu0 %v1737
    %2036 = vmatprep.subr.bf16.mxu0 %v1750
    %2037 = vmatpush1.bf16.msra.mxu0 %v1749
    %2038 = vmatprep.subr.bf16.mxu0 0
    %2039 = vmatpush1.bf16.msra.mxu0 0
    %2040 = vmatprep.subr.bf16.mxu0 0
    %2041 = vmatpush1.bf16.msra.mxu0 0
    %2042 = vmatprep.mubr.bf16.mxu0 %v1928
    %2043 = vmatmul.mubr.bf16.gmra.mrb[0].mxu0 %v911
    %v2044 = vpop.f32.mrb[0].mxu0
    %v2045 = vadd.f32 0.0, %v2044
    %v2046 = vpop.f32.mrb[0].mxu0
    %v2047 = vadd.f32 0.0, %v2046
    %v2048 = vpop.f32.mrb[0].mxu0
    %v2049 = vadd.f32 0.0, %v2048
    %v2050 = vpop.f32.mrb[0].mxu0
    %v2051 = vadd.f32 0.0, %v2050
    %2052 = vmatprep.mubr.bf16.mxu0 %v1931
    %2053 = vmatmul.mubr.bf16.gmra.mrb[0].mxu0 %v913
    %v2054 = vpop.f32.mrb[0].mxu0
    %v2055 = vadd.f32 0.0, %v2054
    %v2056 = vpop.f32.mrb[0].mxu0
    %v2057 = vadd.f32 0.0, %v2056
    %v2058 = vpop.f32.mrb[0].mxu0
    %v2059 = vadd.f32 0.0, %v2058
    %v2060 = vpop.f32.mrb[0].mxu0
    %v2061 = vadd.f32 0.0, %v2060
    %2062 = vmatprep.mubr.bf16.mxu0 %v1934
    %2063 = vmatmul.mubr.bf16.gmra.mrb[0].mxu0 %v915
    %v2064 = vpop.f32.mrb[0].mxu0
    %v2065 = vadd.f32 0.0, %v2064
    %v2066 = vpop.f32.mrb[0].mxu0
    %v2067 = vadd.f32 0.0, %v2066
    %v2068 = vpop.f32.mrb[0].mxu0
    %v2069 = vadd.f32 0.0, %v2068
    %v2070 = vpop.f32.mrb[0].mxu0
    %v2071 = vadd.f32 0.0, %v2070
    %2072 = vmatprep.mubr.bf16.mxu0 %v1937
    %2073 = vmatmul.mubr.bf16.gmra.mrb[0].mxu0 %v917
    %v2074 = vpop.f32.mrb[0].mxu0
    %v2075 = vadd.f32 0.0, %v2074
    %v2076 = vpop.f32.mrb[0].mxu0
    %v2077 = vadd.f32 0.0, %v2076
    %v2078 = vpop.f32.mrb[0].mxu0
    %v2079 = vpop.f32.mrb[0].mxu0
    %2080 = vdwg.mxu0
    %2081 = vmatprep.subr.bf16.mxu0 %v1596
    %2082 = vmatpush1.bf16.msra.mxu0 %v1595
    %2083 = vmatprep.subr.bf16.mxu0 %v1608
    %2084 = vmatpush1.bf16.msra.mxu0 %v1607
    %2085 = vmatprep.subr.bf16.mxu0 %v1620
    %2086 = vmatpush1.bf16.msra.mxu0 %v1619
    %2087 = vmatprep.subr.bf16.mxu0 %v1632
    %2088 = vmatpush1.bf16.msra.mxu0 %v1631
    %2089 = vmatprep.subr.bf16.mxu0 %v1644
    %2090 = vmatpush1.bf16.msra.mxu0 %v1643
    %2091 = vmatprep.subr.bf16.mxu0 %v1656
    %2092 = vmatpush1.bf16.msra.mxu0 %v1655
    %2093 = vmatprep.subr.bf16.mxu0 %v1668
    %2094 = vmatpush1.bf16.msra.mxu0 %v1667
    %2095 = vmatprep.subr.bf16.mxu0 %v1680
    %2096 = vmatpush1.bf16.msra.mxu0 %v1679
    %2097 = vmatprep.subr.bf16.mxu0 %v1692
    %2098 = vmatpush1.bf16.msra.mxu0 %v1691
    %2099 = vmatprep.subr.bf16.mxu0 %v1704
    %2100 = vmatpush1.bf16.msra.mxu0 %v1703
    %2101 = vmatprep.subr.bf16.mxu0 %v1716
    %2102 = vmatpush1.bf16.msra.mxu0 %v1715
    %2103 = vmatprep.subr.bf16.mxu0 %v1728
    %2104 = vmatpush1.bf16.msra.mxu0 %v1727
    %2105 = vmatprep.subr.bf16.mxu0 %v1740
    %2106 = vmatpush1.bf16.msra.mxu0 %v1739
    %2107 = vmatprep.subr.bf16.mxu0 %v1752
    %2108 = vmatpush1.bf16.msra.mxu0 %v1751
    %2109 = vmatprep.subr.bf16.mxu0 0
    %2110 = vmatpush1.bf16.msra.mxu0 0
    %2111 = vmatprep.subr.bf16.mxu0 0
    %2112 = vmatpush1.bf16.msra.mxu0 0
    %2113 = vmatprep.mubr.bf16.mxu0 %v1928
    %2114 = vmatmul.mubr.bf16.gmra.mrb[0].mxu0 %v911
    %v2115 = vpop.f32.mrb[0].mxu0
    %v2116 = vadd.f32 0.0, %v2115
    %v2117 = vpop.f32.mrb[0].mxu0
    %v2118 = vadd.f32 0.0, %v2117
    %v2119 = vpop.f32.mrb[0].mxu0
    %v2120 = vadd.f32 0.0, %v2119
    %v2121 = vpop.f32.mrb[0].mxu0
    %v2122 = vadd.f32 0.0, %v2121
    %2123 = vmatprep.mubr.bf16.mxu0 %v1931
    %2124 = vmatmul.mubr.bf16.gmra.mrb[0].mxu0 %v913
    %v2125 = vpop.f32.mrb[0].mxu0
    %v2126 = vadd.f32 0.0, %v2125
    %v2127 = vpop.f32.mrb[0].mxu0
    %v2128 = vadd.f32 0.0, %v2127
    %v2129 = vpop.f32.mrb[0].mxu0
    %v2130 = vadd.f32 0.0, %v2129
    %v2131 = vpop.f32.mrb[0].mxu0
    %v2132 = vadd.f32 0.0, %v2131
    %2133 = vmatprep.mubr.bf16.mxu0 %v1934
    %2134 = vmatmul.mubr.bf16.gmra.mrb[0].mxu0 %v915
    %v2135 = vpop.f32.mrb[0].mxu0
    %v2136 = vadd.f32 0.0, %v2135
    %v2137 = vpop.f32.mrb[0].mxu0
    %v2138 = vadd.f32 0.0, %v2137
    %v2139 = vpop.f32.mrb[0].mxu0
    %v2140 = vadd.f32 0.0, %v2139
    %v2141 = vpop.f32.mrb[0].mxu0
    %v2142 = vadd.f32 0.0, %v2141
    %2143 = vmatprep.mubr.bf16.mxu0 %v1937
    %2144 = vmatmul.mubr.bf16.gmra.mrb[0].mxu0 %v917
    %v2145 = vpop.f32.mrb[0].mxu0
    %v2146 = vadd.f32 0.0, %v2145
    %v2147 = vpop.f32.mrb[0].mxu0
    %v2148 = vadd.f32 0.0, %v2147
    %v2149 = vpop.f32.mrb[0].mxu0
    %v2150 = vpop.f32.mrb[0].mxu0
    %2151 = vdwg.mxu0
    %2152 = vmatprep.subr.bf16.mxu0 %v1598
    %2153 = vmatpush1.bf16.msra.mxu0 %v1597
    %2154 = vmatprep.subr.bf16.mxu0 %v1610
    %2155 = vmatpush1.bf16.msra.mxu0 %v1609
    %2156 = vmatprep.subr.bf16.mxu0 %v1622
    %2157 = vmatpush1.bf16.msra.mxu0 %v1621
    %2158 = vmatprep.subr.bf16.mxu0 %v1634
    %2159 = vmatpush1.bf16.msra.mxu0 %v1633
    %2160 = vmatprep.subr.bf16.mxu0 %v1646
    %2161 = vmatpush1.bf16.msra.mxu0 %v1645
    %2162 = vmatprep.subr.bf16.mxu0 %v1658
    %2163 = vmatpush1.bf16.msra.mxu0 %v1657
    %2164 = vmatprep.subr.bf16.mxu0 %v1670
    %2165 = vmatpush1.bf16.msra.mxu0 %v1669
    %2166 = vmatprep.subr.bf16.mxu0 %v1682
    %2167 = vmatpush1.bf16.msra.mxu0 %v1681
    %2168 = vmatprep.subr.bf16.mxu0 %v1694
    %2169 = vmatpush1.bf16.msra.mxu0 %v1693
    %2170 = vmatprep.subr.bf16.mxu0 %v1706
    %2171 = vmatpush1.bf16.msra.mxu0 %v1705
    %2172 = vmatprep.subr.bf16.mxu0 %v1718
    %2173 = vmatpush1.bf16.msra.mxu0 %v1717
    %2174 = vmatprep.subr.bf16.mxu0 %v1730
    %2175 = vmatpush1.bf16.msra.mxu0 %v1729
    %2176 = vmatprep.subr.bf16.mxu0 %v1742
    %2177 = vmatpush1.bf16.msra.mxu0 %v1741
    %2178 = vmatprep.subr.bf16.mxu0 %v1754
    %2179 = vmatpush1.bf16.msra.mxu0 %v1753
    %2180 = vmatprep.subr.bf16.mxu0 0
    %2181 = vmatpush1.bf16.msra.mxu0 0
    %2182 = vmatprep.subr.bf16.mxu0 0
    %2183 = vmatpush1.bf16.msra.mxu0 0
    %2184 = vmatprep.mubr.bf16.mxu0 %v1928
    %2185 = vmatmul.mubr.bf16.gmra.mrb[0].mxu0 %v911
    %v2186 = vpop.f32.mrb[0].mxu0
    %v2187 = vadd.f32 0.0, %v2186
    %v2188 = vpop.f32.mrb[0].mxu0
    %v2189 = vadd.f32 0.0, %v2188
    %v2190 = vpop.f32.mrb[0].mxu0
    %v2191 = vadd.f32 0.0, %v2190
    %v2192 = vpop.f32.mrb[0].mxu0
    %v2193 = vadd.f32 0.0, %v2192
    %2194 = vmatprep.mubr.bf16.mxu0 %v1931
    %2195 = vmatmul.mubr.bf16.gmra.mrb[0].mxu0 %v913
    %v2196 = vpop.f32.mrb[0].mxu0
    %v2197 = vadd.f32 0.0, %v2196
    %v2198 = vpop.f32.mrb[0].mxu0
    %v2199 = vadd.f32 0.0, %v2198
    %v2200 = vpop.f32.mrb[0].mxu0
    %v2201 = vadd.f32 0.0, %v2200
    %v2202 = vpop.f32.mrb[0].mxu0
    %v2203 = vadd.f32 0.0, %v2202
    %2204 = vmatprep.mubr.bf16.mxu0 %v1934
    %2205 = vmatmul.mubr.bf16.gmra.mrb[0].mxu0 %v915
    %v2206 = vpop.f32.mrb[0].mxu0
    %v2207 = vadd.f32 0.0, %v2206
    %v2208 = vpop.f32.mrb[0].mxu0
    %v2209 = vadd.f32 0.0, %v2208
    %v2210 = vpop.f32.mrb[0].mxu0
    %v2211 = vadd.f32 0.0, %v2210
    %v2212 = vpop.f32.mrb[0].mxu0
    %v2213 = vadd.f32 0.0, %v2212
    %2214 = vmatprep.mubr.bf16.mxu0 %v1937
    %2215 = vmatmul.mubr.bf16.gmra.mrb[0].mxu0 %v917
    %v2216 = vpop.f32.mrb[0].mxu0
    %v2217 = vadd.f32 0.0, %v2216
    %v2218 = vpop.f32.mrb[0].mxu0
    %v2219 = vadd.f32 0.0, %v2218
    %v2220 = vpop.f32.mrb[0].mxu0
    %v2221 = vpop.f32.mrb[0].mxu0
    %2222 = vdwg.mxu0
    %2223 = vmatprep.subr.bf16.mxu0 %v1600
    %2224 = vmatpush1.bf16.msra.mxu0 %v1599
    %2225 = vmatprep.subr.bf16.mxu0 %v1612
    %2226 = vmatpush1.bf16.msra.mxu0 %v1611
    %2227 = vmatprep.subr.bf16.mxu0 %v1624
    %2228 = vmatpush1.bf16.msra.mxu0 %v1623
    %2229 = vmatprep.subr.bf16.mxu0 %v1636
    %2230 = vmatpush1.bf16.msra.mxu0 %v1635
    %2231 = vmatprep.subr.bf16.mxu0 %v1648
    %2232 = vmatpush1.bf16.msra.mxu0 %v1647
    %2233 = vmatprep.subr.bf16.mxu0 %v1660
    %2234 = vmatpush1.bf16.msra.mxu0 %v1659
    %2235 = vmatprep.subr.bf16.mxu0 %v1672
    %2236 = vmatpush1.bf16.msra.mxu0 %v1671
    %2237 = vmatprep.subr.bf16.mxu0 %v1684
    %2238 = vmatpush1.bf16.msra.mxu0 %v1683
    %2239 = vmatprep.subr.bf16.mxu0 %v1696
    %2240 = vmatpush1.bf16.msra.mxu0 %v1695
    %2241 = vmatprep.subr.bf16.mxu0 %v1708
    %2242 = vmatpush1.bf16.msra.mxu0 %v1707
    %2243 = vmatprep.subr.bf16.mxu0 %v1720
    %2244 = vmatpush1.bf16.msra.mxu0 %v1719
    %2245 = vmatprep.subr.bf16.mxu0 %v1732
    %2246 = vmatpush1.bf16.msra.mxu0 %v1731
    %2247 = vmatprep.subr.bf16.mxu0 %v1744
    %2248 = vmatpush1.bf16.msra.mxu0 %v1743
    %2249 = vmatprep.subr.bf16.mxu0 %v1756
    %2250 = vmatpush1.bf16.msra.mxu0 %v1755
    %2251 = vmatprep.subr.bf16.mxu0 0
    %2252 = vmatpush1.bf16.msra.mxu0 0
    %2253 = vmatprep.subr.bf16.mxu0 0
    %2254 = vmatpush1.bf16.msra.mxu0 0
    %2255 = vmatprep.mubr.bf16.mxu0 %v1928
    %2256 = vmatmul.mubr.bf16.gmra.mrb[0].mxu0 %v911
    %v2257 = vpop.f32.mrb[0].mxu0
    %v2258 = vadd.f32 0.0, %v2257
    %v2259 = vpop.f32.mrb[0].mxu0
    %v2260 = vadd.f32 0.0, %v2259
    %v2261 = vpop.f32.mrb[0].mxu0
    %v2262 = vadd.f32 0.0, %v2261
    %v2263 = vpop.f32.mrb[0].mxu0
    %v2264 = vadd.f32 0.0, %v2263
    %2265 = vmatprep.mubr.bf16.mxu0 %v1931
    %2266 = vmatmul.mubr.bf16.gmra.mrb[0].mxu0 %v913
    %v2267 = vpop.f32.mrb[0].mxu0
    %v2268 = vadd.f32 0.0, %v2267
    %v2269 = vpop.f32.mrb[0].mxu0
    %v2270 = vadd.f32 0.0, %v2269
    %v2271 = vpop.f32.mrb[0].mxu0
    %v2272 = vadd.f32 0.0, %v2271
    %v2273 = vpop.f32.mrb[0].mxu0
    %v2274 = vadd.f32 0.0, %v2273
    %2275 = vmatprep.mubr.bf16.mxu0 %v1934
    %2276 = vmatmul.mubr.bf16.gmra.mrb[0].mxu0 %v915
    %v2277 = vpop.f32.mrb[0].mxu0
    %v2278 = vadd.f32 0.0, %v2277
    %v2279 = vpop.f32.mrb[0].mxu0
    %v2280 = vadd.f32 0.0, %v2279
    %v2281 = vpop.f32.mrb[0].mxu0
    %v2282 = vadd.f32 0.0, %v2281
    %v2283 = vpop.f32.mrb[0].mxu0
    %v2284 = vadd.f32 0.0, %v2283
    %2285 = vmatprep.mubr.bf16.mxu0 %v1937
    %2286 = vmatmul.mubr.bf16.gmra.mrb[0].mxu0 %v917
    %v2287 = vpop.f32.mrb[0].mxu0
    %v2288 = vadd.f32 0.0, %v2287
    %v2289 = vpop.f32.mrb[0].mxu0
    %v2290 = vadd.f32 0.0, %v2289
    %v2291 = vpop.f32.mrb[0].mxu0
    %v2292 = vpop.f32.mrb[0].mxu0
    %2293 = vdwg.mxu0
    %2294 = vmatprep.subr.bf16.mxu0 %v1602
    %2295 = vmatpush1.bf16.msra.mxu0 %v1601
    %2296 = vmatprep.subr.bf16.mxu0 %v1614
    %2297 = vmatpush1.bf16.msra.mxu0 %v1613
    %2298 = vmatprep.subr.bf16.mxu0 %v1626
    %2299 = vmatpush1.bf16.msra.mxu0 %v1625
    %2300 = vmatprep.subr.bf16.mxu0 %v1638
    %2301 = vmatpush1.bf16.msra.mxu0 %v1637
    %2302 = vmatprep.subr.bf16.mxu0 %v1650
    %2303 = vmatpush1.bf16.msra.mxu0 %v1649
    %2304 = vmatprep.subr.bf16.mxu0 %v1662
    %2305 = vmatpush1.bf16.msra.mxu0 %v1661
    %2306 = vmatprep.subr.bf16.mxu0 %v1674
    %2307 = vmatpush1.bf16.msra.mxu0 %v1673
    %2308 = vmatprep.subr.bf16.mxu0 %v1686
    %2309 = vmatpush1.bf16.msra.mxu0 %v1685
    %2310 = vmatprep.subr.bf16.mxu0 %v1698
    %2311 = vmatpush1.bf16.msra.mxu0 %v1697
    %2312 = vmatprep.subr.bf16.mxu0 %v1710
    %2313 = vmatpush1.bf16.msra.mxu0 %v1709
    %2314 = vmatprep.subr.bf16.mxu0 %v1722
    %2315 = vmatpush1.bf16.msra.mxu0 %v1721
    %2316 = vmatprep.subr.bf16.mxu0 %v1734
    %2317 = vmatpush1.bf16.msra.mxu0 %v1733
    %2318 = vmatprep.subr.bf16.mxu0 %v1746
    %2319 = vmatpush1.bf16.msra.mxu0 %v1745
    %2320 = vmatprep.subr.bf16.mxu0 %v1758
    %2321 = vmatpush1.bf16.msra.mxu0 %v1757
    %2322 = vmatprep.subr.bf16.mxu0 0
    %2323 = vmatpush1.bf16.msra.mxu0 0
    %2324 = vmatprep.subr.bf16.mxu0 0
    %2325 = vmatpush1.bf16.msra.mxu0 0
    %2326 = vmatprep.mubr.bf16.mxu0 %v1928
    %2327 = vmatmul.mubr.bf16.gmra.mrb[0].mxu0 %v911
    %v2328 = vpop.f32.mrb[0].mxu0
    %v2329 = vadd.f32 0.0, %v2328
    %v2330 = vpop.f32.mrb[0].mxu0
    %v2331 = vadd.f32 0.0, %v2330
    %v2332 = vpop.f32.mrb[0].mxu0
    %v2333 = vadd.f32 0.0, %v2332
    %v2334 = vpop.f32.mrb[0].mxu0
    %v2335 = vadd.f32 0.0, %v2334
    %2336 = vmatprep.mubr.bf16.mxu0 %v1931
    %2337 = vmatmul.mubr.bf16.gmra.mrb[0].mxu0 %v913
    %v2338 = vpop.f32.mrb[0].mxu0
    %v2339 = vadd.f32 0.0, %v2338
    %v2340 = vpop.f32.mrb[0].mxu0
    %v2341 = vadd.f32 0.0, %v2340
    %v2342 = vpop.f32.mrb[0].mxu0
    %v2343 = vadd.f32 0.0, %v2342
    %v2344 = vpop.f32.mrb[0].mxu0
    %v2345 = vadd.f32 0.0, %v2344
    %2346 = vmatprep.mubr.bf16.mxu0 %v1934
    %2347 = vmatmul.mubr.bf16.gmra.mrb[0].mxu0 %v915
    %v2348 = vpop.f32.mrb[0].mxu0
    %v2349 = vadd.f32 0.0, %v2348
    %v2350 = vpop.f32.mrb[0].mxu0
    %v2351 = vadd.f32 0.0, %v2350
    %v2352 = vpop.f32.mrb[0].mxu0
    %v2353 = vadd.f32 0.0, %v2352
    %v2354 = vpop.f32.mrb[0].mxu0
    %v2355 = vadd.f32 0.0, %v2354
    %2356 = vmatprep.mubr.bf16.mxu0 %v1937
    %2357 = vmatmul.mubr.bf16.gmra.mrb[0].mxu0 %v917
    %v2358 = vpop.f32.mrb[0].mxu0
    %v2359 = vadd.f32 0.0, %v2358
    %v2360 = vpop.f32.mrb[0].mxu0
    %v2361 = vadd.f32 0.0, %v2360
    %v2362 = vpop.f32.mrb[0].mxu0
    %v2363 = vpop.f32.mrb[0].mxu0
    %2364 = vdwg.mxu0
    %v2365 = vpack.c.bf16 %v1978, %v1974
    %v2366 = vpack.c.bf16 %v1980, %v1976
    %v2367 = vpack.c.bf16 %v2049, %v2045
    %v2368 = vpack.c.bf16 %v2051, %v2047
    %v2369 = vpack.c.bf16 %v2120, %v2116
    %v2370 = vpack.c.bf16 %v2122, %v2118
    %v2371 = vpack.c.bf16 %v2191, %v2187
    %v2372 = vpack.c.bf16 %v2193, %v2189
    %v2373 = vpack.c.bf16 %v2262, %v2258
    %v2374 = vpack.c.bf16 %v2264, %v2260
    %v2375 = vpack.c.bf16 %v2333, %v2329
    %v2376 = vpack.c.bf16 %v2335, %v2331
    %v2377 = vpack.c.bf16 %v1988, %v1984
    %v2378 = vpack.c.bf16 %v1990, %v1986
    %v2379 = vpack.c.bf16 %v2059, %v2055
    %v2380 = vpack.c.bf16 %v2061, %v2057
    %v2381 = vpack.c.bf16 %v2130, %v2126
    %v2382 = vpack.c.bf16 %v2132, %v2128
    %v2383 = vpack.c.bf16 %v2201, %v2197
    %v2384 = vpack.c.bf16 %v2203, %v2199
    %v2385 = vpack.c.bf16 %v2272, %v2268
    %v2386 = vpack.c.bf16 %v2274, %v2270
    %v2387 = vpack.c.bf16 %v2343, %v2339
    %v2388 = vpack.c.bf16 %v2345, %v2341
    %v2389 = vpack.c.bf16 %v1998, %v1994
    %v2390 = vpack.c.bf16 %v2000, %v1996
    %v2391 = vpack.c.bf16 %v2069, %v2065
    %v2392 = vpack.c.bf16 %v2071, %v2067
    %v2393 = vpack.c.bf16 %v2140, %v2136
    %v2394 = vpack.c.bf16 %v2142, %v2138
    %v2395 = vpack.c.bf16 %v2211, %v2207
    %v2396 = vpack.c.bf16 %v2213, %v2209
    %v2397 = vpack.c.bf16 %v2282, %v2278
    %v2398 = vpack.c.bf16 %v2284, %v2280
    %v2399 = vpack.c.bf16 %v2353, %v2349
    %v2400 = vpack.c.bf16 %v2355, %v2351
    %v2401 = vpack.c.bf16 %v2004, %v2004
    %v2402 = vpack.c.bf16 %v2006, %v2006
    %v2403 = vpack.c.bf16 %v2075, %v2075
    %v2404 = vpack.c.bf16 %v2077, %v2077
    %v2405 = vpack.c.bf16 %v2146, %v2146
    %v2406 = vpack.c.bf16 %v2148, %v2148
    %v2407 = vpack.c.bf16 %v2217, %v2217
    %v2408 = vpack.c.bf16 %v2219, %v2219
    %v2409 = vpack.c.bf16 %v2288, %v2288
    %v2410 = vpack.c.bf16 %v2290, %v2290
    %v2411 = vpack.c.bf16 %v2359, %v2359
    %v2412 = vpack.c.bf16 %v2361, %v2361
    %vm2429 = vcmask 1043456
    %v2430 = vrot.slane %v2369, 4
    %v2431 = vrot.slane %v2370, 4
    %v2432 = vrot.slane %v2371, 4
    %v2433 = vrot.slane %v2372, 4
    %v2434 = vrot.slane %v2381, 4
    %v2435 = vsel %vm2429, %v2430, %v2434
    %v2436 = vrot.slane %v2382, 4
    %v2437 = vsel %vm2429, %v2431, %v2436
    %v2438 = vrot.slane %v2383, 4
    %v2439 = vsel %vm2429, %v2432, %v2438
    %v2440 = vrot.slane %v2384, 4
    %v2441 = vsel %vm2429, %v2433, %v2440
    %v2442 = vrot.slane %v2393, 4
    %v2443 = vsel %vm2429, %v2434, %v2442
    %v2444 = vrot.slane %v2394, 4
    %v2445 = vsel %vm2429, %v2436, %v2444
    %v2446 = vrot.slane %v2395, 4
    %v2447 = vsel %vm2429, %v2438, %v2446
    %v2448 = vrot.slane %v2396, 4
    %v2449 = vsel %vm2429, %v2440, %v2448
    %v2450 = vrot.slane %v2405, 4
    %v2451 = vsel %vm2429, %v2442, %v2450
    %v2452 = vrot.slane %v2406, 4
    %v2453 = vsel %vm2429, %v2444, %v2452
    %v2454 = vrot.slane %v2407, 4
    %v2455 = vsel %vm2429, %v2446, %v2454
    %v2456 = vrot.slane %v2408, 4
    %v2457 = vsel %vm2429, %v2448, %v2456
    %vm2470 = vcmask 1043456
    %v2473 = vsel %vm2470, %v2401, %v2430
    %v2477 = vsel %vm2470, %v2402, %v2431
    %v2481 = vsel %vm2470, %v2403, %v2432
    %v2485 = vsel %vm2470, %v2404, %v2433
    %v2487 = vld [vmem:[%s8] sm:$0xff]
    %v2488 = vld [vmem:[%s8 + $0x8] sm:$0xff]
    %v2489 = vld [vmem:[%s8 + $0x10] sm:$0xff]
    %v2490 = vld [vmem:[%s8 + $0x18] sm:$0xff]
    %v2491 = vld [vmem:[%s8 + $0x20] sm:$0xff]
    %v2492 = vld [vmem:[%s8 + $0x28] sm:$0xff]
    %v2493 = vld [vmem:[%s8 + $0x30] sm:$0xff]
    %v2494 = vld [vmem:[%s8 + $0x38] sm:$0xff]
    %v2495 = vld [vmem:[%s8 + $0x40] sm:$0xff]
    %v2496 = vld [vmem:[%s8 + $0x48] sm:$0xff]
    %v2497 = vld [vmem:[%s8 + $0x50] sm:$0xff]
    %v2498 = vld [vmem:[%s8 + $0x58] sm:$0xff]
    %v2499 = vld [vmem:[%s8 + $0x60] sm:$0xff]
    %v2500 = vld [vmem:[%s8 + $0x68] sm:$0xff]
    %v2501 = vld [vmem:[%s9] sm:$0xf]
    %v2503 = vlaneseq
    %v2504 = vshrl.u32 %v2503, 7
    %v2505 = vsub.s32 0, %v2504
    %v2506 = vrot.slane %v2501, %v2505
    %v2507 = vlaneseq
    %v2508 = vshrl.u32 %v2507, 7
    %v2509 = vsub.s32 1, %v2508
    %v2510 = vrot.slane %v2501, %v2509
    %v2511 = vlaneseq
    %v2512 = vshrl.u32 %v2511, 7
    %v2513 = vsub.s32 2, %v2512
    %v2514 = vrot.slane %v2501, %v2513
    %v2515 = vlaneseq
    %v2516 = vshrl.u32 %v2515, 7
    %v2517 = vsub.s32 3, %v2516
    %v2518 = vrot.slane %v2501, %v2517
    %v2537 = vunpack.c.l.b16 %v2487
    %v2538 = vunpack.c.h.b16 %v2487
    %v2539 = vunpack.c.l.b16 %v2488
    %v2540 = vunpack.c.h.b16 %v2488
    %v2541 = vunpack.c.l.b16 %v2489
    %v2542 = vunpack.c.h.b16 %v2489
    %v2543 = vunpack.c.l.b16 %v2490
    %v2544 = vunpack.c.h.b16 %v2490
    %v2545 = vunpack.c.l.b16 %v2491
    %v2546 = vunpack.c.h.b16 %v2491
    %v2547 = vunpack.c.l.b16 %v2492
    %v2548 = vunpack.c.h.b16 %v2492
    %v2549 = vunpack.c.l.b16 %v2493
    %v2550 = vunpack.c.h.b16 %v2493
    %v2551 = vunpack.c.l.b16 %v2494
    %v2552 = vunpack.c.h.b16 %v2494
    %v2553 = vunpack.c.l.b16 %v2495
    %v2554 = vunpack.c.h.b16 %v2495
    %v2555 = vunpack.c.l.b16 %v2496
    %v2556 = vunpack.c.h.b16 %v2496
    %v2557 = vunpack.c.l.b16 %v2497
    %v2558 = vunpack.c.h.b16 %v2497
    %v2559 = vunpack.c.l.b16 %v2498
    %v2560 = vunpack.c.h.b16 %v2498
    %v2561 = vunpack.c.l.b16 %v2499
    %v2562 = vunpack.c.h.b16 %v2499
    %v2563 = vunpack.c.l.b16 %v2500
    %v2564 = vunpack.c.h.b16 %v2500
    %v2565 = vpack.c.b16 %v2539, %v2537
    %v2566 = vpack.c.b16 %v2540, %v2538
    %v2567 = vpack.c.b16 %v2543, %v2541
    %v2568 = vpack.c.b16 %v2544, %v2542
    %v2569 = vpack.c.b16 %v2547, %v2545
    %v2570 = vpack.c.b16 %v2548, %v2546
    %v2571 = vpack.c.b16 %v2551, %v2549
    %v2572 = vpack.c.b16 %v2552, %v2550
    %v2573 = vpack.c.b16 %v2555, %v2553
    %v2574 = vpack.c.b16 %v2556, %v2554
    %v2575 = vpack.c.b16 %v2559, %v2557
    %v2576 = vpack.c.b16 %v2560, %v2558
    %v2577 = vpack.c.b16 %v2563, %v2561
    %v2578 = vpack.c.b16 %v2564, %v2562
    %vm2586 = vcmask 326656
    %v2588 = vsel %vm2586, %v2566, 0
    %v2591 = vsel %vm2586, %v2568, 0
    %v2594 = vsel %vm2586, %v2570, 0
    %v2597 = vsel %vm2586, %v2572, 0
    %v2600 = vsel %vm2586, %v2574, 0
    %v2603 = vsel %vm2586, %v2576, 0
    %v2606 = vsel %vm2586, %v2578, 0
    %v2609 = vsel %vm2470, %v2409, 0
    %v2612 = vsel %vm2470, %v2410, 0
    %v2615 = vsel %vm2470, %v2411, 0
    %v2618 = vsel %vm2470, %v2412, 0
    %2620 = vmatprep.subr.bf16.mxu0 %v2366
    %2621 = vmatpush1.bf16.msra.mxu0 %v2365
    %2622 = vmatprep.subr.bf16.mxu0 %v2378
    %2623 = vmatpush1.bf16.msra.mxu0 %v2377
    %2624 = vmatprep.subr.bf16.mxu0 %v2390
    %2625 = vmatpush1.bf16.msra.mxu0 %v2389
    %2626 = vmatprep.subr.bf16.mxu0 %v2477
    %2627 = vmatpush1.bf16.msra.mxu0 %v2473
    %2628 = vmatprep.subr.bf16.mxu0 %v2437
    %2629 = vmatpush1.bf16.msra.mxu0 %v2435
    %2630 = vmatprep.subr.bf16.mxu0 %v2445
    %2631 = vmatpush1.bf16.msra.mxu0 %v2443
    %2632 = vmatprep.subr.bf16.mxu0 %v2453
    %2633 = vmatpush1.bf16.msra.mxu0 %v2451
    %2634 = vmatprep.subr.bf16.mxu0 %v2374
    %2635 = vmatpush1.bf16.msra.mxu0 %v2373
    %2636 = vmatprep.subr.bf16.mxu0 %v2386
    %2637 = vmatpush1.bf16.msra.mxu0 %v2385
    %2638 = vmatprep.subr.bf16.mxu0 %v2398
    %2639 = vmatpush1.bf16.msra.mxu0 %v2397
    %2640 = vmatprep.subr.bf16.mxu0 %v2612
    %2641 = vmatpush1.bf16.msra.mxu0 %v2609
    %2642 = vmatprep.subr.bf16.mxu0 0
    %2643 = vmatpush1.bf16.msra.mxu0 0
    %2644 = vmatprep.subr.bf16.mxu0 0
    %2645 = vmatpush1.bf16.msra.mxu0 0
    %2646 = vmatprep.subr.bf16.mxu0 0
    %2647 = vmatpush1.bf16.msra.mxu0 0
    %2648 = vmatprep.subr.bf16.mxu0 0
    %2649 = vmatpush1.bf16.msra.mxu0 0
    %2650 = vmatprep.subr.bf16.mxu0 0
    %2651 = vmatpush1.bf16.msra.mxu0 0
    %2652 = vmatprep.mubr.bf16.mxu0 %v2588
    %2653 = vmatmul.mubr.bf16.gmra.mrb[0].mxu0 %v2565
    %v2654 = vpop.f32.mrb[0].mxu0
    %v2655 = vadd.f32 %v2506, %v2654
    %v2656 = vpop.f32.mrb[0].mxu0
    %v2657 = vadd.f32 %v2510, %v2656
    %v2658 = vpop.f32.mrb[0].mxu0
    %v2659 = vadd.f32 %v2506, %v2658
    %v2660 = vpop.f32.mrb[0].mxu0
    %v2661 = vadd.f32 %v2510, %v2660
    %2662 = vmatprep.mubr.bf16.mxu0 %v2591
    %2663 = vmatmul.mubr.bf16.gmra.mrb[0].mxu0 %v2567
    %v2664 = vpop.f32.mrb[0].mxu0
    %v2665 = vadd.f32 %v2506, %v2664
    %v2666 = vpop.f32.mrb[0].mxu0
    %v2667 = vadd.f32 %v2510, %v2666
    %v2668 = vpop.f32.mrb[0].mxu0
    %v2669 = vadd.f32 %v2506, %v2668
    %v2670 = vpop.f32.mrb[0].mxu0
    %v2671 = vadd.f32 %v2510, %v2670
    %2672 = vmatprep.mubr.bf16.mxu0 %v2594
    %2673 = vmatmul.mubr.bf16.gmra.mrb[0].mxu0 %v2569
    %v2674 = vpop.f32.mrb[0].mxu0
    %v2675 = vadd.f32 %v2506, %v2674
    %v2676 = vpop.f32.mrb[0].mxu0
    %v2677 = vadd.f32 %v2510, %v2676
    %v2678 = vpop.f32.mrb[0].mxu0
    %v2679 = vadd.f32 %v2506, %v2678
    %v2680 = vpop.f32.mrb[0].mxu0
    %v2681 = vadd.f32 %v2510, %v2680
    %2682 = vmatprep.mubr.bf16.mxu0 %v2597
    %2683 = vmatmul.mubr.bf16.gmra.mrb[0].mxu0 %v2571
    %v2684 = vpop.f32.mrb[0].mxu0
    %v2685 = vadd.f32 %v2506, %v2684
    %v2686 = vpop.f32.mrb[0].mxu0
    %v2687 = vadd.f32 %v2510, %v2686
    %v2688 = vpop.f32.mrb[0].mxu0
    %v2689 = vadd.f32 %v2506, %v2688
    %v2690 = vpop.f32.mrb[0].mxu0
    %v2691 = vadd.f32 %v2510, %v2690
    %2692 = vmatprep.mubr.bf16.mxu0 %v2600
    %2693 = vmatmul.mubr.bf16.gmra.mrb[0].mxu0 %v2573
    %v2694 = vpop.f32.mrb[0].mxu0
    %v2695 = vadd.f32 %v2506, %v2694
    %v2696 = vpop.f32.mrb[0].mxu0
    %v2697 = vadd.f32 %v2510, %v2696
    %v2698 = vpop.f32.mrb[0].mxu0
    %v2699 = vadd.f32 %v2506, %v2698
    %v2700 = vpop.f32.mrb[0].mxu0
    %v2701 = vadd.f32 %v2510, %v2700
    %2702 = vmatprep.mubr.bf16.mxu0 %v2603
    %2703 = vmatmul.mubr.bf16.gmra.mrb[0].mxu0 %v2575
    %v2704 = vpop.f32.mrb[0].mxu0
    %v2705 = vadd.f32 %v2506, %v2704
    %v2706 = vpop.f32.mrb[0].mxu0
    %v2707 = vadd.f32 %v2510, %v2706
    %v2708 = vpop.f32.mrb[0].mxu0
    %v2709 = vadd.f32 %v2506, %v2708
    %v2710 = vpop.f32.mrb[0].mxu0
    %v2711 = vadd.f32 %v2510, %v2710
    %2712 = vmatprep.mubr.bf16.mxu0 %v2606
    %2713 = vmatmul.mubr.bf16.gmra.mrb[0].mxu0 %v2577
    %v2714 = vpop.f32.mrb[0].mxu0
    %v2715 = vadd.f32 %v2506, %v2714
    %v2716 = vpop.f32.mrb[0].mxu0
    %v2717 = vadd.f32 %v2510, %v2716
    %v2718 = vpop.f32.mrb[0].mxu0
    %v2719 = vadd.f32 %v2506, %v2718
    %v2720 = vpop.f32.mrb[0].mxu0
    %v2721 = vadd.f32 %v2510, %v2720
    %2722 = vdwg.mxu0
    %2723 = vmatprep.subr.bf16.mxu0 %v2368
    %2724 = vmatpush1.bf16.msra.mxu0 %v2367
    %2725 = vmatprep.subr.bf16.mxu0 %v2380
    %2726 = vmatpush1.bf16.msra.mxu0 %v2379
    %2727 = vmatprep.subr.bf16.mxu0 %v2392
    %2728 = vmatpush1.bf16.msra.mxu0 %v2391
    %2729 = vmatprep.subr.bf16.mxu0 %v2485
    %2730 = vmatpush1.bf16.msra.mxu0 %v2481
    %2731 = vmatprep.subr.bf16.mxu0 %v2441
    %2732 = vmatpush1.bf16.msra.mxu0 %v2439
    %2733 = vmatprep.subr.bf16.mxu0 %v2449
    %2734 = vmatpush1.bf16.msra.mxu0 %v2447
    %2735 = vmatprep.subr.bf16.mxu0 %v2457
    %2736 = vmatpush1.bf16.msra.mxu0 %v2455
    %2737 = vmatprep.subr.bf16.mxu0 %v2376
    %2738 = vmatpush1.bf16.msra.mxu0 %v2375
    %2739 = vmatprep.subr.bf16.mxu0 %v2388
    %2740 = vmatpush1.bf16.msra.mxu0 %v2387
    %2741 = vmatprep.subr.bf16.mxu0 %v2400
    %2742 = vmatpush1.bf16.msra.mxu0 %v2399
    %2743 = vmatprep.subr.bf16.mxu0 %v2618
    %2744 = vmatpush1.bf16.msra.mxu0 %v2615
    %2745 = vmatprep.subr.bf16.mxu0 0
    %2746 = vmatpush1.bf16.msra.mxu0 0
    %2747 = vmatprep.subr.bf16.mxu0 0
    %2748 = vmatpush1.bf16.msra.mxu0 0
    %2749 = vmatprep.subr.bf16.mxu0 0
    %2750 = vmatpush1.bf16.msra.mxu0 0
    %2751 = vmatprep.subr.bf16.mxu0 0
    %2752 = vmatpush1.bf16.msra.mxu0 0
    %2753 = vmatprep.subr.bf16.mxu0 0
    %2754 = vmatpush1.bf16.msra.mxu0 0
    %2755 = vmatprep.mubr.bf16.mxu0 %v2588
    %2756 = vmatmul.mubr.bf16.gmra.mrb[0].mxu0 %v2565
    %v2757 = vpop.f32.mrb[0].mxu0
    %v2758 = vadd.f32 %v2514, %v2757
    %v2759 = vpop.f32.mrb[0].mxu0
    %v2760 = vadd.f32 %v2518, %v2759
    %v2761 = vpop.f32.mrb[0].mxu0
    %v2762 = vadd.f32 %v2514, %v2761
    %v2763 = vpop.f32.mrb[0].mxu0
    %v2764 = vadd.f32 %v2518, %v2763
    %2765 = vmatprep.mubr.bf16.mxu0 %v2591
    %2766 = vmatmul.mubr.bf16.gmra.mrb[0].mxu0 %v2567
    %v2767 = vpop.f32.mrb[0].mxu0
    %v2768 = vadd.f32 %v2514, %v2767
    %v2769 = vpop.f32.mrb[0].mxu0
    %v2770 = vadd.f32 %v2518, %v2769
    %v2771 = vpop.f32.mrb[0].mxu0
    %v2772 = vadd.f32 %v2514, %v2771
    %v2773 = vpop.f32.mrb[0].mxu0
    %v2774 = vadd.f32 %v2518, %v2773
    %2775 = vmatprep.mubr.bf16.mxu0 %v2594
    %2776 = vmatmul.mubr.bf16.gmra.mrb[0].mxu0 %v2569
    %v2777 = vpop.f32.mrb[0].mxu0
    %v2778 = vadd.f32 %v2514, %v2777
    %v2779 = vpop.f32.mrb[0].mxu0
    %v2780 = vadd.f32 %v2518, %v2779
    %v2781 = vpop.f32.mrb[0].mxu0
    %v2782 = vadd.f32 %v2514, %v2781
    %v2783 = vpop.f32.mrb[0].mxu0
    %v2784 = vadd.f32 %v2518, %v2783
    %2785 = vmatprep.mubr.bf16.mxu0 %v2597
    %2786 = vmatmul.mubr.bf16.gmra.mrb[0].mxu0 %v2571
    %v2787 = vpop.f32.mrb[0].mxu0
    %v2788 = vadd.f32 %v2514, %v2787
    %v2789 = vpop.f32.mrb[0].mxu0
    %v2790 = vadd.f32 %v2518, %v2789
    %v2791 = vpop.f32.mrb[0].mxu0
    %v2792 = vadd.f32 %v2514, %v2791
    %v2793 = vpop.f32.mrb[0].mxu0
    %v2794 = vadd.f32 %v2518, %v2793
    %2795 = vmatprep.mubr.bf16.mxu0 %v2600
    %2796 = vmatmul.mubr.bf16.gmra.mrb[0].mxu0 %v2573
    %v2797 = vpop.f32.mrb[0].mxu0
    %v2798 = vadd.f32 %v2514, %v2797
    %v2799 = vpop.f32.mrb[0].mxu0
    %v2800 = vadd.f32 %v2518, %v2799
    %v2801 = vpop.f32.mrb[0].mxu0
    %v2802 = vadd.f32 %v2514, %v2801
    %v2803 = vpop.f32.mrb[0].mxu0
    %v2804 = vadd.f32 %v2518, %v2803
    %2805 = vmatprep.mubr.bf16.mxu0 %v2603
    %2806 = vmatmul.mubr.bf16.gmra.mrb[0].mxu0 %v2575
    %v2807 = vpop.f32.mrb[0].mxu0
    %v2808 = vadd.f32 %v2514, %v2807
    %v2809 = vpop.f32.mrb[0].mxu0
    %v2810 = vadd.f32 %v2518, %v2809
    %v2811 = vpop.f32.mrb[0].mxu0
    %v2812 = vadd.f32 %v2514, %v2811
    %v2813 = vpop.f32.mrb[0].mxu0
    %v2814 = vadd.f32 %v2518, %v2813
    %2815 = vmatprep.mubr.bf16.mxu0 %v2606
    %2816 = vmatmul.mubr.bf16.gmra.mrb[0].mxu0 %v2577
    %v2817 = vpop.f32.mrb[0].mxu0
    %v2818 = vadd.f32 %v2514, %v2817
    %v2819 = vpop.f32.mrb[0].mxu0
    %v2820 = vadd.f32 %v2518, %v2819
    %v2821 = vpop.f32.mrb[0].mxu0
    %v2822 = vadd.f32 %v2514, %v2821
    %v2823 = vpop.f32.mrb[0].mxu0
    %v2824 = vadd.f32 %v2518, %v2823
    %2825 = vdwg.mxu0
    %v2826 = vmax.f32 %v2655, 0.0
    %v2827 = vmax.f32 %v2657, 0.0
    %v2828 = vmax.f32 %v2758, 0.0
    %v2829 = vmax.f32 %v2760, 0.0
    %v2830 = vmax.f32 %v2659, 0.0
    %v2831 = vmax.f32 %v2661, 0.0
    %v2832 = vmax.f32 %v2762, 0.0
    %v2833 = vmax.f32 %v2764, 0.0
    %v2834 = vmax.f32 %v2665, 0.0
    %v2835 = vmax.f32 %v2667, 0.0
    %v2836 = vmax.f32 %v2768, 0.0
    %v2837 = vmax.f32 %v2770, 0.0
    %v2838 = vmax.f32 %v2669, 0.0
    %v2839 = vmax.f32 %v2671, 0.0
    %v2840 = vmax.f32 %v2772, 0.0
    %v2841 = vmax.f32 %v2774, 0.0
    %v2842 = vmax.f32 %v2675, 0.0
    %v2843 = vmax.f32 %v2677, 0.0
    %v2844 = vmax.f32 %v2778, 0.0
    %v2845 = vmax.f32 %v2780, 0.0
    %v2846 = vmax.f32 %v2679, 0.0
    %v2847 = vmax.f32 %v2681, 0.0
    %v2848 = vmax.f32 %v2782, 0.0
    %v2849 = vmax.f32 %v2784, 0.0
    %v2850 = vmax.f32 %v2685, 0.0
    %v2851 = vmax.f32 %v2687, 0.0
    %v2852 = vmax.f32 %v2788, 0.0
    %v2853 = vmax.f32 %v2790, 0.0
    %v2854 = vmax.f32 %v2689, 0.0
    %v2855 = vmax.f32 %v2691, 0.0
    %v2856 = vmax.f32 %v2792, 0.0
    %v2857 = vmax.f32 %v2794, 0.0
    %v2858 = vmax.f32 %v2695, 0.0
    %v2859 = vmax.f32 %v2697, 0.0
    %v2860 = vmax.f32 %v2798, 0.0
    %v2861 = vmax.f32 %v2800, 0.0
    %v2862 = vmax.f32 %v2699, 0.0
    %v2863 = vmax.f32 %v2701, 0.0
    %v2864 = vmax.f32 %v2802, 0.0
    %v2865 = vmax.f32 %v2804, 0.0
    %v2866 = vmax.f32 %v2705, 0.0
    %v2867 = vmax.f32 %v2707, 0.0
    %v2868 = vmax.f32 %v2808, 0.0
    %v2869 = vmax.f32 %v2810, 0.0
    %v2870 = vmax.f32 %v2709, 0.0
    %v2871 = vmax.f32 %v2711, 0.0
    %v2872 = vmax.f32 %v2812, 0.0
    %v2873 = vmax.f32 %v2814, 0.0
    %v2874 = vmax.f32 %v2715, 0.0
    %v2875 = vmax.f32 %v2717, 0.0
    %v2876 = vmax.f32 %v2818, 0.0
    %v2877 = vmax.f32 %v2820, 0.0
    %v2878 = vmax.f32 %v2719, 0.0
    %v2879 = vmax.f32 %v2721, 0.0
    %v2880 = vmax.f32 %v2822, 0.0
    %v2881 = vmax.f32 %v2824, 0.0
    %v2882 = vpack.c.bf16 %v2830, %v2826
    %v2883 = vpack.c.bf16 %v2831, %v2827
    %v2884 = vpack.c.bf16 %v2832, %v2828
    %v2885 = vpack.c.bf16 %v2833, %v2829
    %v2886 = vpack.c.bf16 %v2838, %v2834
    %v2887 = vpack.c.bf16 %v2839, %v2835
    %v2888 = vpack.c.bf16 %v2840, %v2836
    %v2889 = vpack.c.bf16 %v2841, %v2837
    %v2890 = vpack.c.bf16 %v2846, %v2842
    %v2891 = vpack.c.bf16 %v2847, %v2843
    %v2892 = vpack.c.bf16 %v2848, %v2844
    %v2893 = vpack.c.bf16 %v2849, %v2845
    %v2894 = vpack.c.bf16 %v2854, %v2850
    %v2895 = vpack.c.bf16 %v2855, %v2851
    %v2896 = vpack.c.bf16 %v2856, %v2852
    %v2897 = vpack.c.bf16 %v2857, %v2853
    %v2898 = vpack.c.bf16 %v2862, %v2858
    %v2899 = vpack.c.bf16 %v2863, %v2859
    %v2900 = vpack.c.bf16 %v2864, %v2860
    %v2901 = vpack.c.bf16 %v2865, %v2861
    %v2902 = vpack.c.bf16 %v2870, %v2866
    %v2903 = vpack.c.bf16 %v2871, %v2867
    %v2904 = vpack.c.bf16 %v2872, %v2868
    %v2905 = vpack.c.bf16 %v2873, %v2869
    %v2906 = vpack.c.bf16 %v2878, %v2874
    %v2907 = vpack.c.bf16 %v2879, %v2875
    %v2908 = vpack.c.bf16 %v2880, %v2876
    %v2909 = vpack.c.bf16 %v2881, %v2877
    %v2910 = vld [vmem:[#allocation6] sm:$0xff]
    %v2911 = vld [vmem:[#allocation6 + $0x8] sm:$0xf]
    %v2912 = vld [vmem:[#allocation6 + $0xc] sm:$0xff]
    %v2913 = vld [vmem:[#allocation6 + $0x14] sm:$0xf]
    %v2914 = vld [vmem:[#allocation6 + $0x18] sm:$0xff]
    %v2915 = vld [vmem:[#allocation6 + $0x20] sm:$0xf]
    %v2916 = vld [vmem:[#allocation6 + $0x24] sm:$0xff]
    %v2917 = vld [vmem:[#allocation6 + $0x2c] sm:$0xf]
    %v2918 = vld [vmem:[#allocation6 + $0x30] sm:$0xff]
    %v2919 = vld [vmem:[#allocation6 + $0x38] sm:$0xf]
    %v2920 = vld [vmem:[#allocation6 + $0x3c] sm:$0xff]
    %v2921 = vld [vmem:[#allocation6 + $0x44] sm:$0xf]
    %v2922 = vld [vmem:[#allocation6 + $0x48] sm:$0xff]
    %v2923 = vld [vmem:[#allocation6 + $0x50] sm:$0xf]
    %v2924 = vld [vmem:[#allocation6 + $0x54] sm:$0xff]
    %v2925 = vld [vmem:[#allocation6 + $0x5c] sm:$0xf]
    %v2926 = vld [vmem:[#allocation6 + $0x60] sm:$0xff]
    %v2927 = vld [vmem:[#allocation6 + $0x68] sm:$0xf]
    %v2928 = vld [vmem:[#allocation6 + $0x6c] sm:$0xff]
    %v2929 = vld [vmem:[#allocation6 + $0x74] sm:$0xf]
    %v2930 = vld [vmem:[#allocation6 + $0x78] sm:$0xff]
    %v2931 = vld [vmem:[#allocation6 + $0x80] sm:$0xf]
    %v2932 = vld [vmem:[#allocation6 + $0x84] sm:$0xff]
    %v2933 = vld [vmem:[#allocation6 + $0x8c] sm:$0xf]
    %v2934 = vld [vmem:[#allocation6 + $0x90] sm:$0xff]
    %v2935 = vld [vmem:[#allocation6 + $0x98] sm:$0xf]
    %v2936 = vld [vmem:[#allocation6 + $0x9c] sm:$0xff]
    %v2937 = vld [vmem:[#allocation6 + $0xa4] sm:$0xf]
    %v2938 = vld [vmem:[#allocation6 + $0xa8] sm:$0xff]
    %v2939 = vld [vmem:[#allocation6 + $0xb0] sm:$0xf]
    %v2940 = vld [vmem:[#allocation6 + $0xb4] sm:$0xff]
    %v2941 = vld [vmem:[#allocation6 + $0xbc] sm:$0xf]
    %v2942 = vld [vmem:[#allocation6 + $0xc0] sm:$0xff]
    %v2943 = vld [vmem:[#allocation6 + $0xc8] sm:$0xf]
    %v2944 = vld [vmem:[#allocation6 + $0xcc] sm:$0xff]
    %v2945 = vld [vmem:[#allocation6 + $0xd4] sm:$0xf]
    %v2946 = vld [vmem:[#allocation6 + $0xd8] sm:$0xff]
    %v2947 = vld [vmem:[#allocation6 + $0xe0] sm:$0xf]
    %v2948 = vld [vmem:[#allocation6 + $0xe4] sm:$0xff]
    %v2949 = vld [vmem:[#allocation6 + $0xec] sm:$0xf]
    %v2950 = vld [vmem:[#allocation6 + $0xf0] sm:$0xff]
    %v2951 = vld [vmem:[#allocation6 + $0xf8] sm:$0xf]
    %v2952 = vld [vmem:[#allocation6 + $0xfc] sm:$0xff]
    %v2953 = vld [vmem:[#allocation6 + $0x104] sm:$0xf]
    %v2954 = vld [vmem:[#allocation6 + $0x108] sm:$0xff]
    %v2955 = vld [vmem:[#allocation6 + $0x110] sm:$0xf]
    %v2956 = vld [vmem:[#allocation6 + $0x114] sm:$0xff]
    %v2957 = vld [vmem:[#allocation6 + $0x11c] sm:$0xf]
    %v2958 = vld [vmem:[#allocation6 + $0x120] sm:$0xff]
    %v2959 = vld [vmem:[#allocation6 + $0x128] sm:$0xf]
    %v2960 = vld [vmem:[#allocation6 + $0x12c] sm:$0xff]
    %v2961 = vld [vmem:[#allocation6 + $0x134] sm:$0xf]
    %v2962 = vld [vmem:[#allocation6 + $0x138] sm:$0xff]
    %v2963 = vld [vmem:[#allocation6 + $0x140] sm:$0xf]
    %v2964 = vld [vmem:[#allocation6 + $0x144] sm:$0xff]
    %v2965 = vld [vmem:[#allocation6 + $0x14c] sm:$0xf]
    %v2966 = vld [vmem:[#allocation6 + $0x150] sm:$0xff]
    %v2967 = vld [vmem:[#allocation6 + $0x158] sm:$0xf]
    %v2968 = vld [vmem:[#allocation6 + $0x15c] sm:$0xff]
    %v2969 = vld [vmem:[#allocation6 + $0x164] sm:$0xf]
    %v2970 = vld [vmem:[#allocation6 + $0x168] sm:$0xff]
    %v2971 = vld [vmem:[#allocation6 + $0x170] sm:$0xf]
    %v2972 = vld [vmem:[#allocation6 + $0x174] sm:$0xff]
    %v2973 = vld [vmem:[#allocation6 + $0x17c] sm:$0xf]
    %v2974 = vld [vmem:[#allocation6 + $0x180] sm:$0xff]
    %v2975 = vld [vmem:[#allocation6 + $0x188] sm:$0xf]
    %v2976 = vld [vmem:[#allocation6 + $0x18c] sm:$0xff]
    %v2977 = vld [vmem:[#allocation6 + $0x194] sm:$0xf]
    %v2978 = vld [vmem:[#allocation6 + $0x198] sm:$0xff]
    %v2979 = vld [vmem:[#allocation6 + $0x1a0] sm:$0xf]
    %v2980 = vld [vmem:[#allocation6 + $0x1a4] sm:$0xff]
    %v2981 = vld [vmem:[#allocation6 + $0x1ac] sm:$0xf]
    %v2982 = vld [vmem:[#allocation6 + $0x1b0] sm:$0xff]
    %v2983 = vld [vmem:[#allocation6 + $0x1b8] sm:$0xf]
    %v2984 = vld [vmem:[#allocation6 + $0x1bc] sm:$0xff]
    %v2985 = vld [vmem:[#allocation6 + $0x1c4] sm:$0xf]
    %v2986 = vld [vmem:[#allocation6 + $0x1c8] sm:$0xff]
    %v2987 = vld [vmem:[#allocation6 + $0x1d0] sm:$0xf]
    %v2988 = vld [vmem:[#allocation6 + $0x1d4] sm:$0xff]
    %v2989 = vld [vmem:[#allocation6 + $0x1dc] sm:$0xf]
    %v2990 = vld [vmem:[#allocation6 + $0x1e0] sm:$0xff]
    %v2991 = vld [vmem:[#allocation6 + $0x1e8] sm:$0xf]
    %v2992 = vld [vmem:[#allocation6 + $0x1ec] sm:$0xff]
    %v2993 = vld [vmem:[#allocation6 + $0x1f4] sm:$0xf]
    %v2994 = vld [vmem:[#allocation6 + $0x1f8] sm:$0xff]
    %v2995 = vld [vmem:[#allocation6 + $0x200] sm:$0xf]
    %v2996 = vld [vmem:[#allocation6 + $0x204] sm:$0xff]
    %v2997 = vld [vmem:[#allocation6 + $0x20c] sm:$0xf]
    %v2998 = vld [vmem:[#allocation6 + $0x210] sm:$0xff]
    %v2999 = vld [vmem:[#allocation6 + $0x218] sm:$0xf]
    %v3000 = vld [vmem:[#allocation6 + $0x21c] sm:$0xff]
    %v3001 = vld [vmem:[#allocation6 + $0x224] sm:$0xf]
    %v3002 = vld [vmem:[#allocation6 + $0x228] sm:$0xff]
    %v3003 = vld [vmem:[#allocation6 + $0x230] sm:$0xf]
    %v3004 = vld [vmem:[#allocation6 + $0x234] sm:$0xff]
    %v3005 = vld [vmem:[#allocation6 + $0x23c] sm:$0xf]
    %v3006 = vld [vmem:[#allocation6 + $0x240] sm:$0xff]
    %v3007 = vld [vmem:[#allocation6 + $0x248] sm:$0xf]
    %v3008 = vld [vmem:[#allocation6 + $0x24c] sm:$0xff]
    %v3009 = vld [vmem:[#allocation6 + $0x254] sm:$0xf]
    %v3010 = vld [vmem:[#allocation6 + $0x258] sm:$0xff]
    %v3011 = vld [vmem:[#allocation6 + $0x260] sm:$0xf]
    %v3012 = vld [vmem:[#allocation6 + $0x264] sm:$0xff]
    %v3013 = vld [vmem:[#allocation6 + $0x26c] sm:$0xf]
    %v3014 = vld [vmem:[#allocation6 + $0x270] sm:$0xff]
    %v3015 = vld [vmem:[#allocation6 + $0x278] sm:$0xf]
    %v3016 = vld [vmem:[#allocation6 + $0x27c] sm:$0xff]
    %v3017 = vld [vmem:[#allocation6 + $0x284] sm:$0xf]
    %v3018 = vld [vmem:[#allocation6 + $0x288] sm:$0xff]
    %v3019 = vld [vmem:[#allocation6 + $0x290] sm:$0xf]
    %v3020 = vld [vmem:[#allocation6 + $0x294] sm:$0xff]
    %v3021 = vld [vmem:[#allocation6 + $0x29c] sm:$0xf]
    %v3134 = vunpack.c.l.b16 %v2910
    %v3135 = vunpack.c.h.b16 %v2910
    %v3136 = vunpack.c.l.b16 %v2911
    %v3137 = vunpack.c.l.b16 %v2912
    %v3138 = vunpack.c.h.b16 %v2912
    %v3139 = vunpack.c.l.b16 %v2913
    %v3140 = vunpack.c.l.b16 %v2914
    %v3141 = vunpack.c.h.b16 %v2914
    %v3142 = vunpack.c.l.b16 %v2915
    %v3143 = vunpack.c.l.b16 %v2916
    %v3144 = vunpack.c.h.b16 %v2916
    %v3145 = vunpack.c.l.b16 %v2917
    %v3146 = vunpack.c.l.b16 %v2918
    %v3147 = vunpack.c.h.b16 %v2918
    %v3148 = vunpack.c.l.b16 %v2919
    %v3149 = vunpack.c.l.b16 %v2920
    %v3150 = vunpack.c.h.b16 %v2920
    %v3151 = vunpack.c.l.b16 %v2921
    %v3152 = vunpack.c.l.b16 %v2922
    %v3153 = vunpack.c.h.b16 %v2922
    %v3154 = vunpack.c.l.b16 %v2923
    %v3155 = vunpack.c.l.b16 %v2924
    %v3156 = vunpack.c.h.b16 %v2924
    %v3157 = vunpack.c.l.b16 %v2925
    %v3158 = vunpack.c.l.b16 %v2926
    %v3159 = vunpack.c.h.b16 %v2926
    %v3160 = vunpack.c.l.b16 %v2927
    %v3161 = vunpack.c.l.b16 %v2928
    %v3162 = vunpack.c.h.b16 %v2928
    %v3163 = vunpack.c.l.b16 %v2929
    %v3164 = vunpack.c.l.b16 %v2930
    %v3165 = vunpack.c.h.b16 %v2930
    %v3166 = vunpack.c.l.b16 %v2931
    %v3167 = vunpack.c.l.b16 %v2932
    %v3168 = vunpack.c.h.b16 %v2932
    %v3169 = vunpack.c.l.b16 %v2933
    %v3170 = vunpack.c.l.b16 %v2934
    %v3171 = vunpack.c.h.b16 %v2934
    %v3172 = vunpack.c.l.b16 %v2935
    %v3173 = vunpack.c.l.b16 %v2936
    %v3174 = vunpack.c.h.b16 %v2936
    %v3175 = vunpack.c.l.b16 %v2937
    %v3176 = vunpack.c.l.b16 %v2938
    %v3177 = vunpack.c.h.b16 %v2938
    %v3178 = vunpack.c.l.b16 %v2939
    %v3179 = vunpack.c.l.b16 %v2940
    %v3180 = vunpack.c.h.b16 %v2940
    %v3181 = vunpack.c.l.b16 %v2941
    %v3182 = vunpack.c.l.b16 %v2942
    %v3183 = vunpack.c.h.b16 %v2942
    %v3184 = vunpack.c.l.b16 %v2943
    %v3185 = vunpack.c.l.b16 %v2944
    %v3186 = vunpack.c.h.b16 %v2944
    %v3187 = vunpack.c.l.b16 %v2945
    %v3188 = vunpack.c.l.b16 %v2946
    %v3189 = vunpack.c.h.b16 %v2946
    %v3190 = vunpack.c.l.b16 %v2947
    %v3191 = vunpack.c.l.b16 %v2948
    %v3192 = vunpack.c.h.b16 %v2948
    %v3193 = vunpack.c.l.b16 %v2949
    %v3194 = vunpack.c.l.b16 %v2950
    %v3195 = vunpack.c.h.b16 %v2950
    %v3196 = vunpack.c.l.b16 %v2951
    %v3197 = vunpack.c.l.b16 %v2952
    %v3198 = vunpack.c.h.b16 %v2952
    %v3199 = vunpack.c.l.b16 %v2953
    %v3200 = vunpack.c.l.b16 %v2954
    %v3201 = vunpack.c.h.b16 %v2954
    %v3202 = vunpack.c.l.b16 %v2955
    %v3203 = vunpack.c.l.b16 %v2956
    %v3204 = vunpack.c.h.b16 %v2956
    %v3205 = vunpack.c.l.b16 %v2957
    %v3206 = vunpack.c.l.b16 %v2958
    %v3207 = vunpack.c.h.b16 %v2958
    %v3208 = vunpack.c.l.b16 %v2959
    %v3209 = vunpack.c.l.b16 %v2960
    %v3210 = vunpack.c.h.b16 %v2960
    %v3211 = vunpack.c.l.b16 %v2961
    %v3212 = vunpack.c.l.b16 %v2962
    %v3213 = vunpack.c.h.b16 %v2962
    %v3214 = vunpack.c.l.b16 %v2963
    %v3215 = vunpack.c.l.b16 %v2964
    %v3216 = vunpack.c.h.b16 %v2964
    %v3217 = vunpack.c.l.b16 %v2965
    %v3218 = vunpack.c.l.b16 %v2966
    %v3219 = vunpack.c.h.b16 %v2966
    %v3220 = vunpack.c.l.b16 %v2967
    %v3221 = vunpack.c.l.b16 %v2968
    %v3222 = vunpack.c.h.b16 %v2968
    %v3223 = vunpack.c.l.b16 %v2969
    %v3224 = vunpack.c.l.b16 %v2970
    %v3225 = vunpack.c.h.b16 %v2970
    %v3226 = vunpack.c.l.b16 %v2971
    %v3227 = vunpack.c.l.b16 %v2972
    %v3228 = vunpack.c.h.b16 %v2972
    %v3229 = vunpack.c.l.b16 %v2973
    %v3230 = vunpack.c.l.b16 %v2974
    %v3231 = vunpack.c.h.b16 %v2974
    %v3232 = vunpack.c.l.b16 %v2975
    %v3233 = vunpack.c.l.b16 %v2976
    %v3234 = vunpack.c.h.b16 %v2976
    %v3235 = vunpack.c.l.b16 %v2977
    %v3236 = vunpack.c.l.b16 %v2978
    %v3237 = vunpack.c.h.b16 %v2978
    %v3238 = vunpack.c.l.b16 %v2979
    %v3239 = vunpack.c.l.b16 %v2980
    %v3240 = vunpack.c.h.b16 %v2980
    %v3241 = vunpack.c.l.b16 %v2981
    %v3242 = vunpack.c.l.b16 %v2982
    %v3243 = vunpack.c.h.b16 %v2982
    %v3244 = vunpack.c.l.b16 %v2983
    %v3245 = vunpack.c.l.b16 %v2984
    %v3246 = vunpack.c.h.b16 %v2984
    %v3247 = vunpack.c.l.b16 %v2985
    %v3248 = vunpack.c.l.b16 %v2986
    %v3249 = vunpack.c.h.b16 %v2986
    %v3250 = vunpack.c.l.b16 %v2987
    %v3251 = vunpack.c.l.b16 %v2988
    %v3252 = vunpack.c.h.b16 %v2988
    %v3253 = vunpack.c.l.b16 %v2989
    %v3254 = vunpack.c.l.b16 %v2990
    %v3255 = vunpack.c.h.b16 %v2990
    %v3256 = vunpack.c.l.b16 %v2991
    %v3257 = vunpack.c.l.b16 %v2992
    %v3258 = vunpack.c.h.b16 %v2992
    %v3259 = vunpack.c.l.b16 %v2993
    %v3260 = vunpack.c.l.b16 %v2994
    %v3261 = vunpack.c.h.b16 %v2994
    %v3262 = vunpack.c.l.b16 %v2995
    %v3263 = vunpack.c.l.b16 %v2996
    %v3264 = vunpack.c.h.b16 %v2996
    %v3265 = vunpack.c.l.b16 %v2997
    %v3266 = vunpack.c.l.b16 %v2998
    %v3267 = vunpack.c.h.b16 %v2998
    %v3268 = vunpack.c.l.b16 %v2999
    %v3269 = vunpack.c.l.b16 %v3000
    %v3270 = vunpack.c.h.b16 %v3000
    %v3271 = vunpack.c.l.b16 %v3001
    %v3272 = vunpack.c.l.b16 %v3002
    %v3273 = vunpack.c.h.b16 %v3002
    %v3274 = vunpack.c.l.b16 %v3003
    %v3275 = vunpack.c.l.b16 %v3004
    %v3276 = vunpack.c.h.b16 %v3004
    %v3277 = vunpack.c.l.b16 %v3005
    %v3278 = vunpack.c.l.b16 %v3006
    %v3279 = vunpack.c.h.b16 %v3006
    %v3280 = vunpack.c.l.b16 %v3007
    %v3281 = vunpack.c.l.b16 %v3008
    %v3282 = vunpack.c.h.b16 %v3008
    %v3283 = vunpack.c.l.b16 %v3009
    %v3284 = vunpack.c.l.b16 %v3010
    %v3285 = vunpack.c.h.b16 %v3010
    %v3286 = vunpack.c.l.b16 %v3011
    %v3287 = vunpack.c.l.b16 %v3012
    %v3288 = vunpack.c.h.b16 %v3012
    %v3289 = vunpack.c.l.b16 %v3013
    %v3290 = vunpack.c.l.b16 %v3014
    %v3291 = vunpack.c.h.b16 %v3014
    %v3292 = vunpack.c.l.b16 %v3015
    %v3293 = vunpack.c.l.b16 %v3016
    %v3294 = vunpack.c.h.b16 %v3016
    %v3295 = vunpack.c.l.b16 %v3017
    %v3296 = vunpack.c.l.b16 %v3018
    %v3297 = vunpack.c.h.b16 %v3018
    %v3298 = vunpack.c.l.b16 %v3019
    %v3299 = vunpack.c.l.b16 %v3020
    %v3300 = vunpack.c.h.b16 %v3020
    %v3301 = vunpack.c.l.b16 %v3021
    %v3302 = vpack.c.b16 %v3137, %v3134
    %v3303 = vpack.c.b16 %v3138, %v3135
    %v3304 = vpack.c.b16 %v3139, %v3136
    %v3305 = vpack.c.b16 %v3143, %v3140
    %v3306 = vpack.c.b16 %v3144, %v3141
    %v3307 = vpack.c.b16 %v3145, %v3142
    %v3308 = vpack.c.b16 %v3149, %v3146
    %v3309 = vpack.c.b16 %v3150, %v3147
    %v3310 = vpack.c.b16 %v3151, %v3148
    %v3311 = vpack.c.b16 %v3155, %v3152
    %v3312 = vpack.c.b16 %v3156, %v3153
    %v3313 = vpack.c.b16 %v3157, %v3154
    %v3314 = vpack.c.b16 %v3161, %v3158
    %v3315 = vpack.c.b16 %v3162, %v3159
    %v3316 = vpack.c.b16 %v3163, %v3160
    %v3317 = vpack.c.b16 %v3167, %v3164
    %v3318 = vpack.c.b16 %v3168, %v3165
    %v3319 = vpack.c.b16 %v3169, %v3166
    %v3320 = vpack.c.b16 %v3173, %v3170
    %v3321 = vpack.c.b16 %v3174, %v3171
    %v3322 = vpack.c.b16 %v3175, %v3172
    %v3323 = vpack.c.b16 %v3179, %v3176
    %v3324 = vpack.c.b16 %v3180, %v3177
    %v3325 = vpack.c.b16 %v3181, %v3178
    %v3326 = vpack.c.b16 %v3185, %v3182
    %v3327 = vpack.c.b16 %v3186, %v3183
    %v3328 = vpack.c.b16 %v3187, %v3184
    %v3329 = vpack.c.b16 %v3191, %v3188
    %v3330 = vpack.c.b16 %v3192, %v3189
    %v3331 = vpack.c.b16 %v3193, %v3190
    %v3332 = vpack.c.b16 %v3197, %v3194
    %v3333 = vpack.c.b16 %v3198, %v3195
    %v3334 = vpack.c.b16 %v3199, %v3196
    %v3335 = vpack.c.b16 %v3203, %v3200
    %v3336 = vpack.c.b16 %v3204, %v3201
    %v3337 = vpack.c.b16 %v3205, %v3202
    %v3338 = vpack.c.b16 %v3209, %v3206
    %v3339 = vpack.c.b16 %v3210, %v3207
    %v3340 = vpack.c.b16 %v3211, %v3208
    %v3341 = vpack.c.b16 %v3215, %v3212
    %v3342 = vpack.c.b16 %v3216, %v3213
    %v3343 = vpack.c.b16 %v3217, %v3214
    %v3344 = vpack.c.b16 %v3221, %v3218
    %v3345 = vpack.c.b16 %v3222, %v3219
    %v3346 = vpack.c.b16 %v3223, %v3220
    %v3347 = vpack.c.b16 %v3227, %v3224
    %v3348 = vpack.c.b16 %v3228, %v3225
    %v3349 = vpack.c.b16 %v3229, %v3226
    %v3350 = vpack.c.b16 %v3233, %v3230
    %v3351 = vpack.c.b16 %v3234, %v3231
    %v3352 = vpack.c.b16 %v3235, %v3232
    %v3353 = vpack.c.b16 %v3239, %v3236
    %v3354 = vpack.c.b16 %v3240, %v3237
    %v3355 = vpack.c.b16 %v3241, %v3238
    %v3356 = vpack.c.b16 %v3245, %v3242
    %v3357 = vpack.c.b16 %v3246, %v3243
    %v3358 = vpack.c.b16 %v3247, %v3244
    %v3359 = vpack.c.b16 %v3251, %v3248
    %v3360 = vpack.c.b16 %v3252, %v3249
    %v3361 = vpack.c.b16 %v3253, %v3250
    %v3362 = vpack.c.b16 %v3257, %v3254
    %v3363 = vpack.c.b16 %v3258, %v3255
    %v3364 = vpack.c.b16 %v3259, %v3256
    %v3365 = vpack.c.b16 %v3263, %v3260
    %v3366 = vpack.c.b16 %v3264, %v3261
    %v3367 = vpack.c.b16 %v3265, %v3262
    %v3368 = vpack.c.b16 %v3269, %v3266
    %v3369 = vpack.c.b16 %v3270, %v3267
    %v3370 = vpack.c.b16 %v3271, %v3268
    %v3371 = vpack.c.b16 %v3275, %v3272
    %v3372 = vpack.c.b16 %v3276, %v3273
    %v3373 = vpack.c.b16 %v3277, %v3274
    %v3374 = vpack.c.b16 %v3281, %v3278
    %v3375 = vpack.c.b16 %v3282, %v3279
    %v3376 = vpack.c.b16 %v3283, %v3280
    %v3377 = vpack.c.b16 %v3287, %v3284
    %v3378 = vpack.c.b16 %v3288, %v3285
    %v3379 = vpack.c.b16 %v3289, %v3286
    %v3380 = vpack.c.b16 %v3293, %v3290
    %v3381 = vpack.c.b16 %v3294, %v3291
    %v3382 = vpack.c.b16 %v3295, %v3292
    %v3383 = vpack.c.b16 %v3299, %v3296
    %v3384 = vpack.c.b16 %v3300, %v3297
    %v3385 = vpack.c.b16 %v3301, %v3298
    %vm3470 = vcmask 523264
    %v3472 = vsel %vm3470, %v2885, 0
    %v3475 = vsel %vm3470, %v2889, 0
    %v3478 = vsel %vm3470, %v2893, 0
    %v3481 = vsel %vm3470, %v2897, 0
    %v3484 = vsel %vm3470, %v2901, 0
    %v3487 = vsel %vm3470, %v2905, 0
    %v3490 = vsel %vm3470, %v2909, 0
    %3492 = vmatprep.subr.bf16.mxu0 %v3303
    %3493 = vmatpush1.bf16.msra.mxu0 %v3302
    %3494 = vmatprep.subr.bf16.mxu0 %v3306
    %3495 = vmatpush1.bf16.msra.mxu0 %v3305
    %3496 = vmatprep.subr.bf16.mxu0 %v3309
    %3497 = vmatpush1.bf16.msra.mxu0 %v3308
    %3498 = vmatprep.subr.bf16.mxu0 %v3312
    %3499 = vmatpush1.bf16.msra.mxu0 %v3311
    %3500 = vmatprep.subr.bf16.mxu0 %v3315
    %3501 = vmatpush1.bf16.msra.mxu0 %v3314
    %3502 = vmatprep.subr.bf16.mxu0 %v3318
    %3503 = vmatpush1.bf16.msra.mxu0 %v3317
    %3504 = vmatprep.subr.bf16.mxu0 %v3321
    %3505 = vmatpush1.bf16.msra.mxu0 %v3320
    %3506 = vmatprep.subr.bf16.mxu0 %v3324
    %3507 = vmatpush1.bf16.msra.mxu0 %v3323
    %3508 = vmatprep.subr.bf16.mxu0 %v3327
    %3509 = vmatpush1.bf16.msra.mxu0 %v3326
    %3510 = vmatprep.subr.bf16.mxu0 %v3330
    %3511 = vmatpush1.bf16.msra.mxu0 %v3329
    %3512 = vmatprep.subr.bf16.mxu0 %v3333
    %3513 = vmatpush1.bf16.msra.mxu0 %v3332
    %3514 = vmatprep.subr.bf16.mxu0 %v3336
    %3515 = vmatpush1.bf16.msra.mxu0 %v3335
    %3516 = vmatprep.subr.bf16.mxu0 %v3339
    %3517 = vmatpush1.bf16.msra.mxu0 %v3338
    %3518 = vmatprep.subr.bf16.mxu0 %v3342
    %3519 = vmatpush1.bf16.msra.mxu0 %v3341
    %3520 = vmatprep.subr.bf16.mxu0 %v3345
    %3521 = vmatpush1.bf16.msra.mxu0 %v3344
    %3522 = vmatprep.subr.bf16.mxu0 %v3348
    %3523 = vmatpush1.bf16.msra.mxu0 %v3347
    %3524 = vmatprep.mubr.bf16.mxu0 %v2883
    %3525 = vmatmul.mubr.bf16.gmra.mrb[0].mxu0 %v2882
    %v3526 = vpop.f32.mrb[0].mxu0
    %v3527 = vadd.f32 0.0, %v3526
    %v3528 = vpop.f32.mrb[0].mxu0
    %v3529 = vadd.f32 0.0, %v3528
    %v3530 = vpop.f32.mrb[0].mxu0
    %v3531 = vadd.f32 0.0, %v3530
    %v3532 = vpop.f32.mrb[0].mxu0
    %v3533 = vadd.f32 0.0, %v3532
    %3534 = vmatprep.mubr.bf16.mxu0 %v2887
    %3535 = vmatmul.mubr.bf16.gmra.mrb[0].mxu0 %v2886
    %v3536 = vpop.f32.mrb[0].mxu0
    %v3537 = vadd.f32 0.0, %v3536
    %v3538 = vpop.f32.mrb[0].mxu0
    %v3539 = vadd.f32 0.0, %v3538
    %v3540 = vpop.f32.mrb[0].mxu0
    %v3541 = vadd.f32 0.0, %v3540
    %v3542 = vpop.f32.mrb[0].mxu0
    %v3543 = vadd.f32 0.0, %v3542
    %3544 = vmatprep.mubr.bf16.mxu0 %v2891
    %3545 = vmatmul.mubr.bf16.gmra.mrb[0].mxu0 %v2890
    %v3546 = vpop.f32.mrb[0].mxu0
    %v3547 = vadd.f32 0.0, %v3546
    %v3548 = vpop.f32.mrb[0].mxu0
    %v3549 = vadd.f32 0.0, %v3548
    %v3550 = vpop.f32.mrb[0].mxu0
    %v3551 = vadd.f32 0.0, %v3550
    %v3552 = vpop.f32.mrb[0].mxu0
    %v3553 = vadd.f32 0.0, %v3552
    %3554 = vmatprep.mubr.bf16.mxu0 %v2895
    %3555 = vmatmul.mubr.bf16.gmra.mrb[0].mxu0 %v2894
    %v3556 = vpop.f32.mrb[0].mxu0
    %v3557 = vadd.f32 0.0, %v3556
    %v3558 = vpop.f32.mrb[0].mxu0
    %v3559 = vadd.f32 0.0, %v3558
    %v3560 = vpop.f32.mrb[0].mxu0
    %v3561 = vadd.f32 0.0, %v3560
    %v3562 = vpop.f32.mrb[0].mxu0
    %v3563 = vadd.f32 0.0, %v3562
    %3564 = vmatprep.mubr.bf16.mxu0 %v2899
    %3565 = vmatmul.mubr.bf16.gmra.mrb[0].mxu0 %v2898
    %v3566 = vpop.f32.mrb[0].mxu0
    %v3567 = vadd.f32 0.0, %v3566
    %v3568 = vpop.f32.mrb[0].mxu0
    %v3569 = vadd.f32 0.0, %v3568
    %v3570 = vpop.f32.mrb[0].mxu0
    %v3571 = vadd.f32 0.0, %v3570
    %v3572 = vpop.f32.mrb[0].mxu0
    %v3573 = vadd.f32 0.0, %v3572
    %3574 = vmatprep.mubr.bf16.mxu0 %v2903
    %3575 = vmatmul.mubr.bf16.gmra.mrb[0].mxu0 %v2902
    %v3576 = vpop.f32.mrb[0].mxu0
    %v3577 = vadd.f32 0.0, %v3576
    %v3578 = vpop.f32.mrb[0].mxu0
    %v3579 = vadd.f32 0.0, %v3578
    %v3580 = vpop.f32.mrb[0].mxu0
    %v3581 = vadd.f32 0.0, %v3580
    %v3582 = vpop.f32.mrb[0].mxu0
    %v3583 = vadd.f32 0.0, %v3582
    %3584 = vmatprep.mubr.bf16.mxu0 %v2907
    %3585 = vmatmul.mubr.bf16.gmra.mrb[0].mxu0 %v2906
    %v3586 = vpop.f32.mrb[0].mxu0
    %v3587 = vadd.f32 0.0, %v3586
    %v3588 = vpop.f32.mrb[0].mxu0
    %v3589 = vadd.f32 0.0, %v3588
    %v3590 = vpop.f32.mrb[0].mxu0
    %v3591 = vadd.f32 0.0, %v3590
    %v3592 = vpop.f32.mrb[0].mxu0
    %v3593 = vadd.f32 0.0, %v3592
    %3594 = vdwg.mxu0
    %3595 = vmatprep.subr.bf16.mxu0 %v3351
    %3596 = vmatpush1.bf16.msra.mxu0 %v3350
    %3597 = vmatprep.subr.bf16.mxu0 %v3354
    %3598 = vmatpush1.bf16.msra.mxu0 %v3353
    %3599 = vmatprep.subr.bf16.mxu0 %v3357
    %3600 = vmatpush1.bf16.msra.mxu0 %v3356
    %3601 = vmatprep.subr.bf16.mxu0 %v3360
    %3602 = vmatpush1.bf16.msra.mxu0 %v3359
    %3603 = vmatprep.subr.bf16.mxu0 %v3363
    %3604 = vmatpush1.bf16.msra.mxu0 %v3362
    %3605 = vmatprep.subr.bf16.mxu0 %v3366
    %3606 = vmatpush1.bf16.msra.mxu0 %v3365
    %3607 = vmatprep.subr.bf16.mxu0 %v3369
    %3608 = vmatpush1.bf16.msra.mxu0 %v3368
    %3609 = vmatprep.subr.bf16.mxu0 %v3372
    %3610 = vmatpush1.bf16.msra.mxu0 %v3371
    %3611 = vmatprep.subr.bf16.mxu0 %v3375
    %3612 = vmatpush1.bf16.msra.mxu0 %v3374
    %3613 = vmatprep.subr.bf16.mxu0 %v3378
    %3614 = vmatpush1.bf16.msra.mxu0 %v3377
    %3615 = vmatprep.subr.bf16.mxu0 %v3381
    %3616 = vmatpush1.bf16.msra.mxu0 %v3380
    %3617 = vmatprep.subr.bf16.mxu0 %v3384
    %3618 = vmatpush1.bf16.msra.mxu0 %v3383
    %3619 = vmatprep.subr.bf16.mxu0 0
    %3620 = vmatpush1.bf16.msra.mxu0 0
    %3621 = vmatprep.subr.bf16.mxu0 0
    %3622 = vmatpush1.bf16.msra.mxu0 0
    %3623 = vmatprep.subr.bf16.mxu0 0
    %3624 = vmatpush1.bf16.msra.mxu0 0
    %3625 = vmatprep.subr.bf16.mxu0 0
    %3626 = vmatpush1.bf16.msra.mxu0 0
    %3627 = vmatprep.mubr.bf16.mxu0 %v3472
    %3628 = vmatmul.mubr.bf16.gmra.mrb[0].mxu0 %v2884
    %v3629 = vpop.f32.mrb[0].mxu0
    %v3630 = vadd.f32 %v3527, %v3629
    %v3631 = vpop.f32.mrb[0].mxu0
    %v3632 = vadd.f32 %v3529, %v3631
    %v3633 = vpop.f32.mrb[0].mxu0
    %v3634 = vadd.f32 %v3531, %v3633
    %v3635 = vpop.f32.mrb[0].mxu0
    %v3636 = vadd.f32 %v3533, %v3635
    %3637 = vmatprep.mubr.bf16.mxu0 %v3475
    %3638 = vmatmul.mubr.bf16.gmra.mrb[0].mxu0 %v2888
    %v3639 = vpop.f32.mrb[0].mxu0
    %v3640 = vadd.f32 %v3537, %v3639
    %v3641 = vpop.f32.mrb[0].mxu0
    %v3642 = vadd.f32 %v3539, %v3641
    %v3643 = vpop.f32.mrb[0].mxu0
    %v3644 = vadd.f32 %v3541, %v3643
    %v3645 = vpop.f32.mrb[0].mxu0
    %v3646 = vadd.f32 %v3543, %v3645
    %3647 = vmatprep.mubr.bf16.mxu0 %v3478
    %3648 = vmatmul.mubr.bf16.gmra.mrb[0].mxu0 %v2892
    %v3649 = vpop.f32.mrb[0].mxu0
    %v3650 = vadd.f32 %v3547, %v3649
    %v3651 = vpop.f32.mrb[0].mxu0
    %v3652 = vadd.f32 %v3549, %v3651
    %v3653 = vpop.f32.mrb[0].mxu0
    %v3654 = vadd.f32 %v3551, %v3653
    %v3655 = vpop.f32.mrb[0].mxu0
    %v3656 = vadd.f32 %v3553, %v3655
    %3657 = vmatprep.mubr.bf16.mxu0 %v3481
    %3658 = vmatmul.mubr.bf16.gmra.mrb[0].mxu0 %v2896
    %v3659 = vpop.f32.mrb[0].mxu0
    %v3660 = vadd.f32 %v3557, %v3659
    %v3661 = vpop.f32.mrb[0].mxu0
    %v3662 = vadd.f32 %v3559, %v3661
    %v3663 = vpop.f32.mrb[0].mxu0
    %v3664 = vadd.f32 %v3561, %v3663
    %v3665 = vpop.f32.mrb[0].mxu0
    %v3666 = vadd.f32 %v3563, %v3665
    %3667 = vmatprep.mubr.bf16.mxu0 %v3484
    %3668 = vmatmul.mubr.bf16.gmra.mrb[0].mxu0 %v2900
    %v3669 = vpop.f32.mrb[0].mxu0
    %v3670 = vadd.f32 %v3567, %v3669
    %v3671 = vpop.f32.mrb[0].mxu0
    %v3672 = vadd.f32 %v3569, %v3671
    %v3673 = vpop.f32.mrb[0].mxu0
    %v3674 = vadd.f32 %v3571, %v3673
    %v3675 = vpop.f32.mrb[0].mxu0
    %v3676 = vadd.f32 %v3573, %v3675
    %3677 = vmatprep.mubr.bf16.mxu0 %v3487
    %3678 = vmatmul.mubr.bf16.gmra.mrb[0].mxu0 %v2904
    %v3679 = vpop.f32.mrb[0].mxu0
    %v3680 = vadd.f32 %v3577, %v3679
    %v3681 = vpop.f32.mrb[0].mxu0
    %v3682 = vadd.f32 %v3579, %v3681
    %v3683 = vpop.f32.mrb[0].mxu0
    %v3684 = vadd.f32 %v3581, %v3683
    %v3685 = vpop.f32.mrb[0].mxu0
    %v3686 = vadd.f32 %v3583, %v3685
    %3687 = vmatprep.mubr.bf16.mxu0 %v3490
    %3688 = vmatmul.mubr.bf16.gmra.mrb[0].mxu0 %v2908
    %v3689 = vpop.f32.mrb[0].mxu0
    %v3690 = vadd.f32 %v3587, %v3689
    %v3691 = vpop.f32.mrb[0].mxu0
    %v3692 = vadd.f32 %v3589, %v3691
    %v3693 = vpop.f32.mrb[0].mxu0
    %v3694 = vadd.f32 %v3591, %v3693
    %v3695 = vpop.f32.mrb[0].mxu0
    %v3696 = vadd.f32 %v3593, %v3695
    %3697 = vdwg.mxu0
    %3698 = vmatprep.subr.bf16.mxu0 0
    %3699 = vmatpush1.bf16.msra.mxu0 %v3304
    %3700 = vmatprep.subr.bf16.mxu0 0
    %3701 = vmatpush1.bf16.msra.mxu0 %v3307
    %3702 = vmatprep.subr.bf16.mxu0 0
    %3703 = vmatpush1.bf16.msra.mxu0 %v3310
    %3704 = vmatprep.subr.bf16.mxu0 0
    %3705 = vmatpush1.bf16.msra.mxu0 %v3313
    %3706 = vmatprep.subr.bf16.mxu0 0
    %3707 = vmatpush1.bf16.msra.mxu0 %v3316
    %3708 = vmatprep.subr.bf16.mxu0 0
    %3709 = vmatpush1.bf16.msra.mxu0 %v3319
    %3710 = vmatprep.subr.bf16.mxu0 0
    %3711 = vmatpush1.bf16.msra.mxu0 %v3322
    %3712 = vmatprep.subr.bf16.mxu0 0
    %3713 = vmatpush1.bf16.msra.mxu0 %v3325
    %3714 = vmatprep.subr.bf16.mxu0 0
    %3715 = vmatpush1.bf16.msra.mxu0 %v3328
    %3716 = vmatprep.subr.bf16.mxu0 0
    %3717 = vmatpush1.bf16.msra.mxu0 %v3331
    %3718 = vmatprep.subr.bf16.mxu0 0
    %3719 = vmatpush1.bf16.msra.mxu0 %v3334
    %3720 = vmatprep.subr.bf16.mxu0 0
    %3721 = vmatpush1.bf16.msra.mxu0 %v3337
    %3722 = vmatprep.subr.bf16.mxu0 0
    %3723 = vmatpush1.bf16.msra.mxu0 %v3340
    %3724 = vmatprep.subr.bf16.mxu0 0
    %3725 = vmatpush1.bf16.msra.mxu0 %v3343
    %3726 = vmatprep.subr.bf16.mxu0 0
    %3727 = vmatpush1.bf16.msra.mxu0 %v3346
    %3728 = vmatprep.subr.bf16.mxu0 0
    %3729 = vmatpush1.bf16.msra.mxu0 %v3349
    %3730 = vmatprep.mubr.bf16.mxu0 %v2883
    %3731 = vmatmul.mubr.bf16.gmra.mrb[0].mxu0 %v2882
    %v3732 = vpop.f32.mrb[0].mxu0
    %v3733 = vadd.f32 0.0, %v3732
    %v3734 = vpop.f32.mrb[0].mxu0
    %v3735 = vpop.f32.mrb[0].mxu0
    %v3736 = vadd.f32 0.0, %v3735
    %v3737 = vpop.f32.mrb[0].mxu0
    %3738 = vmatprep.mubr.bf16.mxu0 %v2887
    %3739 = vmatmul.mubr.bf16.gmra.mrb[0].mxu0 %v2886
    %v3740 = vpop.f32.mrb[0].mxu0
    %v3741 = vadd.f32 0.0, %v3740
    %v3742 = vpop.f32.mrb[0].mxu0
    %v3743 = vpop.f32.mrb[0].mxu0
    %v3744 = vadd.f32 0.0, %v3743
    %v3745 = vpop.f32.mrb[0].mxu0
    %3746 = vmatprep.mubr.bf16.mxu0 %v2891
    %3747 = vmatmul.mubr.bf16.gmra.mrb[0].mxu0 %v2890
    %v3748 = vpop.f32.mrb[0].mxu0
    %v3749 = vadd.f32 0.0, %v3748
    %v3750 = vpop.f32.mrb[0].mxu0
    %v3751 = vpop.f32.mrb[0].mxu0
    %v3752 = vadd.f32 0.0, %v3751
    %v3753 = vpop.f32.mrb[0].mxu0
    %3754 = vmatprep.mubr.bf16.mxu0 %v2895
    %3755 = vmatmul.mubr.bf16.gmra.mrb[0].mxu0 %v2894
    %v3756 = vpop.f32.mrb[0].mxu0
    %v3757 = vadd.f32 0.0, %v3756
    %v3758 = vpop.f32.mrb[0].mxu0
    %v3759 = vpop.f32.mrb[0].mxu0
    %v3760 = vadd.f32 0.0, %v3759
    %v3761 = vpop.f32.mrb[0].mxu0
    %3762 = vmatprep.mubr.bf16.mxu0 %v2899
    %3763 = vmatmul.mubr.bf16.gmra.mrb[0].mxu0 %v2898
    %v3764 = vpop.f32.mrb[0].mxu0
    %v3765 = vadd.f32 0.0, %v3764
    %v3766 = vpop.f32.mrb[0].mxu0
    %v3767 = vpop.f32.mrb[0].mxu0
    %v3768 = vadd.f32 0.0, %v3767
    %v3769 = vpop.f32.mrb[0].mxu0
    %3770 = vmatprep.mubr.bf16.mxu0 %v2903
    %3771 = vmatmul.mubr.bf16.gmra.mrb[0].mxu0 %v2902
    %v3772 = vpop.f32.mrb[0].mxu0
    %v3773 = vadd.f32 0.0, %v3772
    %v3774 = vpop.f32.mrb[0].mxu0
    %v3775 = vpop.f32.mrb[0].mxu0
    %v3776 = vadd.f32 0.0, %v3775
    %v3777 = vpop.f32.mrb[0].mxu0
    %3778 = vmatprep.mubr.bf16.mxu0 %v2907
    %3779 = vmatmul.mubr.bf16.gmra.mrb[0].mxu0 %v2906
    %v3780 = vpop.f32.mrb[0].mxu0
    %v3781 = vadd.f32 0.0, %v3780
    %v3782 = vpop.f32.mrb[0].mxu0
    %v3783 = vpop.f32.mrb[0].mxu0
    %v3784 = vadd.f32 0.0, %v3783
    %v3785 = vpop.f32.mrb[0].mxu0
    %3786 = vdwg.mxu0
    %3787 = vmatprep.subr.bf16.mxu0 0
    %3788 = vmatpush1.bf16.msra.mxu0 %v3352
    %3789 = vmatprep.subr.bf16.mxu0 0
    %3790 = vmatpush1.bf16.msra.mxu0 %v3355
    %3791 = vmatprep.subr.bf16.mxu0 0
    %3792 = vmatpush1.bf16.msra.mxu0 %v3358
    %3793 = vmatprep.subr.bf16.mxu0 0
    %3794 = vmatpush1.bf16.msra.mxu0 %v3361
    %3795 = vmatprep.subr.bf16.mxu0 0
    %3796 = vmatpush1.bf16.msra.mxu0 %v3364
    %3797 = vmatprep.subr.bf16.mxu0 0
    %3798 = vmatpush1.bf16.msra.mxu0 %v3367
    %3799 = vmatprep.subr.bf16.mxu0 0
    %3800 = vmatpush1.bf16.msra.mxu0 %v3370
    %3801 = vmatprep.subr.bf16.mxu0 0
    %3802 = vmatpush1.bf16.msra.mxu0 %v3373
    %3803 = vmatprep.subr.bf16.mxu0 0
    %3804 = vmatpush1.bf16.msra.mxu0 %v3376
    %3805 = vmatprep.subr.bf16.mxu0 0
    %3806 = vmatpush1.bf16.msra.mxu0 %v3379
    %3807 = vmatprep.subr.bf16.mxu0 0
    %3808 = vmatpush1.bf16.msra.mxu0 %v3382
    %3809 = vmatprep.subr.bf16.mxu0 0
    %3810 = vmatpush1.bf16.msra.mxu0 %v3385
    %3811 = vmatprep.subr.bf16.mxu0 0
    %3812 = vmatpush1.bf16.msra.mxu0 0
    %3813 = vmatprep.subr.bf16.mxu0 0
    %3814 = vmatpush1.bf16.msra.mxu0 0
    %3815 = vmatprep.subr.bf16.mxu0 0
    %3816 = vmatpush1.bf16.msra.mxu0 0
    %3817 = vmatprep.subr.bf16.mxu0 0
    %3818 = vmatpush1.bf16.msra.mxu0 0
    %3819 = vmatprep.mubr.bf16.mxu0 %v3472
    %3820 = vmatmul.mubr.bf16.gmra.mrb[0].mxu0 %v2884
    %v3821 = vpop.f32.mrb[0].mxu0
    %v3822 = vadd.f32 %v3733, %v3821
    %v3823 = vpop.f32.mrb[0].mxu0
    %v3824 = vpop.f32.mrb[0].mxu0
    %v3825 = vadd.f32 %v3736, %v3824
    %v3826 = vpop.f32.mrb[0].mxu0
    %3827 = vmatprep.mubr.bf16.mxu0 %v3475
    %3828 = vmatmul.mubr.bf16.gmra.mrb[0].mxu0 %v2888
    %v3829 = vpop.f32.mrb[0].mxu0
    %v3830 = vadd.f32 %v3741, %v3829
    %v3831 = vpop.f32.mrb[0].mxu0
    %v3832 = vpop.f32.mrb[0].mxu0
    %v3833 = vadd.f32 %v3744, %v3832
    %v3834 = vpop.f32.mrb[0].mxu0
    %3835 = vmatprep.mubr.bf16.mxu0 %v3478
    %3836 = vmatmul.mubr.bf16.gmra.mrb[0].mxu0 %v2892
    %v3837 = vpop.f32.mrb[0].mxu0
    %v3838 = vadd.f32 %v3749, %v3837
    %v3839 = vpop.f32.mrb[0].mxu0
    %v3840 = vpop.f32.mrb[0].mxu0
    %v3841 = vadd.f32 %v3752, %v3840
    %v3842 = vpop.f32.mrb[0].mxu0
    %3843 = vmatprep.mubr.bf16.mxu0 %v3481
    %3844 = vmatmul.mubr.bf16.gmra.mrb[0].mxu0 %v2896
    %v3845 = vpop.f32.mrb[0].mxu0
    %v3846 = vadd.f32 %v3757, %v3845
    %v3847 = vpop.f32.mrb[0].mxu0
    %v3848 = vpop.f32.mrb[0].mxu0
    %v3849 = vadd.f32 %v3760, %v3848
    %v3850 = vpop.f32.mrb[0].mxu0
    %3851 = vmatprep.mubr.bf16.mxu0 %v3484
    %3852 = vmatmul.mubr.bf16.gmra.mrb[0].mxu0 %v2900
    %v3853 = vpop.f32.mrb[0].mxu0
    %v3854 = vadd.f32 %v3765, %v3853
    %v3855 = vpop.f32.mrb[0].mxu0
    %v3856 = vpop.f32.mrb[0].mxu0
    %v3857 = vadd.f32 %v3768, %v3856
    %v3858 = vpop.f32.mrb[0].mxu0
    %3859 = vmatprep.mubr.bf16.mxu0 %v3487
    %3860 = vmatmul.mubr.bf16.gmra.mrb[0].mxu0 %v2904
    %v3861 = vpop.f32.mrb[0].mxu0
    %v3862 = vadd.f32 %v3773, %v3861
    %v3863 = vpop.f32.mrb[0].mxu0
    %v3864 = vpop.f32.mrb[0].mxu0
    %v3865 = vadd.f32 %v3776, %v3864
    %v3866 = vpop.f32.mrb[0].mxu0
    %3867 = vmatprep.mubr.bf16.mxu0 %v3490
    %3868 = vmatmul.mubr.bf16.gmra.mrb[0].mxu0 %v2908
    %v3869 = vpop.f32.mrb[0].mxu0
    %v3870 = vadd.f32 %v3781, %v3869
    %v3871 = vpop.f32.mrb[0].mxu0
    %v3872 = vpop.f32.mrb[0].mxu0
    %v3873 = vadd.f32 %v3784, %v3872
    %v3874 = vpop.f32.mrb[0].mxu0
    %3875 = vdwg.mxu0
    %v3876 = vpack.c.bf16 %v3634, %v3630
    %v3877 = vpack.c.bf16 %v3636, %v3632
    %v3878 = vpack.c.bf16 %v3825, %v3822
    %v3879 = vpack.c.bf16 %v3644, %v3640
    %v3880 = vpack.c.bf16 %v3646, %v3642
    %v3881 = vpack.c.bf16 %v3833, %v3830
    %v3882 = vpack.c.bf16 %v3654, %v3650
    %v3883 = vpack.c.bf16 %v3656, %v3652
    %v3884 = vpack.c.bf16 %v3841, %v3838
    %v3885 = vpack.c.bf16 %v3664, %v3660
    %v3886 = vpack.c.bf16 %v3666, %v3662
    %v3887 = vpack.c.bf16 %v3849, %v3846
    %v3888 = vpack.c.bf16 %v3674, %v3670
    %v3889 = vpack.c.bf16 %v3676, %v3672
    %v3890 = vpack.c.bf16 %v3857, %v3854
    %v3891 = vpack.c.bf16 %v3684, %v3680
    %v3892 = vpack.c.bf16 %v3686, %v3682
    %v3893 = vpack.c.bf16 %v3865, %v3862
    %v3894 = vpack.c.bf16 %v3694, %v3690
    %v3895 = vpack.c.bf16 %v3696, %v3692
    %v3896 = vpack.c.bf16 %v3873, %v3870
    %v3897 = vld [vmem:[#allocation7] sm:$0xff]
    %v3898 = vld [vmem:[#allocation7 + $0x8] sm:$0xf]
    %v3899 = vld [vmem:[#allocation7 + $0xc] sm:$0xff]
    %v3900 = vld [vmem:[#allocation7 + $0x14] sm:$0xf]
    %v3901 = vld [vmem:[#allocation7 + $0x18] sm:$0xff]
    %v3902 = vld [vmem:[#allocation7 + $0x20] sm:$0xf]
    %v3903 = vld [vmem:[#allocation7 + $0x24] sm:$0xff]
    %v3904 = vld [vmem:[#allocation7 + $0x2c] sm:$0xf]
    %v3905 = vld [vmem:[#allocation7 + $0x30] sm:$0xff]
    %v3906 = vld [vmem:[#allocation7 + $0x38] sm:$0xf]
    %v3907 = vld [vmem:[#allocation7 + $0x3c] sm:$0xff]
    %v3908 = vld [vmem:[#allocation7 + $0x44] sm:$0xf]
    %v3909 = vld [vmem:[#allocation7 + $0x48] sm:$0xff]
    %v3910 = vld [vmem:[#allocation7 + $0x50] sm:$0xf]
    %v3911 = vld [vmem:[#allocation7 + $0x54] sm:$0xff]
    %v3912 = vld [vmem:[#allocation7 + $0x5c] sm:$0xf]
    %v3913 = vld [vmem:[#allocation7 + $0x60] sm:$0xff]
    %v3914 = vld [vmem:[#allocation7 + $0x68] sm:$0xf]
    %v3915 = vld [vmem:[#allocation7 + $0x6c] sm:$0xff]
    %v3916 = vld [vmem:[#allocation7 + $0x74] sm:$0xf]
    %v3917 = vld [vmem:[#allocation7 + $0x78] sm:$0xff]
    %v3918 = vld [vmem:[#allocation7 + $0x80] sm:$0xf]
    %v3919 = vld [vmem:[#allocation7 + $0x84] sm:$0xff]
    %v3920 = vld [vmem:[#allocation7 + $0x8c] sm:$0xf]
    %v3921 = vld [vmem:[#allocation7 + $0x90] sm:$0xff]
    %v3922 = vld [vmem:[#allocation7 + $0x98] sm:$0xf]
    %v3923 = vld [vmem:[#allocation7 + $0x9c] sm:$0xff]
    %v3924 = vld [vmem:[#allocation7 + $0xa4] sm:$0xf]
    %v3925 = vld [vmem:[#allocation7 + $0xa8] sm:$0xff]
    %v3926 = vld [vmem:[#allocation7 + $0xb0] sm:$0xf]
    %v3927 = vld [vmem:[#allocation7 + $0xb4] sm:$0xff]
    %v3928 = vld [vmem:[#allocation7 + $0xbc] sm:$0xf]
    %v3929 = vld [vmem:[#allocation7 + $0xc0] sm:$0xff]
    %v3930 = vld [vmem:[#allocation7 + $0xc8] sm:$0xf]
    %v3931 = vld [vmem:[#allocation7 + $0xcc] sm:$0xff]
    %v3932 = vld [vmem:[#allocation7 + $0xd4] sm:$0xf]
    %v3933 = vld [vmem:[#allocation7 + $0xd8] sm:$0xff]
    %v3934 = vld [vmem:[#allocation7 + $0xe0] sm:$0xf]
    %v3935 = vld [vmem:[#allocation7 + $0xe4] sm:$0xff]
    %v3936 = vld [vmem:[#allocation7 + $0xec] sm:$0xf]
    %v3937 = vld [vmem:[#allocation7 + $0xf0] sm:$0xff]
    %v3938 = vld [vmem:[#allocation7 + $0xf8] sm:$0xf]
    %v3939 = vld [vmem:[#allocation7 + $0xfc] sm:$0xff]
    %v3940 = vld [vmem:[#allocation7 + $0x104] sm:$0xf]
    %v3941 = vld [vmem:[#allocation7 + $0x108] sm:$0xff]
    %v3942 = vld [vmem:[#allocation7 + $0x110] sm:$0xf]
    %v3943 = vld [vmem:[#allocation7 + $0x114] sm:$0xff]
    %v3944 = vld [vmem:[#allocation7 + $0x11c] sm:$0xf]
    %v3945 = vld [vmem:[#allocation7 + $0x120] sm:$0xff]
    %v3946 = vld [vmem:[#allocation7 + $0x128] sm:$0xf]
    %v3947 = vld [vmem:[#allocation7 + $0x12c] sm:$0xff]
    %v3948 = vld [vmem:[#allocation7 + $0x134] sm:$0xf]
    %v3949 = vld [vmem:[#allocation7 + $0x138] sm:$0xff]
    %v3950 = vld [vmem:[#allocation7 + $0x140] sm:$0xf]
    %v3951 = vld [vmem:[#allocation7 + $0x144] sm:$0xff]
    %v3952 = vld [vmem:[#allocation7 + $0x14c] sm:$0xf]
    %v3953 = vld [vmem:[%s12] sm:$0x1]
    %v3955 = vlaneseq
    %v3956 = vshrl.u32 %v3955, 7
    %v3957 = vsub.s32 0, %v3956
    %v3958 = vrot.slane %v3953, %v3957
    %v4016 = vunpack.c.l.b16 %v3897
    %v4017 = vunpack.c.h.b16 %v3897
    %v4018 = vunpack.c.l.b16 %v3898
    %v4019 = vunpack.c.l.b16 %v3899
    %v4020 = vunpack.c.h.b16 %v3899
    %v4021 = vunpack.c.l.b16 %v3900
    %v4022 = vunpack.c.l.b16 %v3901
    %v4023 = vunpack.c.h.b16 %v3901
    %v4024 = vunpack.c.l.b16 %v3902
    %v4025 = vunpack.c.l.b16 %v3903
    %v4026 = vunpack.c.h.b16 %v3903
    %v4027 = vunpack.c.l.b16 %v3904
    %v4028 = vunpack.c.l.b16 %v3905
    %v4029 = vunpack.c.h.b16 %v3905
    %v4030 = vunpack.c.l.b16 %v3906
    %v4031 = vunpack.c.l.b16 %v3907
    %v4032 = vunpack.c.h.b16 %v3907
    %v4033 = vunpack.c.l.b16 %v3908
    %v4034 = vunpack.c.l.b16 %v3909
    %v4035 = vunpack.c.h.b16 %v3909
    %v4036 = vunpack.c.l.b16 %v3910
    %v4037 = vunpack.c.l.b16 %v3911
    %v4038 = vunpack.c.h.b16 %v3911
    %v4039 = vunpack.c.l.b16 %v3912
    %v4040 = vunpack.c.l.b16 %v3913
    %v4041 = vunpack.c.h.b16 %v3913
    %v4042 = vunpack.c.l.b16 %v3914
    %v4043 = vunpack.c.l.b16 %v3915
    %v4044 = vunpack.c.h.b16 %v3915
    %v4045 = vunpack.c.l.b16 %v3916
    %v4046 = vunpack.c.l.b16 %v3917
    %v4047 = vunpack.c.h.b16 %v3917
    %v4048 = vunpack.c.l.b16 %v3918
    %v4049 = vunpack.c.l.b16 %v3919
    %v4050 = vunpack.c.h.b16 %v3919
    %v4051 = vunpack.c.l.b16 %v3920
    %v4052 = vunpack.c.l.b16 %v3921
    %v4053 = vunpack.c.h.b16 %v3921
    %v4054 = vunpack.c.l.b16 %v3922
    %v4055 = vunpack.c.l.b16 %v3923
    %v4056 = vunpack.c.h.b16 %v3923
    %v4057 = vunpack.c.l.b16 %v3924
    %v4058 = vunpack.c.l.b16 %v3925
    %v4059 = vunpack.c.h.b16 %v3925
    %v4060 = vunpack.c.l.b16 %v3926
    %v4061 = vunpack.c.l.b16 %v3927
    %v4062 = vunpack.c.h.b16 %v3927
    %v4063 = vunpack.c.l.b16 %v3928
    %v4064 = vunpack.c.l.b16 %v3929
    %v4065 = vunpack.c.h.b16 %v3929
    %v4066 = vunpack.c.l.b16 %v3930
    %v4067 = vunpack.c.l.b16 %v3931
    %v4068 = vunpack.c.h.b16 %v3931
    %v4069 = vunpack.c.l.b16 %v3932
    %v4070 = vunpack.c.l.b16 %v3933
    %v4071 = vunpack.c.h.b16 %v3933
    %v4072 = vunpack.c.l.b16 %v3934
    %v4073 = vunpack.c.l.b16 %v3935
    %v4074 = vunpack.c.h.b16 %v3935
    %v4075 = vunpack.c.l.b16 %v3936
    %v4076 = vunpack.c.l.b16 %v3937
    %v4077 = vunpack.c.h.b16 %v3937
    %v4078 = vunpack.c.l.b16 %v3938
    %v4079 = vunpack.c.l.b16 %v3939
    %v4080 = vunpack.c.h.b16 %v3939
    %v4081 = vunpack.c.l.b16 %v3940
    %v4082 = vunpack.c.l.b16 %v3941
    %v4083 = vunpack.c.h.b16 %v3941
    %v4084 = vunpack.c.l.b16 %v3942
    %v4085 = vunpack.c.l.b16 %v3943
    %v4086 = vunpack.c.h.b16 %v3943
    %v4087 = vunpack.c.l.b16 %v3944
    %v4088 = vunpack.c.l.b16 %v3945
    %v4089 = vunpack.c.h.b16 %v3945
    %v4090 = vunpack.c.l.b16 %v3946
    %v4091 = vunpack.c.l.b16 %v3947
    %v4092 = vunpack.c.h.b16 %v3947
    %v4093 = vunpack.c.l.b16 %v3948
    %v4094 = vunpack.c.l.b16 %v3949
    %v4095 = vunpack.c.h.b16 %v3949
    %v4096 = vunpack.c.l.b16 %v3950
    %v4097 = vunpack.c.l.b16 %v3951
    %v4098 = vunpack.c.h.b16 %v3951
    %v4099 = vunpack.c.l.b16 %v3952
    %v4100 = vpack.c.b16 %v4019, %v4016
    %v4101 = vpack.c.b16 %v4020, %v4017
    %v4102 = vpack.c.b16 %v4021, %v4018
    %v4103 = vpack.c.b16 %v4025, %v4022
    %v4104 = vpack.c.b16 %v4026, %v4023
    %v4105 = vpack.c.b16 %v4027, %v4024
    %v4106 = vpack.c.b16 %v4031, %v4028
    %v4107 = vpack.c.b16 %v4032, %v4029
    %v4108 = vpack.c.b16 %v4033, %v4030
    %v4109 = vpack.c.b16 %v4037, %v4034
    %v4110 = vpack.c.b16 %v4038, %v4035
    %v4111 = vpack.c.b16 %v4039, %v4036
    %v4112 = vpack.c.b16 %v4043, %v4040
    %v4113 = vpack.c.b16 %v4044, %v4041
    %v4114 = vpack.c.b16 %v4045, %v4042
    %v4115 = vpack.c.b16 %v4049, %v4046
    %v4116 = vpack.c.b16 %v4050, %v4047
    %v4117 = vpack.c.b16 %v4051, %v4048
    %v4118 = vpack.c.b16 %v4055, %v4052
    %v4119 = vpack.c.b16 %v4056, %v4053
    %v4120 = vpack.c.b16 %v4057, %v4054
    %v4121 = vpack.c.b16 %v4061, %v4058
    %v4122 = vpack.c.b16 %v4062, %v4059
    %v4123 = vpack.c.b16 %v4063, %v4060
    %v4124 = vpack.c.b16 %v4067, %v4064
    %v4125 = vpack.c.b16 %v4068, %v4065
    %v4126 = vpack.c.b16 %v4069, %v4066
    %v4127 = vpack.c.b16 %v4073, %v4070
    %v4128 = vpack.c.b16 %v4074, %v4071
    %v4129 = vpack.c.b16 %v4075, %v4072
    %v4130 = vpack.c.b16 %v4079, %v4076
    %v4131 = vpack.c.b16 %v4080, %v4077
    %v4132 = vpack.c.b16 %v4081, %v4078
    %v4133 = vpack.c.b16 %v4085, %v4082
    %v4134 = vpack.c.b16 %v4086, %v4083
    %v4135 = vpack.c.b16 %v4087, %v4084
    %v4136 = vpack.c.b16 %v4091, %v4088
    %v4137 = vpack.c.b16 %v4092, %v4089
    %v4138 = vpack.c.b16 %v4093, %v4090
    %v4139 = vpack.c.b16 %v4097, %v4094
    %v4140 = vpack.c.b16 %v4098, %v4095
    %v4141 = vpack.c.b16 %v4099, %v4096
    %vm4170 = vcmask 654336
    %v4172 = vsel %vm4170, %v4102, 0
    %v4175 = vsel %vm4170, %v4105, 0
    %v4178 = vsel %vm4170, %v4108, 0
    %v4181 = vsel %vm4170, %v4111, 0
    %v4184 = vsel %vm4170, %v4114, 0
    %v4187 = vsel %vm4170, %v4117, 0
    %v4190 = vsel %vm4170, %v4120, 0
    %v4193 = vsel %vm4170, %v4123, 0
    %v4196 = vsel %vm4170, %v4126, 0
    %v4199 = vsel %vm4170, %v4129, 0
    %v4202 = vsel %vm4170, %v4132, 0
    %v4205 = vsel %vm4170, %v4135, 0
    %v4208 = vsel %vm4170, %v4138, 0
    %v4211 = vsel %vm4170, %v4141, 0
    %4213 = vmatprep.subr.bf16.mxu0 0
    %4214 = vmatpush1.bf16.msra.mxu0 %v3876
    %4215 = vmatprep.subr.bf16.mxu0 0
    %4216 = vmatpush1.bf16.msra.mxu0 %v3879
    %4217 = vmatprep.subr.bf16.mxu0 0
    %4218 = vmatpush1.bf16.msra.mxu0 %v3882
    %4219 = vmatprep.subr.bf16.mxu0 0
    %4220 = vmatpush1.bf16.msra.mxu0 %v3885
    %4221 = vmatprep.subr.bf16.mxu0 0
    %4222 = vmatpush1.bf16.msra.mxu0 %v3888
    %4223 = vmatprep.subr.bf16.mxu0 0
    %4224 = vmatpush1.bf16.msra.mxu0 %v3891
    %4225 = vmatprep.subr.bf16.mxu0 0
    %4226 = vmatpush1.bf16.msra.mxu0 %v3894
    %4227 = vmatprep.subr.bf16.mxu0 0
    %4228 = vmatpush1.bf16.msra.mxu0 %v3877
    %4229 = vmatprep.subr.bf16.mxu0 0
    %4230 = vmatpush1.bf16.msra.mxu0 %v3880
    %4231 = vmatprep.subr.bf16.mxu0 0
    %4232 = vmatpush1.bf16.msra.mxu0 %v3883
    %4233 = vmatprep.subr.bf16.mxu0 0
    %4234 = vmatpush1.bf16.msra.mxu0 %v3886
    %4235 = vmatprep.subr.bf16.mxu0 0
    %4236 = vmatpush1.bf16.msra.mxu0 %v3889
    %4237 = vmatprep.subr.bf16.mxu0 0
    %4238 = vmatpush1.bf16.msra.mxu0 %v3892
    %4239 = vmatprep.subr.bf16.mxu0 0
    %4240 = vmatpush1.bf16.msra.mxu0 %v3895
    %4241 = vmatprep.subr.bf16.mxu0 0
    %4242 = vmatpush1.bf16.msra.mxu0 %v3878
    %4243 = vmatprep.subr.bf16.mxu0 0
    %4244 = vmatpush1.bf16.msra.mxu0 %v3881
    %4245 = vmatprep.mubr.bf16.mxu0 %v4101
    %4246 = vmatmul.mubr.bf16.gmra.mrb[0].mxu0 %v4100
    %v4247 = vpop.f32.mrb[0].mxu0
    %v4248 = vadd.f32 %v3958, %v4247
    %v4249 = vpop.f32.mrb[0].mxu0
    %v4250 = vpop.f32.mrb[0].mxu0
    %v4251 = vadd.f32 %v3958, %v4250
    %v4252 = vpop.f32.mrb[0].mxu0
    %4253 = vmatprep.mubr.bf16.mxu0 %v4104
    %4254 = vmatmul.mubr.bf16.gmra.mrb[0].mxu0 %v4103
    %v4255 = vpop.f32.mrb[0].mxu0
    %v4256 = vadd.f32 %v3958, %v4255
    %v4257 = vpop.f32.mrb[0].mxu0
    %v4258 = vpop.f32.mrb[0].mxu0
    %v4259 = vadd.f32 %v3958, %v4258
    %v4260 = vpop.f32.mrb[0].mxu0
    %4261 = vmatprep.mubr.bf16.mxu0 %v4107
    %4262 = vmatmul.mubr.bf16.gmra.mrb[0].mxu0 %v4106
    %v4263 = vpop.f32.mrb[0].mxu0
    %v4264 = vadd.f32 %v3958, %v4263
    %v4265 = vpop.f32.mrb[0].mxu0
    %v4266 = vpop.f32.mrb[0].mxu0
    %v4267 = vadd.f32 %v3958, %v4266
    %v4268 = vpop.f32.mrb[0].mxu0
    %4269 = vmatprep.mubr.bf16.mxu0 %v4110
    %4270 = vmatmul.mubr.bf16.gmra.mrb[0].mxu0 %v4109
    %v4271 = vpop.f32.mrb[0].mxu0
    %v4272 = vadd.f32 %v3958, %v4271
    %v4273 = vpop.f32.mrb[0].mxu0
    %v4274 = vpop.f32.mrb[0].mxu0
    %v4275 = vadd.f32 %v3958, %v4274
    %v4276 = vpop.f32.mrb[0].mxu0
    %4277 = vmatprep.mubr.bf16.mxu0 %v4113
    %4278 = vmatmul.mubr.bf16.gmra.mrb[0].mxu0 %v4112
    %v4279 = vpop.f32.mrb[0].mxu0
    %v4280 = vadd.f32 %v3958, %v4279
    %v4281 = vpop.f32.mrb[0].mxu0
    %v4282 = vpop.f32.mrb[0].mxu0
    %v4283 = vadd.f32 %v3958, %v4282
    %v4284 = vpop.f32.mrb[0].mxu0
    %4285 = vmatprep.mubr.bf16.mxu0 %v4116
    %4286 = vmatmul.mubr.bf16.gmra.mrb[0].mxu0 %v4115
    %v4287 = vpop.f32.mrb[0].mxu0
    %v4288 = vadd.f32 %v3958, %v4287
    %v4289 = vpop.f32.mrb[0].mxu0
    %v4290 = vpop.f32.mrb[0].mxu0
    %v4291 = vadd.f32 %v3958, %v4290
    %v4292 = vpop.f32.mrb[0].mxu0
    %4293 = vmatprep.mubr.bf16.mxu0 %v4119
    %4294 = vmatmul.mubr.bf16.gmra.mrb[0].mxu0 %v4118
    %v4295 = vpop.f32.mrb[0].mxu0
    %v4296 = vadd.f32 %v3958, %v4295
    %v4297 = vpop.f32.mrb[0].mxu0
    %v4298 = vpop.f32.mrb[0].mxu0
    %v4299 = vadd.f32 %v3958, %v4298
    %v4300 = vpop.f32.mrb[0].mxu0
    %4301 = vmatprep.mubr.bf16.mxu0 %v4122
    %4302 = vmatmul.mubr.bf16.gmra.mrb[0].mxu0 %v4121
    %v4303 = vpop.f32.mrb[0].mxu0
    %v4304 = vadd.f32 %v3958, %v4303
    %v4305 = vpop.f32.mrb[0].mxu0
    %v4306 = vpop.f32.mrb[0].mxu0
    %v4307 = vadd.f32 %v3958, %v4306
    %v4308 = vpop.f32.mrb[0].mxu0
    %4309 = vmatprep.mubr.bf16.mxu0 %v4125
    %4310 = vmatmul.mubr.bf16.gmra.mrb[0].mxu0 %v4124
    %v4311 = vpop.f32.mrb[0].mxu0
    %v4312 = vadd.f32 %v3958, %v4311
    %v4313 = vpop.f32.mrb[0].mxu0
    %v4314 = vpop.f32.mrb[0].mxu0
    %v4315 = vadd.f32 %v3958, %v4314
    %v4316 = vpop.f32.mrb[0].mxu0
    %4317 = vmatprep.mubr.bf16.mxu0 %v4128
    %4318 = vmatmul.mubr.bf16.gmra.mrb[0].mxu0 %v4127
    %v4319 = vpop.f32.mrb[0].mxu0
    %v4320 = vadd.f32 %v3958, %v4319
    %v4321 = vpop.f32.mrb[0].mxu0
    %v4322 = vpop.f32.mrb[0].mxu0
    %v4323 = vadd.f32 %v3958, %v4322
    %v4324 = vpop.f32.mrb[0].mxu0
    %4325 = vmatprep.mubr.bf16.mxu0 %v4131
    %4326 = vmatmul.mubr.bf16.gmra.mrb[0].mxu0 %v4130
    %v4327 = vpop.f32.mrb[0].mxu0
    %v4328 = vadd.f32 %v3958, %v4327
    %v4329 = vpop.f32.mrb[0].mxu0
    %v4330 = vpop.f32.mrb[0].mxu0
    %v4331 = vadd.f32 %v3958, %v4330
    %v4332 = vpop.f32.mrb[0].mxu0
    %4333 = vmatprep.mubr.bf16.mxu0 %v4134
    %4334 = vmatmul.mubr.bf16.gmra.mrb[0].mxu0 %v4133
    %v4335 = vpop.f32.mrb[0].mxu0
    %v4336 = vadd.f32 %v3958, %v4335
    %v4337 = vpop.f32.mrb[0].mxu0
    %v4338 = vpop.f32.mrb[0].mxu0
    %v4339 = vadd.f32 %v3958, %v4338
    %v4340 = vpop.f32.mrb[0].mxu0
    %4341 = vmatprep.mubr.bf16.mxu0 %v4137
    %4342 = vmatmul.mubr.bf16.gmra.mrb[0].mxu0 %v4136
    %v4343 = vpop.f32.mrb[0].mxu0
    %v4344 = vadd.f32 %v3958, %v4343
    %v4345 = vpop.f32.mrb[0].mxu0
    %v4346 = vpop.f32.mrb[0].mxu0
    %v4347 = vadd.f32 %v3958, %v4346
    %v4348 = vpop.f32.mrb[0].mxu0
    %4349 = vmatprep.mubr.bf16.mxu0 %v4140
    %4350 = vmatmul.mubr.bf16.gmra.mrb[0].mxu0 %v4139
    %v4351 = vpop.f32.mrb[0].mxu0
    %v4352 = vadd.f32 %v3958, %v4351
    %v4353 = vpop.f32.mrb[0].mxu0
    %v4354 = vpop.f32.mrb[0].mxu0
    %v4355 = vadd.f32 %v3958, %v4354
    %v4356 = vpop.f32.mrb[0].mxu0
    %4357 = vdwg.mxu0
    %4358 = vmatprep.subr.bf16.mxu0 0
    %4359 = vmatpush1.bf16.msra.mxu0 %v3884
    %4360 = vmatprep.subr.bf16.mxu0 0
    %4361 = vmatpush1.bf16.msra.mxu0 %v3887
    %4362 = vmatprep.subr.bf16.mxu0 0
    %4363 = vmatpush1.bf16.msra.mxu0 %v3890
    %4364 = vmatprep.subr.bf16.mxu0 0
    %4365 = vmatpush1.bf16.msra.mxu0 %v3893
    %4366 = vmatprep.subr.bf16.mxu0 0
    %4367 = vmatpush1.bf16.msra.mxu0 %v3896
    %4368 = vmatprep.subr.bf16.mxu0 0
    %4369 = vmatpush1.bf16.msra.mxu0 0
    %4370 = vmatprep.subr.bf16.mxu0 0
    %4371 = vmatpush1.bf16.msra.mxu0 0
    %4372 = vmatprep.subr.bf16.mxu0 0
    %4373 = vmatpush1.bf16.msra.mxu0 0
    %4374 = vmatprep.subr.bf16.mxu0 0
    %4375 = vmatpush1.bf16.msra.mxu0 0
    %4376 = vmatprep.subr.bf16.mxu0 0
    %4377 = vmatpush1.bf16.msra.mxu0 0
    %4378 = vmatprep.subr.bf16.mxu0 0
    %4379 = vmatpush1.bf16.msra.mxu0 0
    %4380 = vmatprep.subr.bf16.mxu0 0
    %4381 = vmatpush1.bf16.msra.mxu0 0
    %4382 = vmatprep.subr.bf16.mxu0 0
    %4383 = vmatpush1.bf16.msra.mxu0 0
    %4384 = vmatprep.subr.bf16.mxu0 0
    %4385 = vmatpush1.bf16.msra.mxu0 0
    %4386 = vmatprep.subr.bf16.mxu0 0
    %4387 = vmatpush1.bf16.msra.mxu0 0
    %4388 = vmatprep.subr.bf16.mxu0 0
    %4389 = vmatpush1.bf16.msra.mxu0 0
    %4390 = vmatprep.mubr.bf16.mxu0 0
    %4391 = vmatmul.mubr.bf16.gmra.mrb[0].mxu0 %v4172
    %v4392 = vpop.f32.mrb[0].mxu0
    %v4393 = vadd.f32 %v4248, %v4392
    %v4394 = vpop.f32.mrb[0].mxu0
    %v4395 = vpop.f32.mrb[0].mxu0
    %v4396 = vadd.f32 %v4251, %v4395
    %v4397 = vpop.f32.mrb[0].mxu0
    %4398 = vmatprep.mubr.bf16.mxu0 0
    %4399 = vmatmul.mubr.bf16.gmra.mrb[0].mxu0 %v4175
    %v4400 = vpop.f32.mrb[0].mxu0
    %v4401 = vadd.f32 %v4256, %v4400
    %v4402 = vpop.f32.mrb[0].mxu0
    %v4403 = vpop.f32.mrb[0].mxu0
    %v4404 = vadd.f32 %v4259, %v4403
    %v4405 = vpop.f32.mrb[0].mxu0
    %4406 = vmatprep.mubr.bf16.mxu0 0
    %4407 = vmatmul.mubr.bf16.gmra.mrb[0].mxu0 %v4178
    %v4408 = vpop.f32.mrb[0].mxu0
    %v4409 = vadd.f32 %v4264, %v4408
    %v4410 = vpop.f32.mrb[0].mxu0
    %v4411 = vpop.f32.mrb[0].mxu0
    %v4412 = vadd.f32 %v4267, %v4411
    %v4413 = vpop.f32.mrb[0].mxu0
    %4414 = vmatprep.mubr.bf16.mxu0 0
    %4415 = vmatmul.mubr.bf16.gmra.mrb[0].mxu0 %v4181
    %v4416 = vpop.f32.mrb[0].mxu0
    %v4417 = vadd.f32 %v4272, %v4416
    %v4418 = vpop.f32.mrb[0].mxu0
    %v4419 = vpop.f32.mrb[0].mxu0
    %v4420 = vadd.f32 %v4275, %v4419
    %v4421 = vpop.f32.mrb[0].mxu0
    %4422 = vmatprep.mubr.bf16.mxu0 0
    %4423 = vmatmul.mubr.bf16.gmra.mrb[0].mxu0 %v4184
    %v4424 = vpop.f32.mrb[0].mxu0
    %v4425 = vadd.f32 %v4280, %v4424
    %v4426 = vpop.f32.mrb[0].mxu0
    %v4427 = vpop.f32.mrb[0].mxu0
    %v4428 = vadd.f32 %v4283, %v4427
    %v4429 = vpop.f32.mrb[0].mxu0
    %4430 = vmatprep.mubr.bf16.mxu0 0
    %4431 = vmatmul.mubr.bf16.gmra.mrb[0].mxu0 %v4187
    %v4432 = vpop.f32.mrb[0].mxu0
    %v4433 = vadd.f32 %v4288, %v4432
    %v4434 = vpop.f32.mrb[0].mxu0
    %v4435 = vpop.f32.mrb[0].mxu0
    %v4436 = vadd.f32 %v4291, %v4435
    %v4437 = vpop.f32.mrb[0].mxu0
    %4438 = vmatprep.mubr.bf16.mxu0 0
    %4439 = vmatmul.mubr.bf16.gmra.mrb[0].mxu0 %v4190
    %v4440 = vpop.f32.mrb[0].mxu0
    %v4441 = vadd.f32 %v4296, %v4440
    %v4442 = vpop.f32.mrb[0].mxu0
    %v4443 = vpop.f32.mrb[0].mxu0
    %v4444 = vadd.f32 %v4299, %v4443
    %v4445 = vpop.f32.mrb[0].mxu0
    %4446 = vmatprep.mubr.bf16.mxu0 0
    %4447 = vmatmul.mubr.bf16.gmra.mrb[0].mxu0 %v4193
    %v4448 = vpop.f32.mrb[0].mxu0
    %v4449 = vadd.f32 %v4304, %v4448
    %v4450 = vpop.f32.mrb[0].mxu0
    %v4451 = vpop.f32.mrb[0].mxu0
    %v4452 = vadd.f32 %v4307, %v4451
    %v4453 = vpop.f32.mrb[0].mxu0
    %4454 = vmatprep.mubr.bf16.mxu0 0
    %4455 = vmatmul.mubr.bf16.gmra.mrb[0].mxu0 %v4196
    %v4456 = vpop.f32.mrb[0].mxu0
    %v4457 = vadd.f32 %v4312, %v4456
    %v4458 = vpop.f32.mrb[0].mxu0
    %v4459 = vpop.f32.mrb[0].mxu0
    %v4460 = vadd.f32 %v4315, %v4459
    %v4461 = vpop.f32.mrb[0].mxu0
    %4462 = vmatprep.mubr.bf16.mxu0 0
    %4463 = vmatmul.mubr.bf16.gmra.mrb[0].mxu0 %v4199
    %v4464 = vpop.f32.mrb[0].mxu0
    %v4465 = vadd.f32 %v4320, %v4464
    %v4466 = vpop.f32.mrb[0].mxu0
    %v4467 = vpop.f32.mrb[0].mxu0
    %v4468 = vadd.f32 %v4323, %v4467
    %v4469 = vpop.f32.mrb[0].mxu0
    %4470 = vmatprep.mubr.bf16.mxu0 0
    %4471 = vmatmul.mubr.bf16.gmra.mrb[0].mxu0 %v4202
    %v4472 = vpop.f32.mrb[0].mxu0
    %v4473 = vadd.f32 %v4328, %v4472
    %v4474 = vpop.f32.mrb[0].mxu0
    %v4475 = vpop.f32.mrb[0].mxu0
    %v4476 = vadd.f32 %v4331, %v4475
    %v4477 = vpop.f32.mrb[0].mxu0
    %4478 = vmatprep.mubr.bf16.mxu0 0
    %4479 = vmatmul.mubr.bf16.gmra.mrb[0].mxu0 %v4205
    %v4480 = vpop.f32.mrb[0].mxu0
    %v4481 = vadd.f32 %v4336, %v4480
    %v4482 = vpop.f32.mrb[0].mxu0
    %v4483 = vpop.f32.mrb[0].mxu0
    %v4484 = vadd.f32 %v4339, %v4483
    %v4485 = vpop.f32.mrb[0].mxu0
    %4486 = vmatprep.mubr.bf16.mxu0 0
    %4487 = vmatmul.mubr.bf16.gmra.mrb[0].mxu0 %v4208
    %v4488 = vpop.f32.mrb[0].mxu0
    %v4489 = vadd.f32 %v4344, %v4488
    %v4490 = vpop.f32.mrb[0].mxu0
    %v4491 = vpop.f32.mrb[0].mxu0
    %v4492 = vadd.f32 %v4347, %v4491
    %v4493 = vpop.f32.mrb[0].mxu0
    %4494 = vmatprep.mubr.bf16.mxu0 0
    %4495 = vmatmul.mubr.bf16.gmra.mrb[0].mxu0 %v4211
    %v4496 = vpop.f32.mrb[0].mxu0
    %v4497 = vadd.f32 %v4352, %v4496
    %v4498 = vpop.f32.mrb[0].mxu0
    %v4499 = vpop.f32.mrb[0].mxu0
    %v4500 = vadd.f32 %v4355, %v4499
    %v4501 = vpop.f32.mrb[0].mxu0
    %4502 = vdwg.mxu0
    %v4503 = vsub.f32 0.0, %v4393
    %v4504 = vsub.f32 0.0, %v4396
    %v4505 = vsub.f32 0.0, %v4401
    %v4506 = vsub.f32 0.0, %v4404
    %v4507 = vsub.f32 0.0, %v4409
    %v4508 = vsub.f32 0.0, %v4412
    %v4509 = vsub.f32 0.0, %v4417
    %v4510 = vsub.f32 0.0, %v4420
    %v4511 = vsub.f32 0.0, %v4425
    %v4512 = vsub.f32 0.0, %v4428
    %v4513 = vsub.f32 0.0, %v4433
    %v4514 = vsub.f32 0.0, %v4436
    %v4515 = vsub.f32 0.0, %v4441
    %v4516 = vsub.f32 0.0, %v4444
    %v4517 = vsub.f32 0.0, %v4449
    %v4518 = vsub.f32 0.0, %v4452
    %v4519 = vsub.f32 0.0, %v4457
    %v4520 = vsub.f32 0.0, %v4460
    %v4521 = vsub.f32 0.0, %v4465
    %v4522 = vsub.f32 0.0, %v4468
    %v4523 = vsub.f32 0.0, %v4473
    %v4524 = vsub.f32 0.0, %v4476
    %v4525 = vsub.f32 0.0, %v4481
    %v4526 = vsub.f32 0.0, %v4484
    %v4527 = vsub.f32 0.0, %v4489
    %v4528 = vsub.f32 0.0, %v4492
    %v4529 = vsub.f32 0.0, %v4497
    %v4530 = vsub.f32 0.0, %v4500
    %v4531 = vmul.f32 %v4503, 1.442695
    %v4532 = vpow.pop %v4531
    %v4533 = vmul.f32 %v4504, 1.442695
    %v4534 = vpow.pop %v4533
    %v4535 = vmul.f32 %v4505, 1.442695
    %v4536 = vpow.pop %v4535
    %v4537 = vmul.f32 %v4506, 1.442695
    %v4538 = vpow.pop %v4537
    %v4539 = vmul.f32 %v4507, 1.442695
    %v4540 = vpow.pop %v4539
    %v4541 = vmul.f32 %v4508, 1.442695
    %v4542 = vpow.pop %v4541
    %v4543 = vmul.f32 %v4509, 1.442695
    %v4544 = vpow.pop %v4543
    %v4545 = vmul.f32 %v4510, 1.442695
    %v4546 = vpow.pop %v4545
    %v4547 = vmul.f32 %v4511, 1.442695
    %v4548 = vpow.pop %v4547
    %v4549 = vmul.f32 %v4512, 1.442695
    %v4550 = vpow.pop %v4549
    %v4551 = vmul.f32 %v4513, 1.442695
    %v4552 = vpow.pop %v4551
    %v4553 = vmul.f32 %v4514, 1.442695
    %v4554 = vpow.pop %v4553
    %v4555 = vmul.f32 %v4515, 1.442695
    %v4556 = vpow.pop %v4555
    %v4557 = vmul.f32 %v4516, 1.442695
    %v4558 = vpow.pop %v4557
    %v4559 = vmul.f32 %v4517, 1.442695
    %v4560 = vpow.pop %v4559
    %v4561 = vmul.f32 %v4518, 1.442695
    %v4562 = vpow.pop %v4561
    %v4563 = vmul.f32 %v4519, 1.442695
    %v4564 = vpow.pop %v4563
    %v4565 = vmul.f32 %v4520, 1.442695
    %v4566 = vpow.pop %v4565
    %v4567 = vmul.f32 %v4521, 1.442695
    %v4568 = vpow.pop %v4567
    %v4569 = vmul.f32 %v4522, 1.442695
    %v4570 = vpow.pop %v4569
    %v4571 = vmul.f32 %v4523, 1.442695
    %v4572 = vpow.pop %v4571
    %v4573 = vmul.f32 %v4524, 1.442695
    %v4574 = vpow.pop %v4573
    %v4575 = vmul.f32 %v4525, 1.442695
    %v4576 = vpow.pop %v4575
    %v4577 = vmul.f32 %v4526, 1.442695
    %v4578 = vpow.pop %v4577
    %v4579 = vmul.f32 %v4527, 1.442695
    %v4580 = vpow.pop %v4579
    %v4581 = vmul.f32 %v4528, 1.442695
    %v4582 = vpow.pop %v4581
    %v4583 = vmul.f32 %v4529, 1.442695
    %v4584 = vpow.pop %v4583
    %v4585 = vmul.f32 %v4530, 1.442695
    %v4586 = vpow.pop %v4585
    %v4587 = vadd.f32 %v4532, 1.0
    %v4588 = vadd.f32 %v4534, 1.0
    %v4589 = vadd.f32 %v4536, 1.0
    %v4590 = vadd.f32 %v4538, 1.0
    %v4591 = vadd.f32 %v4540, 1.0
    %v4592 = vadd.f32 %v4542, 1.0
    %v4593 = vadd.f32 %v4544, 1.0
    %v4594 = vadd.f32 %v4546, 1.0
    %v4595 = vadd.f32 %v4548, 1.0
    %v4596 = vadd.f32 %v4550, 1.0
    %v4597 = vadd.f32 %v4552, 1.0
    %v4598 = vadd.f32 %v4554, 1.0
    %v4599 = vadd.f32 %v4556, 1.0
    %v4600 = vadd.f32 %v4558, 1.0
    %v4601 = vadd.f32 %v4560, 1.0
    %v4602 = vadd.f32 %v4562, 1.0
    %v4603 = vadd.f32 %v4564, 1.0
    %v4604 = vadd.f32 %v4566, 1.0
    %v4605 = vadd.f32 %v4568, 1.0
    %v4606 = vadd.f32 %v4570, 1.0
    %v4607 = vadd.f32 %v4572, 1.0
    %v4608 = vadd.f32 %v4574, 1.0
    %v4609 = vadd.f32 %v4576, 1.0
    %v4610 = vadd.f32 %v4578, 1.0
    %v4611 = vadd.f32 %v4580, 1.0
    %v4612 = vadd.f32 %v4582, 1.0
    %v4613 = vadd.f32 %v4584, 1.0
    %v4614 = vadd.f32 %v4586, 1.0
    %v4615 = vrcp.pop %v4587
    %v4616 = vrcp.pop %v4588
    %v4617 = vrcp.pop %v4589
    %v4618 = vrcp.pop %v4590
    %v4619 = vrcp.pop %v4591
    %v4620 = vrcp.pop %v4592
    %v4621 = vrcp.pop %v4593
    %v4622 = vrcp.pop %v4594
    %v4623 = vrcp.pop %v4595
    %v4624 = vrcp.pop %v4596
    %v4625 = vrcp.pop %v4597
    %v4626 = vrcp.pop %v4598
    %v4627 = vrcp.pop %v4599
    %v4628 = vrcp.pop %v4600
    %v4629 = vrcp.pop %v4601
    %v4630 = vrcp.pop %v4602
    %v4631 = vrcp.pop %v4603
    %v4632 = vrcp.pop %v4604
    %v4633 = vrcp.pop %v4605
    %v4634 = vrcp.pop %v4606
    %v4635 = vrcp.pop %v4607
    %v4636 = vrcp.pop %v4608
    %v4637 = vrcp.pop %v4609
    %v4638 = vrcp.pop %v4610
    %v4639 = vrcp.pop %v4611
    %v4640 = vrcp.pop %v4612
    %v4641 = vrcp.pop %v4613
    %v4642 = vrcp.pop %v4614
    %vm4643 = vcmask 228352
    %4644 = vst.msk [vmem:[%s13] sm:$0xff] %vm4643, %v4615
    %4645 = vst.msk [vmem:[%s13 + $0x8] sm:$0xff] %vm4643, %v4616
    %4646 = vst.msk [vmem:[%s13 + $0x10] sm:$0xff] %vm4643, %v4617
    %4647 = vst.msk [vmem:[%s13 + $0x18] sm:$0xff] %vm4643, %v4618
    %4648 = vst.msk [vmem:[%s13 + $0x20] sm:$0xff] %vm4643, %v4619
    %4649 = vst.msk [vmem:[%s13 + $0x28] sm:$0xff] %vm4643, %v4620
    %4650 = vst.msk [vmem:[%s13 + $0x30] sm:$0xff] %vm4643, %v4621
    %4651 = vst.msk [vmem:[%s13 + $0x38] sm:$0xff] %vm4643, %v4622
    %4652 = vst.msk [vmem:[%s13 + $0x40] sm:$0xff] %vm4643, %v4623
    %4653 = vst.msk [vmem:[%s13 + $0x48] sm:$0xff] %vm4643, %v4624
    %4654 = vst.msk [vmem:[%s13 + $0x50] sm:$0xff] %vm4643, %v4625
    %4655 = vst.msk [vmem:[%s13 + $0x58] sm:$0xff] %vm4643, %v4626
    %4656 = vst.msk [vmem:[%s13 + $0x60] sm:$0xff] %vm4643, %v4627
    %4657 = vst.msk [vmem:[%s13 + $0x68] sm:$0xff] %vm4643, %v4628
    %4658 = vst.msk [vmem:[%s13 + $0x70] sm:$0xff] %vm4643, %v4629
    %4659 = vst.msk [vmem:[%s13 + $0x78] sm:$0xff] %vm4643, %v4630
    %4660 = vst.msk [vmem:[%s13 + $0x80] sm:$0xff] %vm4643, %v4631
    %4661 = vst.msk [vmem:[%s13 + $0x88] sm:$0xff] %vm4643, %v4632
    %4662 = vst.msk [vmem:[%s13 + $0x90] sm:$0xff] %vm4643, %v4633
    %4663 = vst.msk [vmem:[%s13 + $0x98] sm:$0xff] %vm4643, %v4634
    %4664 = vst.msk [vmem:[%s13 + $0xa0] sm:$0xff] %vm4643, %v4635
    %4665 = vst.msk [vmem:[%s13 + $0xa8] sm:$0xff] %vm4643, %v4636
    %4666 = vst.msk [vmem:[%s13 + $0xb0] sm:$0xff] %vm4643, %v4637
    %4667 = vst.msk [vmem:[%s13 + $0xb8] sm:$0xff] %vm4643, %v4638
    %4668 = vst.msk [vmem:[%s13 + $0xc0] sm:$0xff] %vm4643, %v4639
    %4669 = vst.msk [vmem:[%s13 + $0xc8] sm:$0xff] %vm4643, %v4640
    %4670 = vst.msk [vmem:[%s13 + $0xd0] sm:$0xff] %vm4643, %v4641
    %4671 = vst.msk [vmem:[%s13 + $0xd8] sm:$0xff] %vm4643, %v4642
    // Predicated region
    $region70: #{decoder_forward.1} parent=1 // pred_check
      _
    $region71: #{decoder_forward.1} parent=1 // pred_check_branch
      %4673 = sbr.rel (0) target = $region73
    $region72: #{decoder_forward.1} parent=1 // pred_region
      _
    $region73: #{decoder_forward.1} parent=1 // pred_fallthru
      _
    // Predicated region
    $region74: #{decoder_forward.1} parent=1 // pred_check
      _
    $region75: #{decoder_forward.1} parent=1 // pred_check_branch
      %4675 = sbr.rel (0) target = $region77
    $region76: #{decoder_forward.1} parent=1 // pred_region
      _
    $region77: #{decoder_forward.1} parent=1 // pred_fallthru
      _
    %4676 = vsyncpa [#allocation3], 1
    %4677 = vsyncpa [#allocation5], 1
    %4678 = vsyncpa [#allocation8], 1

</llo_original>
